<compile_context>
chip_gen: v5e
topology: v5e:2x2
jax: 0.10.0
libtpu: 0.0.40
codegen_flags: <defaults>
</compile_context>

<pallas_src>
import functools

import jax
import jax.numpy as jnp
from jax.experimental import pallas as pl
from jax.experimental.pallas import tpu as pltpu

LANE = 128


def _round_up(n, m):
    return ((n + m - 1) // m) * m


# ----------------------------------------------------------------------------
# Fused Pallas kernel: conv3x3+ReLU -> GAP -> fc+ReLU -> consensus -> new_fc
# One grid step handles one batch element (all of its segments).
# ----------------------------------------------------------------------------
def _fused_twin_kernel(x_ref, wcol_ref, convb_ref, fcw_ref, fcb_ref,
                       nfw_ref, nfb_ref, o_ref, *, H, W, C_in, S):
    HW = H * W
    CPAD = wcol_ref.shape[-1]

    x = x_ref[0]                                   # (S, H+2, W+2, C_in) f32

    # --- conv3x3 (pad=1, stride=1) as ONE MXU matmul: gather the 9 shifted
    #     taps in VMEM and contract over K = 9*C_in in a single pass.
    taps = [x[:, i:i + H, j:j + W, :].reshape(S * HW, C_in)
            for i in range(3) for j in range(3)]
    col = jnp.concatenate(taps, axis=-1).astype(jnp.bfloat16)   # (S*HW, 9*C_in)

    conv = jnp.dot(col, wcol_ref[...], preferred_element_type=jnp.float32)
    conv = jnp.maximum(conv + convb_ref[...], 0.0)              # (S*HW, CPAD) f32

    # --- per-segment global average pool: lane-dense sublane reduce (VPU).
    pooled = jnp.mean(conv.reshape(S, HW, CPAD), axis=1)        # (S, CPAD)

    # --- base_model fc + ReLU.
    h1 = jnp.maximum(
        jnp.dot(pooled, fcw_ref[...], preferred_element_type=jnp.float32)
        + fcb_ref[...], 0.0)                                    # (S, FPAD)

    # --- before_softmax=True -> no softmax.  Consensus (mean over segments)
    #     hoisted before new_fc (new_fc is affine, result is exact).
    hbar = jnp.mean(h1, axis=0, keepdims=True)                  # (1, FPAD)
    logits = (jnp.dot(hbar, nfw_ref[...], preferred_element_type=jnp.float32)
              + nfb_ref[...])                                   # (1, NPAD)

    o_ref[0] = logits.astype(o_ref.dtype)


# ----------------------------------------------------------------------------
# Parameters (padded to lane-dense 128-wide layouts at init time)
# ----------------------------------------------------------------------------
def init_params(key, c_in, c_conv, feat_dim, num_class, kh=3, kw=3):
    k = jax.random.split(key, 6)
    conv_w = 0.1 * jax.random.normal(k[0], (c_conv, c_in, kh, kw), jnp.float32)  # torch OIHW
    conv_b = 0.1 * jax.random.normal(k[1], (c_conv,), jnp.float32)
    fc_w = 0.1 * jax.random.normal(k[2], (c_conv, feat_dim), jnp.float32)        # (in, out)
    fc_b = 0.1 * jax.random.normal(k[3], (feat_dim,), jnp.float32)
    new_fc_w = 0.1 * jax.random.normal(k[4], (feat_dim, num_class), jnp.float32)
    new_fc_b = 0.1 * jax.random.normal(k[5], (num_class,), jnp.float32)

    cpad = _round_up(c_conv, LANE)
    fpad = _round_up(feat_dim, LANE)
    npad = _round_up(num_class, LANE)

    # Combined im2col weight: wcol[(i*kw + j)*c_in + c, o] = conv_w[o, c, i, j],
    # matching the in-kernel tap-concat ordering; pad out-dim to 128.
    wcol = jnp.transpose(conv_w, (2, 3, 1, 0)).reshape(kh * kw * c_in, c_conv)
    wcol = jnp.pad(wcol, ((0, 0), (0, cpad - c_conv))).astype(jnp.bfloat16)

    conv_b_pad = jnp.pad(conv_b, (0, cpad - c_conv)).reshape(1, cpad)
    fc_w_pad = jnp.pad(fc_w, ((0, cpad - c_conv), (0, fpad - feat_dim)))
    fc_b_pad = jnp.pad(fc_b, (0, fpad - feat_dim)).reshape(1, fpad)
    new_fc_w_pad = jnp.pad(new_fc_w, ((0, fpad - feat_dim), (0, npad - num_class)))
    new_fc_b_pad = jnp.pad(new_fc_b, (0, npad - num_class)).reshape(1, npad)

    return dict(wcol=wcol, conv_b_pad=conv_b_pad,
                fc_w_pad=fc_w_pad, fc_b_pad=fc_b_pad,
                new_fc_w_pad=new_fc_w_pad, new_fc_b_pad=new_fc_b_pad,
                num_class=num_class)


# ----------------------------------------------------------------------------
# Forward wrapper
# ----------------------------------------------------------------------------
def twin_network_forward(x_nchw, params, *, num_segments, sample_len):
    """x_nchw: (B, num_segments*sample_len, H, W) float32 -> (B, num_class)."""
    B = x_nchw.shape[0]
    H, W = x_nchw.shape[-2], x_nchw.shape[-1]
    S = num_segments
    C_in = sample_len
    num_class = params["num_class"]

    # input.view((-1, sample_len) + input.size()[-2:]) -> NHWC, spatial zero-pad=1.
    x = x_nchw.reshape(B, S, C_in, H, W)
    x = jnp.transpose(x, (0, 1, 3, 4, 2))                           # (B, S, H, W, C)
    x = jnp.pad(x, ((0, 0), (0, 0), (1, 1), (1, 1), (0, 0)))        # (B, S, H+2, W+2, C)

    wcol = params["wcol"]
    cb = params["conv_b_pad"]
    fcw = params["fc_w_pad"]
    fcb = params["fc_b_pad"]
    nfw = params["new_fc_w_pad"]
    nfb = params["new_fc_b_pad"]
    KCOL, CPAD = wcol.shape
    FPAD, NPAD = fcw.shape[-1], nfw.shape[-1]

    kern = functools.partial(_fused_twin_kernel, H=H, W=W, C_in=C_in, S=S)
    out = pl.pallas_call(
        kern,
        out_shape=jax.ShapeDtypeStruct((B, 1, NPAD), jnp.float32),
        grid=(B,),
        in_specs=[
            pl.BlockSpec((1, S, H + 2, W + 2, C_in), lambda b: (b, 0, 0, 0, 0)),
            pl.BlockSpec((KCOL, CPAD), lambda b: (0, 0)),
            pl.BlockSpec((1, CPAD), lambda b: (0, 0)),
            pl.BlockSpec((CPAD, FPAD), lambda b: (0, 0)),
            pl.BlockSpec((1, FPAD), lambda b: (0, 0)),
            pl.BlockSpec((FPAD, NPAD), lambda b: (0, 0)),
            pl.BlockSpec((1, NPAD), lambda b: (0, 0)),
        ],
        out_specs=pl.BlockSpec((1, 1, NPAD), lambda b: (b, 0, 0)),
        # Batch grid is embarrassingly parallel -> shards across the two
        # TensorCores on v7x.  VMEM per step is well under every generation's
        # scoped limit (set vmem_limit_bytes when scaling H/W up).
        compiler_params=pltpu.CompilerParams(dimension_semantics=("parallel",)),
    )(x, wcol, cb, fcw, fcb, nfw, nfb)

    # Strip the lane padding: (B, 1, NPAD) -> (B, num_class)
    return out[:, 0, :num_class]


# ----------------------------------------------------------------------------
# Main
# ----------------------------------------------------------------------------
if __name__ == "__main__":
    # Small deterministic config: modality='RGB', clip_length=1 -> sample_len=3
    B, num_segments, clip_length = 2, 4, 1
    sample_len = 3 * clip_length
    H = W = 16
    C_CONV, FEAT_DIM, NUM_CLASS = 16, 32, 8

    key = jax.random.PRNGKey(0)
    k_x, k_p = jax.random.split(key)
    x = jax.random.normal(k_x, (B, num_segments * sample_len, H, W), jnp.float32)
    params = init_params(k_p, sample_len, C_CONV, FEAT_DIM, NUM_CLASS)

    out = twin_network_forward(x, params, num_segments=num_segments,
                               sample_len=sample_len)
    out = jax.block_until_ready(out)
    assert out.shape == (B, NUM_CLASS), out.shape
    print("KERNEL_OK")
</pallas_src>

<mosaic_0001>
module attributes {stable_mosaic.version = 11 : i64} {
  func.func @_fused_twin_kernel(%arg0: i32, %arg1: memref<1x4x18x18x3xf32, #tpu.memory_space<vmem>>, %arg2: memref<27x128xbf16, #tpu.memory_space<vmem>>, %arg3: memref<1x128xf32, #tpu.memory_space<vmem>>, %arg4: memref<128x128xf32, #tpu.memory_space<vmem>>, %arg5: memref<1x128xf32, #tpu.memory_space<vmem>>, %arg6: memref<128x128xf32, #tpu.memory_space<vmem>>, %arg7: memref<1x128xf32, #tpu.memory_space<vmem>>, %arg8: memref<1x1x128xf32, #tpu.memory_space<vmem>>) attributes {dimension_semantics = [#tpu.dimension_semantics<parallel>], iteration_bounds = array<i64: 2>, scalar_prefetch = 0 : i64, scratch_operands = 0 : i64, tpu.core_type = #tpu.core_type<tc>, window_params = [{transform_indices = @transform_0, window_bounds = array<i64: 1, 4, 18, 18, 3>}, {pipeline_mode = #tpu.pipeline_mode<synchronous>, transform_indices = @transform_1, window_bounds = array<i64: 27, 128>}, {pipeline_mode = #tpu.pipeline_mode<synchronous>, transform_indices = @transform_2, window_bounds = array<i64: 1, 128>}, {pipeline_mode = #tpu.pipeline_mode<synchronous>, transform_indices = @transform_3, window_bounds = array<i64: 128, 128>}, {pipeline_mode = #tpu.pipeline_mode<synchronous>, transform_indices = @transform_4, window_bounds = array<i64: 1, 128>}, {pipeline_mode = #tpu.pipeline_mode<synchronous>, transform_indices = @transform_5, window_bounds = array<i64: 128, 128>}, {pipeline_mode = #tpu.pipeline_mode<synchronous>, transform_indices = @transform_6, window_bounds = array<i64: 1, 128>}, {transform_indices = @transform_7, window_bounds = array<i64: 1, 1, 128>}]} {
    %c0 = arith.constant 0 : index
    %c0_0 = arith.constant 0 : index
    %c0_1 = arith.constant 0 : index
    %c0_2 = arith.constant 0 : index
    %c0_3 = arith.constant 0 : index
    %0 = vector.load %arg1[%c0, %c0_0, %c0_1, %c0_2, %c0_3] : memref<1x4x18x18x3xf32, #tpu.memory_space<vmem>>, vector<1x4x18x18x3xf32>
    %1 = vector.shape_cast %0 : vector<1x4x18x18x3xf32> to vector<4x18x18x3xf32>
    %2 = vector.extract_strided_slice %1 {offsets = [0, 0, 0, 0], sizes = [4, 16, 16, 3], strides = [1, 1, 1, 1]} : vector<4x18x18x3xf32> to vector<4x16x16x3xf32>
    %3 = vector.shape_cast %2 : vector<4x16x16x3xf32> to vector<1024x3xf32>
    %4 = vector.extract_strided_slice %1 {offsets = [0, 0, 1, 0], sizes = [4, 16, 16, 3], strides = [1, 1, 1, 1]} : vector<4x18x18x3xf32> to vector<4x16x16x3xf32>
    %5 = vector.shape_cast %4 : vector<4x16x16x3xf32> to vector<1024x3xf32>
    %6 = vector.extract_strided_slice %1 {offsets = [0, 0, 2, 0], sizes = [4, 16, 16, 3], strides = [1, 1, 1, 1]} : vector<4x18x18x3xf32> to vector<4x16x16x3xf32>
    %7 = vector.shape_cast %6 : vector<4x16x16x3xf32> to vector<1024x3xf32>
    %8 = vector.extract_strided_slice %1 {offsets = [0, 1, 0, 0], sizes = [4, 16, 16, 3], strides = [1, 1, 1, 1]} : vector<4x18x18x3xf32> to vector<4x16x16x3xf32>
    %9 = vector.shape_cast %8 : vector<4x16x16x3xf32> to vector<1024x3xf32>
    %10 = vector.extract_strided_slice %1 {offsets = [0, 1, 1, 0], sizes = [4, 16, 16, 3], strides = [1, 1, 1, 1]} : vector<4x18x18x3xf32> to vector<4x16x16x3xf32>
    %11 = vector.shape_cast %10 : vector<4x16x16x3xf32> to vector<1024x3xf32>
    %12 = vector.extract_strided_slice %1 {offsets = [0, 1, 2, 0], sizes = [4, 16, 16, 3], strides = [1, 1, 1, 1]} : vector<4x18x18x3xf32> to vector<4x16x16x3xf32>
    %13 = vector.shape_cast %12 : vector<4x16x16x3xf32> to vector<1024x3xf32>
    %14 = vector.extract_strided_slice %1 {offsets = [0, 2, 0, 0], sizes = [4, 16, 16, 3], strides = [1, 1, 1, 1]} : vector<4x18x18x3xf32> to vector<4x16x16x3xf32>
    %15 = vector.shape_cast %14 : vector<4x16x16x3xf32> to vector<1024x3xf32>
    %16 = vector.extract_strided_slice %1 {offsets = [0, 2, 1, 0], sizes = [4, 16, 16, 3], strides = [1, 1, 1, 1]} : vector<4x18x18x3xf32> to vector<4x16x16x3xf32>
    %17 = vector.shape_cast %16 : vector<4x16x16x3xf32> to vector<1024x3xf32>
    %18 = vector.extract_strided_slice %1 {offsets = [0, 2, 2, 0], sizes = [4, 16, 16, 3], strides = [1, 1, 1, 1]} : vector<4x18x18x3xf32> to vector<4x16x16x3xf32>
    %19 = vector.shape_cast %18 : vector<4x16x16x3xf32> to vector<1024x3xf32>
    %20 = tpu.concatenate %3, %5, %7, %9, %11, %13, %15, %17, %19 in 1 : vector<1024x3xf32>, vector<1024x3xf32>, vector<1024x3xf32>, vector<1024x3xf32>, vector<1024x3xf32>, vector<1024x3xf32>, vector<1024x3xf32>, vector<1024x3xf32>, vector<1024x3xf32> -> vector<1024x27xf32>
    %21 = arith.truncf %20 : vector<1024x27xf32> to vector<1024x27xbf16>
    %c0_4 = arith.constant 0 : index
    %c0_5 = arith.constant 0 : index
    %22 = vector.load %arg2[%c0_4, %c0_5] : memref<27x128xbf16, #tpu.memory_space<vmem>>, vector<27x128xbf16>
    %cst = arith.constant dense<0.000000e+00> : vector<1024x128xf32>
    %23 = tpu.matmul %21, %22, %cst {dimension_numbers = #tpu.dot_dimension_numbers<[1], [0], [0], [1], [0, 0, 1, 1], [], []>} : vector<1024x27xbf16>, vector<27x128xbf16>, vector<1024x128xf32> -> vector<1024x128xf32>
    %c0_6 = arith.constant 0 : index
    %c0_7 = arith.constant 0 : index
    %24 = vector.load %arg3[%c0_6, %c0_7] : memref<1x128xf32, #tpu.memory_space<vmem>>, vector<1x128xf32>
    %25 = vector.broadcast %24 : vector<1x128xf32> to vector<1024x128xf32>
    %26 = arith.addf %23, %25 : vector<1024x128xf32>
    %cst_8 = arith.constant 0.000000e+00 : f32
    %27 = vector.broadcast %cst_8 : f32 to vector<1024x128xf32>
    %28 = arith.maximumf %26, %27 : vector<1024x128xf32>
    %29 = vector.shape_cast %28 : vector<1024x128xf32> to vector<4x256x128xf32>
    %cst_9 = arith.constant dense<0.000000e+00> : vector<4x128xf32>
    %30 = vector.multi_reduction <add>, %29, %cst_9 [1] : vector<4x256x128xf32> to vector<4x128xf32>
    %cst_10 = arith.constant 2.560000e+02 : f32
    %31 = vector.broadcast %cst_10 : f32 to vector<4x128xf32>
    %32 = arith.divf %30, %31 : vector<4x128xf32>
    %c0_11 = arith.constant 0 : index
    %c0_12 = arith.constant 0 : index
    %33 = vector.load %arg4[%c0_11, %c0_12] : memref<128x128xf32, #tpu.memory_space<vmem>>, vector<128x128xf32>
    %cst_13 = arith.constant dense<0.000000e+00> : vector<4x128xf32>
    %34 = tpu.matmul %32, %33, %cst_13 {dimension_numbers = #tpu.dot_dimension_numbers<[1], [0], [0], [1], [0, 0, 1, 1], [], []>} : vector<4x128xf32>, vector<128x128xf32>, vector<4x128xf32> -> vector<4x128xf32>
    %c0_14 = arith.constant 0 : index
    %c0_15 = arith.constant 0 : index
    %35 = vector.load %arg5[%c0_14, %c0_15] : memref<1x128xf32, #tpu.memory_space<vmem>>, vector<1x128xf32>
    %36 = vector.broadcast %35 : vector<1x128xf32> to vector<4x128xf32>
    %37 = arith.addf %34, %36 : vector<4x128xf32>
    %cst_16 = arith.constant 0.000000e+00 : f32
    %38 = vector.broadcast %cst_16 : f32 to vector<4x128xf32>
    %39 = arith.maximumf %37, %38 : vector<4x128xf32>
    %cst_17 = arith.constant dense<0.000000e+00> : vector<128xf32>
    %40 = vector.multi_reduction <add>, %39, %cst_17 [0] : vector<4x128xf32> to vector<128xf32>
    %41 = vector.shape_cast %40 : vector<128xf32> to vector<1x128xf32>
    %cst_18 = arith.constant 4.000000e+00 : f32
    %42 = vector.broadcast %cst_18 : f32 to vector<1x128xf32>
    %43 = arith.divf %41, %42 : vector<1x128xf32>
    %c0_19 = arith.constant 0 : index
    %c0_20 = arith.constant 0 : index
    %44 = vector.load %arg6[%c0_19, %c0_20] : memref<128x128xf32, #tpu.memory_space<vmem>>, vector<128x128xf32>
    %cst_21 = arith.constant dense<0.000000e+00> : vector<1x128xf32>
    %45 = tpu.matmul %43, %44, %cst_21 {dimension_numbers = #tpu.dot_dimension_numbers<[1], [0], [0], [1], [0, 0, 1, 1], [], []>} : vector<1x128xf32>, vector<128x128xf32>, vector<1x128xf32> -> vector<1x128xf32>
    %c0_22 = arith.constant 0 : index
    %c0_23 = arith.constant 0 : index
    %46 = vector.load %arg7[%c0_22, %c0_23] : memref<1x128xf32, #tpu.memory_space<vmem>>, vector<1x128xf32>
    %47 = arith.addf %45, %46 : vector<1x128xf32>
    %c0_24 = arith.constant 0 : index
    %c0_25 = arith.constant 0 : index
    %c0_26 = arith.constant 0 : index
    %48 = vector.load %arg8[%c0_24, %c0_25, %c0_26] : memref<1x1x128xf32, #tpu.memory_space<vmem>>, vector<1x1x128xf32>
    %49 = vector.shape_cast %48 : vector<1x1x128xf32> to vector<1x128xf32>
    %50 = vector.shape_cast %47 : vector<1x128xf32> to vector<1x1x128xf32>
    tpu.vector_store %arg8[%c0_24, %c0_25, %c0_26], %50 {strides = array<i32>} : memref<1x1x128xf32, #tpu.memory_space<vmem>>, vector<1x1x128xf32>,
    return
  }
  func.func @transform_0(%arg0: i32) -> (i32, i32, i32, i32, i32) {
    %c0_i32 = arith.constant 0 : i32
    %c0_i32_0 = arith.constant 0 : i32
    %c0_i32_1 = arith.constant 0 : i32
    %c0_i32_2 = arith.constant 0 : i32
    %c0_i32_3 = arith.constant 0 : i32
    return %arg0, %c0_i32, %c0_i32_0, %c0_i32_1, %c0_i32_2 : i32, i32, i32, i32, i32
  }
  func.func @transform_1(%arg0: i32) -> (i32, i32) {
    %c0_i32 = arith.constant 0 : i32
    %c0_i32_0 = arith.constant 0 : i32
    %c0_i32_1 = arith.constant 0 : i32
    return %c0_i32, %c0_i32_0 : i32, i32
  }
  func.func @transform_2(%arg0: i32) -> (i32, i32) {
    %c0_i32 = arith.constant 0 : i32
    %c0_i32_0 = arith.constant 0 : i32
    %c0_i32_1 = arith.constant 0 : i32
    return %c0_i32, %c0_i32_0 : i32, i32
  }
  func.func @transform_3(%arg0: i32) -> (i32, i32) {
    %c0_i32 = arith.constant 0 : i32
    %c0_i32_0 = arith.constant 0 : i32
    %c0_i32_1 = arith.constant 0 : i32
    return %c0_i32, %c0_i32_0 : i32, i32
  }
  func.func @transform_4(%arg0: i32) -> (i32, i32) {
    %c0_i32 = arith.constant 0 : i32
    %c0_i32_0 = arith.constant 0 : i32
    %c0_i32_1 = arith.constant 0 : i32
    return %c0_i32, %c0_i32_0 : i32, i32
  }
  func.func @transform_5(%arg0: i32) -> (i32, i32) {
    %c0_i32 = arith.constant 0 : i32
    %c0_i32_0 = arith.constant 0 : i32
    %c0_i32_1 = arith.constant 0 : i32
    return %c0_i32, %c0_i32_0 : i32, i32
  }
  func.func @transform_6(%arg0: i32) -> (i32, i32) {
    %c0_i32 = arith.constant 0 : i32
    %c0_i32_0 = arith.constant 0 : i32
    %c0_i32_1 = arith.constant 0 : i32
    return %c0_i32, %c0_i32_0 : i32, i32
  }
  func.func @transform_7(%arg0: i32) -> (i32, i32, i32) {
    %c0_i32 = arith.constant 0 : i32
    %c0_i32_0 = arith.constant 0 : i32
    %c0_i32_1 = arith.constant 0 : i32
    return %arg0, %c0_i32, %c0_i32_0 : i32, i32, i32
  }
}

</mosaic_0001>

<llo_original>
// kernel: tpu_custom_call.1
$region0: #{tpu_custom_call.1}
  #allocation0 [shape = 'u32[]', space=smem, size = 0x4, offset = 0x4, fixed_abs, tag = 'smem constant byte address 0x4 - core index']
  #allocation1 [shape = 'u32[72,128]{1,0:T(1,128)}', space=vmem, size = 0x9000, scoped, tag = 'internal scratch']
  %s0 = inlined_call_operand.vmem [shape: f32[2,4,18,18,3], index: 0, kind: input, shape index: {}]
  %s1 = inlined_call_operand.vmem [shape: bf16[27,128], index: 1, kind: input, shape index: {}]
  %s2 = inlined_call_operand.vmem [shape: f32[1,128], index: 2, kind: input, shape index: {}]
  %s3 = inlined_call_operand.vmem [shape: f32[128,128], index: 3, kind: input, shape index: {}]
  %s4 = inlined_call_operand.vmem [shape: f32[1,128], index: 4, kind: input, shape index: {}]
  %s5 = inlined_call_operand.vmem [shape: f32[128,128], index: 5, kind: input, shape index: {}]
  %s6 = inlined_call_operand.vmem [shape: f32[1,128], index: 6, kind: input, shape index: {}]
  %s7 = inlined_call_operand.hbm [shape: f32[2,1,128], index: 7, kind: output, shape index: {}]
  %s8 = sld [smem:[#allocation0]]
  $region61: #{tpu_custom_call.1} parent=0
    _
  %s10 = ssub.s32 1, %s8
  %s11 = scalar_select 0, %s10, %s8
  $region1: #{tpu_custom_call.1} parent=0
    #allocation2 [shape = 'u8[1024]{0}', space=vmem, size = 0x400, scoped, tag = 'output window, operand 0']
    #allocation3 [shape = 's32[2]{0}', space=sflag, size = 0x8, scoped, tag = 'scoped memory for tpu_custom_call.1']
    %12 = vsyncpa [#allocation3], 0
    %s13 = scalar_lea.sflag [#allocation3], 1
    %14 = vsyncpa %s13, 0
    loop: start=0, step=1, limit=4
    $region2: #{tpu_custom_call.1} parent=1 // loop_pre_header
      _
    $region3: #{tpu_custom_call.1} parent=1 // loop_header
      %s16 = sphi 0, %s20
      %p17 = scmp.ge.s32.totalorder %s16, 4
      %s26 = sphi 0, %s28
      %s29 = sphi 0, %s26
      %s30 = sphi 0, %s29
      %s46 = sphi 0, %s30
      %s50 = sphi 0, %s50
      %s52 = sphi 0, %s50
      %s53 = sphi 0, %s52
      %s67 = sphi 0, %s53
      %s71 = sphi 0, %s71
      %s73 = sphi 0, %s71
      %s74 = sphi 0, %s73
      %s88 = sphi 0, %s74
      %s92 = sphi 0, %s92
      %s94 = sphi 0, %s92
      %s95 = sphi 0, %s94
      %s109 = sphi 0, %s95
      %s113 = sphi 0, %s113
      %s115 = sphi 0, %s113
      %s116 = sphi 0, %s115
      %s130 = sphi 0, %s116
      %s134 = sphi 0, %s134
      %s136 = sphi 0, %s134
      %s137 = sphi 0, %s136
      %s151 = sphi 0, %s137
      %s155 = sphi 0, %s155
      %s157 = sphi 0, %s155
      %s158 = sphi 0, %s157
      %s172 = sphi 0, %s158
      %s178 = sphi 0, %s180
      %s181 = sphi 0, %s178
      %s182 = sphi 0, %s181
      %s198 = sphi 0, %s182
    $region4: #{tpu_custom_call.1} parent=1 // loop_header_branch
      %19 = sbr.rel (%p17) target = $region8
    $region5: #{tpu_custom_call.1} parent=1 // loop_body
      %s21 = ssub.s32 %s16, 1
      %s22 = ssub.s32 %s16, 2
      %s23 = sadd.s32 %s16, 1
      %s24 = ssub.s32 %s16, %s23
      %p25 = scmp.eq.s32.totalorder %s24, 0
      %s27 = sadd.s32 %s26, 1
      %s28 = scalar_select %p25, %s26, %s27
      %p31 = pneg %p25
      %p32 = scmp.eq.s32.totalorder %s16, 1
      %p33 = por %p31, %p32
      %p34 = scmp.ne.s32.totalorder %s26, %s29
      %p35 = scmp.eq.s32.totalorder %s16, 0
      %p36 = por %p34, %p35
      %p37 = scmp.ne.s32.totalorder %s26, %s29
      %p38 = scmp.eq.s32.totalorder %s21, 1
      %p39 = por %p37, %p38
      %p40 = scmp.ne.s32.totalorder %s29, %s30
      %p41 = scmp.eq.s32.totalorder %s21, 0
      %p42 = por %p40, %p41
      %p43 = scmp.ne.s32.totalorder %s29, %s30
      %p44 = scmp.eq.s32.totalorder %s22, 1
      %p45 = por %p43, %p44
      %p47 = scmp.ne.s32.totalorder %s30, %s46
      %p48 = scmp.eq.s32.totalorder %s22, 0
      %p49 = por %p47, %p48
      %s51 = sadd.s32 %s50, 1
      %p54 = scmp.eq.s32.totalorder %s16, 1
      %p55 = scmp.ne.s32.totalorder %s50, %s52
      %p56 = scmp.eq.s32.totalorder %s16, 0
      %p57 = por %p55, %p56
      %p58 = scmp.ne.s32.totalorder %s50, %s52
      %p59 = scmp.eq.s32.totalorder %s21, 1
      %p60 = por %p58, %p59
      %p61 = scmp.ne.s32.totalorder %s52, %s53
      %p62 = scmp.eq.s32.totalorder %s21, 0
      %p63 = por %p61, %p62
      %p64 = scmp.ne.s32.totalorder %s52, %s53
      %p65 = scmp.eq.s32.totalorder %s22, 1
      %p66 = por %p64, %p65
      %p68 = scmp.ne.s32.totalorder %s53, %s67
      %p69 = scmp.eq.s32.totalorder %s22, 0
      %p70 = por %p68, %p69
      %s72 = sadd.s32 %s71, 1
      %p75 = scmp.eq.s32.totalorder %s16, 1
      %p76 = scmp.ne.s32.totalorder %s71, %s73
      %p77 = scmp.eq.s32.totalorder %s16, 0
      %p78 = por %p76, %p77
      %p79 = scmp.ne.s32.totalorder %s71, %s73
      %p80 = scmp.eq.s32.totalorder %s21, 1
      %p81 = por %p79, %p80
      %p82 = scmp.ne.s32.totalorder %s73, %s74
      %p83 = scmp.eq.s32.totalorder %s21, 0
      %p84 = por %p82, %p83
      %p85 = scmp.ne.s32.totalorder %s73, %s74
      %p86 = scmp.eq.s32.totalorder %s22, 1
      %p87 = por %p85, %p86
      %p89 = scmp.ne.s32.totalorder %s74, %s88
      %p90 = scmp.eq.s32.totalorder %s22, 0
      %p91 = por %p89, %p90
      %s93 = sadd.s32 %s92, 1
      %p96 = scmp.eq.s32.totalorder %s16, 1
      %p97 = scmp.ne.s32.totalorder %s92, %s94
      %p98 = scmp.eq.s32.totalorder %s16, 0
      %p99 = por %p97, %p98
      %p100 = scmp.ne.s32.totalorder %s92, %s94
      %p101 = scmp.eq.s32.totalorder %s21, 1
      %p102 = por %p100, %p101
      %p103 = scmp.ne.s32.totalorder %s94, %s95
      %p104 = scmp.eq.s32.totalorder %s21, 0
      %p105 = por %p103, %p104
      %p106 = scmp.ne.s32.totalorder %s94, %s95
      %p107 = scmp.eq.s32.totalorder %s22, 1
      %p108 = por %p106, %p107
      %p110 = scmp.ne.s32.totalorder %s95, %s109
      %p111 = scmp.eq.s32.totalorder %s22, 0
      %p112 = por %p110, %p111
      %s114 = sadd.s32 %s113, 1
      %p117 = scmp.eq.s32.totalorder %s16, 1
      %p118 = scmp.ne.s32.totalorder %s113, %s115
      %p119 = scmp.eq.s32.totalorder %s16, 0
      %p120 = por %p118, %p119
      %p121 = scmp.ne.s32.totalorder %s113, %s115
      %p122 = scmp.eq.s32.totalorder %s21, 1
      %p123 = por %p121, %p122
      %p124 = scmp.ne.s32.totalorder %s115, %s116
      %p125 = scmp.eq.s32.totalorder %s21, 0
      %p126 = por %p124, %p125
      %p127 = scmp.ne.s32.totalorder %s115, %s116
      %p128 = scmp.eq.s32.totalorder %s22, 1
      %p129 = por %p127, %p128
      %p131 = scmp.ne.s32.totalorder %s116, %s130
      %p132 = scmp.eq.s32.totalorder %s22, 0
      %p133 = por %p131, %p132
      %s135 = sadd.s32 %s134, 1
      %p138 = scmp.eq.s32.totalorder %s16, 1
      %p139 = scmp.ne.s32.totalorder %s134, %s136
      %p140 = scmp.eq.s32.totalorder %s16, 0
      %p141 = por %p139, %p140
      %p142 = scmp.ne.s32.totalorder %s134, %s136
      %p143 = scmp.eq.s32.totalorder %s21, 1
      %p144 = por %p142, %p143
      %p145 = scmp.ne.s32.totalorder %s136, %s137
      %p146 = scmp.eq.s32.totalorder %s21, 0
      %p147 = por %p145, %p146
      %p148 = scmp.ne.s32.totalorder %s136, %s137
      %p149 = scmp.eq.s32.totalorder %s22, 1
      %p150 = por %p148, %p149
      %p152 = scmp.ne.s32.totalorder %s137, %s151
      %p153 = scmp.eq.s32.totalorder %s22, 0
      %p154 = por %p152, %p153
      %s156 = sadd.s32 %s155, 1
      %p159 = scmp.eq.s32.totalorder %s16, 1
      %p160 = scmp.ne.s32.totalorder %s155, %s157
      %p161 = scmp.eq.s32.totalorder %s16, 0
      %p162 = por %p160, %p161
      %p163 = scmp.ne.s32.totalorder %s155, %s157
      %p164 = scmp.eq.s32.totalorder %s21, 1
      %p165 = por %p163, %p164
      %p166 = scmp.ne.s32.totalorder %s157, %s158
      %p167 = scmp.eq.s32.totalorder %s21, 0
      %p168 = por %p166, %p167
      %p169 = scmp.ne.s32.totalorder %s157, %s158
      %p170 = scmp.eq.s32.totalorder %s22, 1
      %p171 = por %p169, %p170
      %p173 = scmp.ne.s32.totalorder %s158, %s172
      %p174 = scmp.eq.s32.totalorder %s22, 0
      %p175 = por %p173, %p174
      %s176 = ssub.s32 %s16, %s23
      %p177 = scmp.eq.s32.totalorder %s176, 0
      %s179 = sadd.s32 %s178, 1
      %s180 = scalar_select %p177, %s178, %s179
      %p183 = pneg %p177
      %p184 = scmp.eq.s32.totalorder %s16, 1
      %p185 = por %p183, %p184
      %p186 = scmp.ne.s32.totalorder %s178, %s181
      %p187 = scmp.eq.s32.totalorder %s16, 0
      %p188 = por %p186, %p187
      %p189 = scmp.ne.s32.totalorder %s178, %s181
      %p190 = scmp.eq.s32.totalorder %s21, 1
      %p191 = por %p189, %p190
      %p192 = scmp.ne.s32.totalorder %s181, %s182
      %p193 = scmp.eq.s32.totalorder %s21, 0
      %p194 = por %p192, %p193
      %p195 = scmp.ne.s32.totalorder %s181, %s182
      %p196 = scmp.eq.s32.totalorder %s22, 1
      %p197 = por %p195, %p196
      %p199 = scmp.ne.s32.totalorder %s182, %s198
      %p200 = scmp.eq.s32.totalorder %s22, 0
      %p201 = por %p199, %p200
      %p202 = scmp.le.s32.totalorder 1, %s16
      %p203 = scmp.lt.s32.totalorder %s16, 3
      %p204 = pnand %p202, %p203
      %p205 = pneg %p204
      // Predicated region
      $region9: #{tpu_custom_call.1} parent=5 // pred_check
        _
      $region10: #{tpu_custom_call.1} parent=5 // pred_check_branch
        %207 = sbr.rel (%p204) target = $region12
      $region11: #{tpu_custom_call.1} parent=5 // pred_region
        %s208 = ssub.s32 %s16, 1
        // Predicated region
        $region13: #{tpu_custom_call.1} parent=11 // pred_check
          %p209 = pneg %p63
        $region14: #{tpu_custom_call.1} parent=11 // pred_check_branch
          %211 = sbr.rel (%p209) target = $region16
        $region15: #{tpu_custom_call.1} parent=11 // pred_region
          _
        $region16: #{tpu_custom_call.1} parent=11 // pred_fallthru
          _
        // Predicated region
        $region17: #{tpu_custom_call.1} parent=11 // pred_check
          %p212 = pneg %p84
        $region18: #{tpu_custom_call.1} parent=11 // pred_check_branch
          %214 = sbr.rel (%p212) target = $region20
        $region19: #{tpu_custom_call.1} parent=11 // pred_region
          _
        $region20: #{tpu_custom_call.1} parent=11 // pred_fallthru
          _
        // Predicated region
        $region21: #{tpu_custom_call.1} parent=11 // pred_check
          %p215 = pneg %p105
        $region22: #{tpu_custom_call.1} parent=11 // pred_check_branch
          %217 = sbr.rel (%p215) target = $region24
        $region23: #{tpu_custom_call.1} parent=11 // pred_region
          _
        $region24: #{tpu_custom_call.1} parent=11 // pred_fallthru
          _
        // Predicated region
        $region25: #{tpu_custom_call.1} parent=11 // pred_check
          %p218 = pneg %p126
        $region26: #{tpu_custom_call.1} parent=11 // pred_check_branch
          %220 = sbr.rel (%p218) target = $region28
        $region27: #{tpu_custom_call.1} parent=11 // pred_region
          _
        $region28: #{tpu_custom_call.1} parent=11 // pred_fallthru
          _
        // Predicated region
        $region29: #{tpu_custom_call.1} parent=11 // pred_check
          %p221 = pneg %p147
        $region30: #{tpu_custom_call.1} parent=11 // pred_check_branch
          %223 = sbr.rel (%p221) target = $region32
        $region31: #{tpu_custom_call.1} parent=11 // pred_region
          _
        $region32: #{tpu_custom_call.1} parent=11 // pred_fallthru
          _
        // Predicated region
        $region33: #{tpu_custom_call.1} parent=11 // pred_check
          %p224 = pneg %p168
        $region34: #{tpu_custom_call.1} parent=11 // pred_check_branch
          %226 = sbr.rel (%p224) target = $region36
        $region35: #{tpu_custom_call.1} parent=11 // pred_region
          _
        $region36: #{tpu_custom_call.1} parent=11 // pred_fallthru
          _
      $region12: #{tpu_custom_call.1} parent=5 // pred_fallthru
        _
      %p227 = scmp.lt.s32.totalorder %s16, 2
      // Predicated region
      $region37: #{tpu_custom_call.1} parent=5 // pred_check
        %p228 = pneg %p227
      $region38: #{tpu_custom_call.1} parent=5 // pred_check_branch
        %230 = sbr.rel (%p228) target = $region40
      $region39: #{tpu_custom_call.1} parent=5 // pred_region
        // Predicated region
        $region41: #{tpu_custom_call.1} parent=39 // pred_check
          %p231 = pneg %p36
        $region42: #{tpu_custom_call.1} parent=39 // pred_check_branch
          %233 = sbr.rel (%p231) target = $region44
        $region43: #{tpu_custom_call.1} parent=39 // pred_region
          %p234 = scmp.lt.s32.totalorder %s16, 1
          %s235 = scalar_select %p234, %s16, 1
          %s236 = smul.addr %s235, 216
          %s237 = smul.addr %s236, 8
          %s238 = scalar_lea.vmem %s0, %s237
        $region44: #{tpu_custom_call.1} parent=39 // pred_fallthru
          _
      $region40: #{tpu_custom_call.1} parent=5 // pred_fallthru
        _
      %p239 = scmp.le.s32.totalorder 1, %s16
      %p240 = scmp.lt.s32.totalorder %s16, 3
      %p241 = pnand %p239, %p240
      %p242 = pneg %p241
      // Predicated region
      $region45: #{tpu_custom_call.1} parent=5 // pred_check
        _
      $region46: #{tpu_custom_call.1} parent=5 // pred_check_branch
        %244 = sbr.rel (%p241) target = $region48
      $region47: #{tpu_custom_call.1} parent=5 // pred_region
        %s245 = ssub.s32 %s16, 1
        %p246 = scmp.lt.s32.totalorder %s21, 1
        %s247 = scalar_select %p246, %s21, 1
        %s248 = smul.addr %s247, 216
        %s249 = smul.addr %s248, 8
        %s250 = scalar_lea.vmem %s0, %s249
        %p251 = pneg %p42
        %p252 = pneg %p39
        %p253 = pneg %p63
        %p254 = pneg %p60
        %p255 = pneg %p84
        %p256 = pneg %p81
        %p257 = pneg %p105
        %p258 = pneg %p102
        %p259 = pneg %p126
        %p260 = pneg %p123
        %p261 = pneg %p147
        %p262 = pneg %p144
        %p263 = pneg %p168
        %p264 = pneg %p165
        %p265 = pneg %p194
        %p266 = pneg %p191
        %s267 = sand.u32 %s181, 1
        %s268 = scalar_lea.sflag [#allocation3], %s267
        %s269 = sand.u32 %s181, 1
        %s270 = scalar_lea.vmem [#allocation2], %s269
        %p271 = scmp.lt.s32.totalorder %s21, 1
        %s272 = scalar_select %p271, %s21, 1
        %s273 = smul.addr %s272, 216
        %s274 = smul.addr %s273, 8
        %s275 = scalar_lea.vmem %s0, %s274
        %v277 = vld [vmem:[%s275] sm:$0xff]
        %v278 = vld [vmem:[%s275 + $0x8] sm:$0xff]
        %v279 = vld [vmem:[%s275 + $0x10] sm:$0x3]
        %v280 = vld [vmem:[%s275 + $0x18] sm:$0xff]
        %v281 = vld [vmem:[%s275 + $0x20] sm:$0xff]
        %v282 = vld [vmem:[%s275 + $0x28] sm:$0x3]
        %v283 = vld [vmem:[%s275 + $0x30] sm:$0xff]
        %v284 = vld [vmem:[%s275 + $0x38] sm:$0xff]
        %v285 = vld [vmem:[%s275 + $0x40] sm:$0x3]
        %v286 = vld [vmem:[%s275 + $0x48] sm:$0xff]
        %v287 = vld [vmem:[%s275 + $0x50] sm:$0xff]
        %v288 = vld [vmem:[%s275 + $0x58] sm:$0x3]
        %v289 = vld [vmem:[%s275 + $0x60] sm:$0xff]
        %v290 = vld [vmem:[%s275 + $0x68] sm:$0xff]
        %v291 = vld [vmem:[%s275 + $0x70] sm:$0x3]
        %v292 = vld [vmem:[%s275 + $0x78] sm:$0xff]
        %v293 = vld [vmem:[%s275 + $0x80] sm:$0xff]
        %v294 = vld [vmem:[%s275 + $0x88] sm:$0x3]
        %v295 = vld [vmem:[%s275 + $0x90] sm:$0xff]
        %v296 = vld [vmem:[%s275 + $0x98] sm:$0xff]
        %v297 = vld [vmem:[%s275 + $0xa0] sm:$0x3]
        %v298 = vld [vmem:[%s275 + $0xa8] sm:$0xff]
        %v299 = vld [vmem:[%s275 + $0xb0] sm:$0xff]
        %v300 = vld [vmem:[%s275 + $0xb8] sm:$0x3]
        %v301 = vld [vmem:[%s275 + $0xc0] sm:$0xff]
        %v302 = vld [vmem:[%s275 + $0xc8] sm:$0xff]
        %v303 = vld [vmem:[%s275 + $0xd0] sm:$0x3]
        %v304 = vld [vmem:[%s275 + $0xd8] sm:$0xff]
        %v305 = vld [vmem:[%s275 + $0xe0] sm:$0xff]
        %v306 = vld [vmem:[%s275 + $0xe8] sm:$0x3]
        %v307 = vld [vmem:[%s275 + $0xf0] sm:$0xff]
        %v308 = vld [vmem:[%s275 + $0xf8] sm:$0xff]
        %v309 = vld [vmem:[%s275 + $0x100] sm:$0x3]
        %v310 = vld [vmem:[%s275 + $0x108] sm:$0xff]
        %v311 = vld [vmem:[%s275 + $0x110] sm:$0xff]
        %v312 = vld [vmem:[%s275 + $0x118] sm:$0x3]
        %v313 = vld [vmem:[%s275 + $0x120] sm:$0xff]
        %v314 = vld [vmem:[%s275 + $0x128] sm:$0xff]
        %v315 = vld [vmem:[%s275 + $0x130] sm:$0x3]
        %v316 = vld [vmem:[%s275 + $0x138] sm:$0xff]
        %v317 = vld [vmem:[%s275 + $0x140] sm:$0xff]
        %v318 = vld [vmem:[%s275 + $0x148] sm:$0x3]
        %v319 = vld [vmem:[%s275 + $0x150] sm:$0xff]
        %v320 = vld [vmem:[%s275 + $0x158] sm:$0xff]
        %v321 = vld [vmem:[%s275 + $0x160] sm:$0x3]
        %v322 = vld [vmem:[%s275 + $0x168] sm:$0xff]
        %v323 = vld [vmem:[%s275 + $0x170] sm:$0xff]
        %v324 = vld [vmem:[%s275 + $0x178] sm:$0x3]
        %v325 = vld [vmem:[%s275 + $0x180] sm:$0xff]
        %v326 = vld [vmem:[%s275 + $0x188] sm:$0xff]
        %v327 = vld [vmem:[%s275 + $0x190] sm:$0x3]
        %v328 = vld [vmem:[%s275 + $0x198] sm:$0xff]
        %v329 = vld [vmem:[%s275 + $0x1a0] sm:$0xff]
        %v330 = vld [vmem:[%s275 + $0x1a8] sm:$0x3]
        %v331 = vld [vmem:[%s275 + $0x1b0] sm:$0xff]
        %v332 = vld [vmem:[%s275 + $0x1b8] sm:$0xff]
        %v333 = vld [vmem:[%s275 + $0x1c0] sm:$0x3]
        %v334 = vld [vmem:[%s275 + $0x1c8] sm:$0xff]
        %v335 = vld [vmem:[%s275 + $0x1d0] sm:$0xff]
        %v336 = vld [vmem:[%s275 + $0x1d8] sm:$0x3]
        %v337 = vld [vmem:[%s275 + $0x1e0] sm:$0xff]
        %v338 = vld [vmem:[%s275 + $0x1e8] sm:$0xff]
        %v339 = vld [vmem:[%s275 + $0x1f0] sm:$0x3]
        %v340 = vld [vmem:[%s275 + $0x1f8] sm:$0xff]
        %v341 = vld [vmem:[%s275 + $0x200] sm:$0xff]
        %v342 = vld [vmem:[%s275 + $0x208] sm:$0x3]
        %v343 = vld [vmem:[%s275 + $0x210] sm:$0xff]
        %v344 = vld [vmem:[%s275 + $0x218] sm:$0xff]
        %v345 = vld [vmem:[%s275 + $0x220] sm:$0x3]
        %v346 = vld [vmem:[%s275 + $0x228] sm:$0xff]
        %v347 = vld [vmem:[%s275 + $0x230] sm:$0xff]
        %v348 = vld [vmem:[%s275 + $0x238] sm:$0x3]
        %v349 = vld [vmem:[%s275 + $0x240] sm:$0xff]
        %v350 = vld [vmem:[%s275 + $0x248] sm:$0xff]
        %v351 = vld [vmem:[%s275 + $0x250] sm:$0x3]
        %v352 = vld [vmem:[%s275 + $0x258] sm:$0xff]
        %v353 = vld [vmem:[%s275 + $0x260] sm:$0xff]
        %v354 = vld [vmem:[%s275 + $0x268] sm:$0x3]
        %v355 = vld [vmem:[%s275 + $0x270] sm:$0xff]
        %v356 = vld [vmem:[%s275 + $0x278] sm:$0xff]
        %v357 = vld [vmem:[%s275 + $0x280] sm:$0x3]
        %v358 = vld [vmem:[%s275 + $0x288] sm:$0xff]
        %v359 = vld [vmem:[%s275 + $0x290] sm:$0xff]
        %v360 = vld [vmem:[%s275 + $0x298] sm:$0x3]
        %v361 = vld [vmem:[%s275 + $0x2a0] sm:$0xff]
        %v362 = vld [vmem:[%s275 + $0x2a8] sm:$0xff]
        %v363 = vld [vmem:[%s275 + $0x2b0] sm:$0x3]
        %v364 = vld [vmem:[%s275 + $0x2b8] sm:$0xff]
        %v365 = vld [vmem:[%s275 + $0x2c0] sm:$0xff]
        %v366 = vld [vmem:[%s275 + $0x2c8] sm:$0x3]
        %v367 = vld [vmem:[%s275 + $0x2d0] sm:$0xff]
        %v368 = vld [vmem:[%s275 + $0x2d8] sm:$0xff]
        %v369 = vld [vmem:[%s275 + $0x2e0] sm:$0x3]
        %v370 = vld [vmem:[%s275 + $0x2e8] sm:$0xff]
        %v371 = vld [vmem:[%s275 + $0x2f0] sm:$0xff]
        %v372 = vld [vmem:[%s275 + $0x2f8] sm:$0x3]
        %v373 = vld [vmem:[%s275 + $0x300] sm:$0xff]
        %v374 = vld [vmem:[%s275 + $0x308] sm:$0xff]
        %v375 = vld [vmem:[%s275 + $0x310] sm:$0x3]
        %v376 = vld [vmem:[%s275 + $0x318] sm:$0xff]
        %v377 = vld [vmem:[%s275 + $0x320] sm:$0xff]
        %v378 = vld [vmem:[%s275 + $0x328] sm:$0x3]
        %v379 = vld [vmem:[%s275 + $0x330] sm:$0xff]
        %v380 = vld [vmem:[%s275 + $0x338] sm:$0xff]
        %v381 = vld [vmem:[%s275 + $0x340] sm:$0x3]
        %v382 = vld [vmem:[%s275 + $0x348] sm:$0xff]
        %v383 = vld [vmem:[%s275 + $0x350] sm:$0xff]
        %v384 = vld [vmem:[%s275 + $0x358] sm:$0x3]
        %v385 = vld [vmem:[%s275 + $0x360] sm:$0xff]
        %v386 = vld [vmem:[%s275 + $0x368] sm:$0xff]
        %v387 = vld [vmem:[%s275 + $0x370] sm:$0x3]
        %v388 = vld [vmem:[%s275 + $0x378] sm:$0xff]
        %v389 = vld [vmem:[%s275 + $0x380] sm:$0xff]
        %v390 = vld [vmem:[%s275 + $0x388] sm:$0x3]
        %v391 = vld [vmem:[%s275 + $0x390] sm:$0xff]
        %v392 = vld [vmem:[%s275 + $0x398] sm:$0xff]
        %v393 = vld [vmem:[%s275 + $0x3a0] sm:$0x3]
        %v394 = vld [vmem:[%s275 + $0x3a8] sm:$0xff]
        %v395 = vld [vmem:[%s275 + $0x3b0] sm:$0xff]
        %v396 = vld [vmem:[%s275 + $0x3b8] sm:$0x3]
        %v397 = vld [vmem:[%s275 + $0x3c0] sm:$0xff]
        %v398 = vld [vmem:[%s275 + $0x3c8] sm:$0xff]
        %v399 = vld [vmem:[%s275 + $0x3d0] sm:$0x3]
        %v400 = vld [vmem:[%s275 + $0x3d8] sm:$0xff]
        %v401 = vld [vmem:[%s275 + $0x3e0] sm:$0xff]
        %v402 = vld [vmem:[%s275 + $0x3e8] sm:$0x3]
        %v403 = vld [vmem:[%s275 + $0x3f0] sm:$0xff]
        %v404 = vld [vmem:[%s275 + $0x3f8] sm:$0xff]
        %v405 = vld [vmem:[%s275 + $0x400] sm:$0x3]
        %v406 = vld [vmem:[%s275 + $0x408] sm:$0xff]
        %v407 = vld [vmem:[%s275 + $0x410] sm:$0xff]
        %v408 = vld [vmem:[%s275 + $0x418] sm:$0x3]
        %v409 = vld [vmem:[%s275 + $0x420] sm:$0xff]
        %v410 = vld [vmem:[%s275 + $0x428] sm:$0xff]
        %v411 = vld [vmem:[%s275 + $0x430] sm:$0x3]
        %v412 = vld [vmem:[%s275 + $0x438] sm:$0xff]
        %v413 = vld [vmem:[%s275 + $0x440] sm:$0xff]
        %v414 = vld [vmem:[%s275 + $0x448] sm:$0x3]
        %v415 = vld [vmem:[%s275 + $0x450] sm:$0xff]
        %v416 = vld [vmem:[%s275 + $0x458] sm:$0xff]
        %v417 = vld [vmem:[%s275 + $0x460] sm:$0x3]
        %v418 = vld [vmem:[%s275 + $0x468] sm:$0xff]
        %v419 = vld [vmem:[%s275 + $0x470] sm:$0xff]
        %v420 = vld [vmem:[%s275 + $0x478] sm:$0x3]
        %v421 = vld [vmem:[%s275 + $0x480] sm:$0xff]
        %v422 = vld [vmem:[%s275 + $0x488] sm:$0xff]
        %v423 = vld [vmem:[%s275 + $0x490] sm:$0x3]
        %v424 = vld [vmem:[%s275 + $0x498] sm:$0xff]
        %v425 = vld [vmem:[%s275 + $0x4a0] sm:$0xff]
        %v426 = vld [vmem:[%s275 + $0x4a8] sm:$0x3]
        %v427 = vld [vmem:[%s275 + $0x4b0] sm:$0xff]
        %v428 = vld [vmem:[%s275 + $0x4b8] sm:$0xff]
        %v429 = vld [vmem:[%s275 + $0x4c0] sm:$0x3]
        %v430 = vld [vmem:[%s275 + $0x4c8] sm:$0xff]
        %v431 = vld [vmem:[%s275 + $0x4d0] sm:$0xff]
        %v432 = vld [vmem:[%s275 + $0x4d8] sm:$0x3]
        %v433 = vld [vmem:[%s275 + $0x4e0] sm:$0xff]
        %v434 = vld [vmem:[%s275 + $0x4e8] sm:$0xff]
        %v435 = vld [vmem:[%s275 + $0x4f0] sm:$0x3]
        %v436 = vld [vmem:[%s275 + $0x4f8] sm:$0xff]
        %v437 = vld [vmem:[%s275 + $0x500] sm:$0xff]
        %v438 = vld [vmem:[%s275 + $0x508] sm:$0x3]
        %v439 = vld [vmem:[%s275 + $0x510] sm:$0xff]
        %v440 = vld [vmem:[%s275 + $0x518] sm:$0xff]
        %v441 = vld [vmem:[%s275 + $0x520] sm:$0x3]
        %v442 = vld [vmem:[%s275 + $0x528] sm:$0xff]
        %v443 = vld [vmem:[%s275 + $0x530] sm:$0xff]
        %v444 = vld [vmem:[%s275 + $0x538] sm:$0x3]
        %v445 = vld [vmem:[%s275 + $0x540] sm:$0xff]
        %v446 = vld [vmem:[%s275 + $0x548] sm:$0xff]
        %v447 = vld [vmem:[%s275 + $0x550] sm:$0x3]
        %v448 = vld [vmem:[%s275 + $0x558] sm:$0xff]
        %v449 = vld [vmem:[%s275 + $0x560] sm:$0xff]
        %v450 = vld [vmem:[%s275 + $0x568] sm:$0x3]
        %v451 = vld [vmem:[%s275 + $0x570] sm:$0xff]
        %v452 = vld [vmem:[%s275 + $0x578] sm:$0xff]
        %v453 = vld [vmem:[%s275 + $0x580] sm:$0x3]
        %v454 = vld [vmem:[%s275 + $0x588] sm:$0xff]
        %v455 = vld [vmem:[%s275 + $0x590] sm:$0xff]
        %v456 = vld [vmem:[%s275 + $0x598] sm:$0x3]
        %v457 = vld [vmem:[%s275 + $0x5a0] sm:$0xff]
        %v458 = vld [vmem:[%s275 + $0x5a8] sm:$0xff]
        %v459 = vld [vmem:[%s275 + $0x5b0] sm:$0x3]
        %v460 = vld [vmem:[%s275 + $0x5b8] sm:$0xff]
        %v461 = vld [vmem:[%s275 + $0x5c0] sm:$0xff]
        %v462 = vld [vmem:[%s275 + $0x5c8] sm:$0x3]
        %v463 = vld [vmem:[%s275 + $0x5d0] sm:$0xff]
        %v464 = vld [vmem:[%s275 + $0x5d8] sm:$0xff]
        %v465 = vld [vmem:[%s275 + $0x5e0] sm:$0x3]
        %v466 = vld [vmem:[%s275 + $0x5e8] sm:$0xff]
        %v467 = vld [vmem:[%s275 + $0x5f0] sm:$0xff]
        %v468 = vld [vmem:[%s275 + $0x5f8] sm:$0x3]
        %v469 = vld [vmem:[%s275 + $0x600] sm:$0xff]
        %v470 = vld [vmem:[%s275 + $0x608] sm:$0xff]
        %v471 = vld [vmem:[%s275 + $0x610] sm:$0x3]
        %v472 = vld [vmem:[%s275 + $0x618] sm:$0xff]
        %v473 = vld [vmem:[%s275 + $0x620] sm:$0xff]
        %v474 = vld [vmem:[%s275 + $0x628] sm:$0x3]
        %v475 = vld [vmem:[%s275 + $0x630] sm:$0xff]
        %v476 = vld [vmem:[%s275 + $0x638] sm:$0xff]
        %v477 = vld [vmem:[%s275 + $0x640] sm:$0x3]
        %v478 = vld [vmem:[%s275 + $0x648] sm:$0xff]
        %v479 = vld [vmem:[%s275 + $0x650] sm:$0xff]
        %v480 = vld [vmem:[%s275 + $0x658] sm:$0x3]
        %v481 = vld [vmem:[%s275 + $0x660] sm:$0xff]
        %v482 = vld [vmem:[%s275 + $0x668] sm:$0xff]
        %v483 = vld [vmem:[%s275 + $0x670] sm:$0x3]
        %v484 = vld [vmem:[%s275 + $0x678] sm:$0xff]
        %v485 = vld [vmem:[%s275 + $0x680] sm:$0xff]
        %v486 = vld [vmem:[%s275 + $0x688] sm:$0x3]
        %v487 = vld [vmem:[%s275 + $0x690] sm:$0xff]
        %v488 = vld [vmem:[%s275 + $0x698] sm:$0xff]
        %v489 = vld [vmem:[%s275 + $0x6a0] sm:$0x3]
        %v490 = vld [vmem:[%s275 + $0x6a8] sm:$0xff]
        %v491 = vld [vmem:[%s275 + $0x6b0] sm:$0xff]
        %v492 = vld [vmem:[%s275 + $0x6b8] sm:$0x3]
        %vm685 = vcmask 1046528
        %v686 = vrot.slane %v277, 1
        %v687 = vrot.slane %v278, 1
        %v688 = vsel %vm685, %v686, %v687
        %v689 = vrot.slane %v279, 1
        %v690 = vsel %vm685, %v687, %v689
        %v691 = vrot.slane %v280, 1
        %v692 = vrot.slane %v281, 1
        %v693 = vsel %vm685, %v691, %v692
        %v694 = vrot.slane %v282, 1
        %v695 = vsel %vm685, %v692, %v694
        %v696 = vrot.slane %v283, 1
        %v697 = vrot.slane %v284, 1
        %v698 = vsel %vm685, %v696, %v697
        %v699 = vrot.slane %v285, 1
        %v700 = vsel %vm685, %v697, %v699
        %v701 = vrot.slane %v286, 1
        %v702 = vrot.slane %v287, 1
        %v703 = vsel %vm685, %v701, %v702
        %v704 = vrot.slane %v288, 1
        %v705 = vsel %vm685, %v702, %v704
        %v706 = vrot.slane %v289, 1
        %v707 = vrot.slane %v290, 1
        %v708 = vsel %vm685, %v706, %v707
        %v709 = vrot.slane %v291, 1
        %v710 = vsel %vm685, %v707, %v709
        %v711 = vrot.slane %v292, 1
        %v712 = vrot.slane %v293, 1
        %v713 = vsel %vm685, %v711, %v712
        %v714 = vrot.slane %v294, 1
        %v715 = vsel %vm685, %v712, %v714
        %v716 = vrot.slane %v295, 1
        %v717 = vrot.slane %v296, 1
        %v718 = vsel %vm685, %v716, %v717
        %v719 = vrot.slane %v297, 1
        %v720 = vsel %vm685, %v717, %v719
        %v721 = vrot.slane %v298, 1
        %v722 = vrot.slane %v299, 1
        %v723 = vsel %vm685, %v721, %v722
        %v724 = vrot.slane %v300, 1
        %v725 = vsel %vm685, %v722, %v724
        %v726 = vrot.slane %v301, 1
        %v727 = vrot.slane %v302, 1
        %v728 = vsel %vm685, %v726, %v727
        %v729 = vrot.slane %v303, 1
        %v730 = vsel %vm685, %v727, %v729
        %v731 = vrot.slane %v304, 1
        %v732 = vrot.slane %v305, 1
        %v733 = vsel %vm685, %v731, %v732
        %v734 = vrot.slane %v306, 1
        %v735 = vsel %vm685, %v732, %v734
        %v736 = vrot.slane %v307, 1
        %v737 = vrot.slane %v308, 1
        %v738 = vsel %vm685, %v736, %v737
        %v739 = vrot.slane %v309, 1
        %v740 = vsel %vm685, %v737, %v739
        %v741 = vrot.slane %v310, 1
        %v742 = vrot.slane %v311, 1
        %v743 = vsel %vm685, %v741, %v742
        %v744 = vrot.slane %v312, 1
        %v745 = vsel %vm685, %v742, %v744
        %v746 = vrot.slane %v313, 1
        %v747 = vrot.slane %v314, 1
        %v748 = vsel %vm685, %v746, %v747
        %v749 = vrot.slane %v315, 1
        %v750 = vsel %vm685, %v747, %v749
        %v751 = vrot.slane %v316, 1
        %v752 = vrot.slane %v317, 1
        %v753 = vsel %vm685, %v751, %v752
        %v754 = vrot.slane %v318, 1
        %v755 = vsel %vm685, %v752, %v754
        %v756 = vrot.slane %v319, 1
        %v757 = vrot.slane %v320, 1
        %v758 = vsel %vm685, %v756, %v757
        %v759 = vrot.slane %v321, 1
        %v760 = vsel %vm685, %v757, %v759
        %v761 = vrot.slane %v322, 1
        %v762 = vrot.slane %v323, 1
        %v763 = vsel %vm685, %v761, %v762
        %v764 = vrot.slane %v324, 1
        %v765 = vsel %vm685, %v762, %v764
        %v766 = vrot.slane %v331, 1
        %v767 = vrot.slane %v332, 1
        %v768 = vsel %vm685, %v766, %v767
        %v769 = vrot.slane %v333, 1
        %v770 = vsel %vm685, %v767, %v769
        %v771 = vrot.slane %v334, 1
        %v772 = vrot.slane %v335, 1
        %v773 = vsel %vm685, %v771, %v772
        %v774 = vrot.slane %v336, 1
        %v775 = vsel %vm685, %v772, %v774
        %v776 = vrot.slane %v337, 1
        %v777 = vrot.slane %v338, 1
        %v778 = vsel %vm685, %v776, %v777
        %v779 = vrot.slane %v339, 1
        %v780 = vsel %vm685, %v777, %v779
        %v781 = vrot.slane %v340, 1
        %v782 = vrot.slane %v341, 1
        %v783 = vsel %vm685, %v781, %v782
        %v784 = vrot.slane %v342, 1
        %v785 = vsel %vm685, %v782, %v784
        %v786 = vrot.slane %v343, 1
        %v787 = vrot.slane %v344, 1
        %v788 = vsel %vm685, %v786, %v787
        %v789 = vrot.slane %v345, 1
        %v790 = vsel %vm685, %v787, %v789
        %v791 = vrot.slane %v346, 1
        %v792 = vrot.slane %v347, 1
        %v793 = vsel %vm685, %v791, %v792
        %v794 = vrot.slane %v348, 1
        %v795 = vsel %vm685, %v792, %v794
        %v796 = vrot.slane %v349, 1
        %v797 = vrot.slane %v350, 1
        %v798 = vsel %vm685, %v796, %v797
        %v799 = vrot.slane %v351, 1
        %v800 = vsel %vm685, %v797, %v799
        %v801 = vrot.slane %v352, 1
        %v802 = vrot.slane %v353, 1
        %v803 = vsel %vm685, %v801, %v802
        %v804 = vrot.slane %v354, 1
        %v805 = vsel %vm685, %v802, %v804
        %v806 = vrot.slane %v355, 1
        %v807 = vrot.slane %v356, 1
        %v808 = vsel %vm685, %v806, %v807
        %v809 = vrot.slane %v357, 1
        %v810 = vsel %vm685, %v807, %v809
        %v811 = vrot.slane %v358, 1
        %v812 = vrot.slane %v359, 1
        %v813 = vsel %vm685, %v811, %v812
        %v814 = vrot.slane %v360, 1
        %v815 = vsel %vm685, %v812, %v814
        %v816 = vrot.slane %v361, 1
        %v817 = vrot.slane %v362, 1
        %v818 = vsel %vm685, %v816, %v817
        %v819 = vrot.slane %v363, 1
        %v820 = vsel %vm685, %v817, %v819
        %v821 = vrot.slane %v364, 1
        %v822 = vrot.slane %v365, 1
        %v823 = vsel %vm685, %v821, %v822
        %v824 = vrot.slane %v366, 1
        %v825 = vsel %vm685, %v822, %v824
        %v826 = vrot.slane %v367, 1
        %v827 = vrot.slane %v368, 1
        %v828 = vsel %vm685, %v826, %v827
        %v829 = vrot.slane %v369, 1
        %v830 = vsel %vm685, %v827, %v829
        %v831 = vrot.slane %v370, 1
        %v832 = vrot.slane %v371, 1
        %v833 = vsel %vm685, %v831, %v832
        %v834 = vrot.slane %v372, 1
        %v835 = vsel %vm685, %v832, %v834
        %v836 = vrot.slane %v373, 1
        %v837 = vrot.slane %v374, 1
        %v838 = vsel %vm685, %v836, %v837
        %v839 = vrot.slane %v375, 1
        %v840 = vsel %vm685, %v837, %v839
        %v841 = vrot.slane %v376, 1
        %v842 = vrot.slane %v377, 1
        %v843 = vsel %vm685, %v841, %v842
        %v844 = vrot.slane %v378, 1
        %v845 = vsel %vm685, %v842, %v844
        %v846 = vrot.slane %v385, 1
        %v847 = vrot.slane %v386, 1
        %v848 = vsel %vm685, %v846, %v847
        %v849 = vrot.slane %v387, 1
        %v850 = vsel %vm685, %v847, %v849
        %v851 = vrot.slane %v388, 1
        %v852 = vrot.slane %v389, 1
        %v853 = vsel %vm685, %v851, %v852
        %v854 = vrot.slane %v390, 1
        %v855 = vsel %vm685, %v852, %v854
        %v856 = vrot.slane %v391, 1
        %v857 = vrot.slane %v392, 1
        %v858 = vsel %vm685, %v856, %v857
        %v859 = vrot.slane %v393, 1
        %v860 = vsel %vm685, %v857, %v859
        %v861 = vrot.slane %v394, 1
        %v862 = vrot.slane %v395, 1
        %v863 = vsel %vm685, %v861, %v862
        %v864 = vrot.slane %v396, 1
        %v865 = vsel %vm685, %v862, %v864
        %v866 = vrot.slane %v397, 1
        %v867 = vrot.slane %v398, 1
        %v868 = vsel %vm685, %v866, %v867
        %v869 = vrot.slane %v399, 1
        %v870 = vsel %vm685, %v867, %v869
        %v871 = vrot.slane %v400, 1
        %v872 = vrot.slane %v401, 1
        %v873 = vsel %vm685, %v871, %v872
        %v874 = vrot.slane %v402, 1
        %v875 = vsel %vm685, %v872, %v874
        %v876 = vrot.slane %v403, 1
        %v877 = vrot.slane %v404, 1
        %v878 = vsel %vm685, %v876, %v877
        %v879 = vrot.slane %v405, 1
        %v880 = vsel %vm685, %v877, %v879
        %v881 = vrot.slane %v406, 1
        %v882 = vrot.slane %v407, 1
        %v883 = vsel %vm685, %v881, %v882
        %v884 = vrot.slane %v408, 1
        %v885 = vsel %vm685, %v882, %v884
        %v886 = vrot.slane %v409, 1
        %v887 = vrot.slane %v410, 1
        %v888 = vsel %vm685, %v886, %v887
        %v889 = vrot.slane %v411, 1
        %v890 = vsel %vm685, %v887, %v889
        %v891 = vrot.slane %v412, 1
        %v892 = vrot.slane %v413, 1
        %v893 = vsel %vm685, %v891, %v892
        %v894 = vrot.slane %v414, 1
        %v895 = vsel %vm685, %v892, %v894
        %v896 = vrot.slane %v415, 1
        %v897 = vrot.slane %v416, 1
        %v898 = vsel %vm685, %v896, %v897
        %v899 = vrot.slane %v417, 1
        %v900 = vsel %vm685, %v897, %v899
        %v901 = vrot.slane %v418, 1
        %v902 = vrot.slane %v419, 1
        %v903 = vsel %vm685, %v901, %v902
        %v904 = vrot.slane %v420, 1
        %v905 = vsel %vm685, %v902, %v904
        %v906 = vrot.slane %v421, 1
        %v907 = vrot.slane %v422, 1
        %v908 = vsel %vm685, %v906, %v907
        %v909 = vrot.slane %v423, 1
        %v910 = vsel %vm685, %v907, %v909
        %v911 = vrot.slane %v424, 1
        %v912 = vrot.slane %v425, 1
        %v913 = vsel %vm685, %v911, %v912
        %v914 = vrot.slane %v426, 1
        %v915 = vsel %vm685, %v912, %v914
        %v916 = vrot.slane %v427, 1
        %v917 = vrot.slane %v428, 1
        %v918 = vsel %vm685, %v916, %v917
        %v919 = vrot.slane %v429, 1
        %v920 = vsel %vm685, %v917, %v919
        %v921 = vrot.slane %v430, 1
        %v922 = vrot.slane %v431, 1
        %v923 = vsel %vm685, %v921, %v922
        %v924 = vrot.slane %v432, 1
        %v925 = vsel %vm685, %v922, %v924
        %v926 = vrot.slane %v439, 1
        %v927 = vrot.slane %v440, 1
        %v928 = vsel %vm685, %v926, %v927
        %v929 = vrot.slane %v441, 1
        %v930 = vsel %vm685, %v927, %v929
        %v931 = vrot.slane %v442, 1
        %v932 = vrot.slane %v443, 1
        %v933 = vsel %vm685, %v931, %v932
        %v934 = vrot.slane %v444, 1
        %v935 = vsel %vm685, %v932, %v934
        %v936 = vrot.slane %v445, 1
        %v937 = vrot.slane %v446, 1
        %v938 = vsel %vm685, %v936, %v937
        %v939 = vrot.slane %v447, 1
        %v940 = vsel %vm685, %v937, %v939
        %v941 = vrot.slane %v448, 1
        %v942 = vrot.slane %v449, 1
        %v943 = vsel %vm685, %v941, %v942
        %v944 = vrot.slane %v450, 1
        %v945 = vsel %vm685, %v942, %v944
        %v946 = vrot.slane %v451, 1
        %v947 = vrot.slane %v452, 1
        %v948 = vsel %vm685, %v946, %v947
        %v949 = vrot.slane %v453, 1
        %v950 = vsel %vm685, %v947, %v949
        %v951 = vrot.slane %v454, 1
        %v952 = vrot.slane %v455, 1
        %v953 = vsel %vm685, %v951, %v952
        %v954 = vrot.slane %v456, 1
        %v955 = vsel %vm685, %v952, %v954
        %v956 = vrot.slane %v457, 1
        %v957 = vrot.slane %v458, 1
        %v958 = vsel %vm685, %v956, %v957
        %v959 = vrot.slane %v459, 1
        %v960 = vsel %vm685, %v957, %v959
        %v961 = vrot.slane %v460, 1
        %v962 = vrot.slane %v461, 1
        %v963 = vsel %vm685, %v961, %v962
        %v964 = vrot.slane %v462, 1
        %v965 = vsel %vm685, %v962, %v964
        %v966 = vrot.slane %v463, 1
        %v967 = vrot.slane %v464, 1
        %v968 = vsel %vm685, %v966, %v967
        %v969 = vrot.slane %v465, 1
        %v970 = vsel %vm685, %v967, %v969
        %v971 = vrot.slane %v466, 1
        %v972 = vrot.slane %v467, 1
        %v973 = vsel %vm685, %v971, %v972
        %v974 = vrot.slane %v468, 1
        %v975 = vsel %vm685, %v972, %v974
        %v976 = vrot.slane %v469, 1
        %v977 = vrot.slane %v470, 1
        %v978 = vsel %vm685, %v976, %v977
        %v979 = vrot.slane %v471, 1
        %v980 = vsel %vm685, %v977, %v979
        %v981 = vrot.slane %v472, 1
        %v982 = vrot.slane %v473, 1
        %v983 = vsel %vm685, %v981, %v982
        %v984 = vrot.slane %v474, 1
        %v985 = vsel %vm685, %v982, %v984
        %v986 = vrot.slane %v475, 1
        %v987 = vrot.slane %v476, 1
        %v988 = vsel %vm685, %v986, %v987
        %v989 = vrot.slane %v477, 1
        %v990 = vsel %vm685, %v987, %v989
        %v991 = vrot.slane %v478, 1
        %v992 = vrot.slane %v479, 1
        %v993 = vsel %vm685, %v991, %v992
        %v994 = vrot.slane %v480, 1
        %v995 = vsel %vm685, %v992, %v994
        %v996 = vrot.slane %v481, 1
        %v997 = vrot.slane %v482, 1
        %v998 = vsel %vm685, %v996, %v997
        %v999 = vrot.slane %v483, 1
        %v1000 = vsel %vm685, %v997, %v999
        %v1001 = vrot.slane %v484, 1
        %v1002 = vrot.slane %v485, 1
        %v1003 = vsel %vm685, %v1001, %v1002
        %v1004 = vrot.slane %v486, 1
        %v1005 = vsel %vm685, %v1002, %v1004
        %vm1006 = vcmask 1045504
        %v1007 = vrot.slane %v277, 2
        %v1008 = vrot.slane %v278, 2
        %v1009 = vsel %vm1006, %v1007, %v1008
        %v1010 = vrot.slane %v279, 2
        %v1011 = vsel %vm1006, %v1008, %v1010
        %v1012 = vrot.slane %v280, 2
        %v1013 = vrot.slane %v281, 2
        %v1014 = vsel %vm1006, %v1012, %v1013
        %v1015 = vrot.slane %v282, 2
        %v1016 = vsel %vm1006, %v1013, %v1015
        %v1017 = vrot.slane %v283, 2
        %v1018 = vrot.slane %v284, 2
        %v1019 = vsel %vm1006, %v1017, %v1018
        %v1020 = vrot.slane %v285, 2
        %v1021 = vsel %vm1006, %v1018, %v1020
        %v1022 = vrot.slane %v286, 2
        %v1023 = vrot.slane %v287, 2
        %v1024 = vsel %vm1006, %v1022, %v1023
        %v1025 = vrot.slane %v288, 2
        %v1026 = vsel %vm1006, %v1023, %v1025
        %v1027 = vrot.slane %v289, 2
        %v1028 = vrot.slane %v290, 2
        %v1029 = vsel %vm1006, %v1027, %v1028
        %v1030 = vrot.slane %v291, 2
        %v1031 = vsel %vm1006, %v1028, %v1030
        %v1032 = vrot.slane %v292, 2
        %v1033 = vrot.slane %v293, 2
        %v1034 = vsel %vm1006, %v1032, %v1033
        %v1035 = vrot.slane %v294, 2
        %v1036 = vsel %vm1006, %v1033, %v1035
        %v1037 = vrot.slane %v295, 2
        %v1038 = vrot.slane %v296, 2
        %v1039 = vsel %vm1006, %v1037, %v1038
        %v1040 = vrot.slane %v297, 2
        %v1041 = vsel %vm1006, %v1038, %v1040
        %v1042 = vrot.slane %v298, 2
        %v1043 = vrot.slane %v299, 2
        %v1044 = vsel %vm1006, %v1042, %v1043
        %v1045 = vrot.slane %v300, 2
        %v1046 = vsel %vm1006, %v1043, %v1045
        %v1047 = vrot.slane %v301, 2
        %v1048 = vrot.slane %v302, 2
        %v1049 = vsel %vm1006, %v1047, %v1048
        %v1050 = vrot.slane %v303, 2
        %v1051 = vsel %vm1006, %v1048, %v1050
        %v1052 = vrot.slane %v304, 2
        %v1053 = vrot.slane %v305, 2
        %v1054 = vsel %vm1006, %v1052, %v1053
        %v1055 = vrot.slane %v306, 2
        %v1056 = vsel %vm1006, %v1053, %v1055
        %v1057 = vrot.slane %v307, 2
        %v1058 = vrot.slane %v308, 2
        %v1059 = vsel %vm1006, %v1057, %v1058
        %v1060 = vrot.slane %v309, 2
        %v1061 = vsel %vm1006, %v1058, %v1060
        %v1062 = vrot.slane %v310, 2
        %v1063 = vrot.slane %v311, 2
        %v1064 = vsel %vm1006, %v1062, %v1063
        %v1065 = vrot.slane %v312, 2
        %v1066 = vsel %vm1006, %v1063, %v1065
        %v1067 = vrot.slane %v313, 2
        %v1068 = vrot.slane %v314, 2
        %v1069 = vsel %vm1006, %v1067, %v1068
        %v1070 = vrot.slane %v315, 2
        %v1071 = vsel %vm1006, %v1068, %v1070
        %v1072 = vrot.slane %v316, 2
        %v1073 = vrot.slane %v317, 2
        %v1074 = vsel %vm1006, %v1072, %v1073
        %v1075 = vrot.slane %v318, 2
        %v1076 = vsel %vm1006, %v1073, %v1075
        %v1077 = vrot.slane %v319, 2
        %v1078 = vrot.slane %v320, 2
        %v1079 = vsel %vm1006, %v1077, %v1078
        %v1080 = vrot.slane %v321, 2
        %v1081 = vsel %vm1006, %v1078, %v1080
        %v1082 = vrot.slane %v322, 2
        %v1083 = vrot.slane %v323, 2
        %v1084 = vsel %vm1006, %v1082, %v1083
        %v1085 = vrot.slane %v324, 2
        %v1086 = vsel %vm1006, %v1083, %v1085
        %v1087 = vrot.slane %v331, 2
        %v1088 = vrot.slane %v332, 2
        %v1089 = vsel %vm1006, %v1087, %v1088
        %v1090 = vrot.slane %v333, 2
        %v1091 = vsel %vm1006, %v1088, %v1090
        %v1092 = vrot.slane %v334, 2
        %v1093 = vrot.slane %v335, 2
        %v1094 = vsel %vm1006, %v1092, %v1093
        %v1095 = vrot.slane %v336, 2
        %v1096 = vsel %vm1006, %v1093, %v1095
        %v1097 = vrot.slane %v337, 2
        %v1098 = vrot.slane %v338, 2
        %v1099 = vsel %vm1006, %v1097, %v1098
        %v1100 = vrot.slane %v339, 2
        %v1101 = vsel %vm1006, %v1098, %v1100
        %v1102 = vrot.slane %v340, 2
        %v1103 = vrot.slane %v341, 2
        %v1104 = vsel %vm1006, %v1102, %v1103
        %v1105 = vrot.slane %v342, 2
        %v1106 = vsel %vm1006, %v1103, %v1105
        %v1107 = vrot.slane %v343, 2
        %v1108 = vrot.slane %v344, 2
        %v1109 = vsel %vm1006, %v1107, %v1108
        %v1110 = vrot.slane %v345, 2
        %v1111 = vsel %vm1006, %v1108, %v1110
        %v1112 = vrot.slane %v346, 2
        %v1113 = vrot.slane %v347, 2
        %v1114 = vsel %vm1006, %v1112, %v1113
        %v1115 = vrot.slane %v348, 2
        %v1116 = vsel %vm1006, %v1113, %v1115
        %v1117 = vrot.slane %v349, 2
        %v1118 = vrot.slane %v350, 2
        %v1119 = vsel %vm1006, %v1117, %v1118
        %v1120 = vrot.slane %v351, 2
        %v1121 = vsel %vm1006, %v1118, %v1120
        %v1122 = vrot.slane %v352, 2
        %v1123 = vrot.slane %v353, 2
        %v1124 = vsel %vm1006, %v1122, %v1123
        %v1125 = vrot.slane %v354, 2
        %v1126 = vsel %vm1006, %v1123, %v1125
        %v1127 = vrot.slane %v355, 2
        %v1128 = vrot.slane %v356, 2
        %v1129 = vsel %vm1006, %v1127, %v1128
        %v1130 = vrot.slane %v357, 2
        %v1131 = vsel %vm1006, %v1128, %v1130
        %v1132 = vrot.slane %v358, 2
        %v1133 = vrot.slane %v359, 2
        %v1134 = vsel %vm1006, %v1132, %v1133
        %v1135 = vrot.slane %v360, 2
        %v1136 = vsel %vm1006, %v1133, %v1135
        %v1137 = vrot.slane %v361, 2
        %v1138 = vrot.slane %v362, 2
        %v1139 = vsel %vm1006, %v1137, %v1138
        %v1140 = vrot.slane %v363, 2
        %v1141 = vsel %vm1006, %v1138, %v1140
        %v1142 = vrot.slane %v364, 2
        %v1143 = vrot.slane %v365, 2
        %v1144 = vsel %vm1006, %v1142, %v1143
        %v1145 = vrot.slane %v366, 2
        %v1146 = vsel %vm1006, %v1143, %v1145
        %v1147 = vrot.slane %v367, 2
        %v1148 = vrot.slane %v368, 2
        %v1149 = vsel %vm1006, %v1147, %v1148
        %v1150 = vrot.slane %v369, 2
        %v1151 = vsel %vm1006, %v1148, %v1150
        %v1152 = vrot.slane %v370, 2
        %v1153 = vrot.slane %v371, 2
        %v1154 = vsel %vm1006, %v1152, %v1153
        %v1155 = vrot.slane %v372, 2
        %v1156 = vsel %vm1006, %v1153, %v1155
        %v1157 = vrot.slane %v373, 2
        %v1158 = vrot.slane %v374, 2
        %v1159 = vsel %vm1006, %v1157, %v1158
        %v1160 = vrot.slane %v375, 2
        %v1161 = vsel %vm1006, %v1158, %v1160
        %v1162 = vrot.slane %v376, 2
        %v1163 = vrot.slane %v377, 2
        %v1164 = vsel %vm1006, %v1162, %v1163
        %v1165 = vrot.slane %v378, 2
        %v1166 = vsel %vm1006, %v1163, %v1165
        %v1167 = vrot.slane %v385, 2
        %v1168 = vrot.slane %v386, 2
        %v1169 = vsel %vm1006, %v1167, %v1168
        %v1170 = vrot.slane %v387, 2
        %v1171 = vsel %vm1006, %v1168, %v1170
        %v1172 = vrot.slane %v388, 2
        %v1173 = vrot.slane %v389, 2
        %v1174 = vsel %vm1006, %v1172, %v1173
        %v1175 = vrot.slane %v390, 2
        %v1176 = vsel %vm1006, %v1173, %v1175
        %v1177 = vrot.slane %v391, 2
        %v1178 = vrot.slane %v392, 2
        %v1179 = vsel %vm1006, %v1177, %v1178
        %v1180 = vrot.slane %v393, 2
        %v1181 = vsel %vm1006, %v1178, %v1180
        %v1182 = vrot.slane %v394, 2
        %v1183 = vrot.slane %v395, 2
        %v1184 = vsel %vm1006, %v1182, %v1183
        %v1185 = vrot.slane %v396, 2
        %v1186 = vsel %vm1006, %v1183, %v1185
        %v1187 = vrot.slane %v397, 2
        %v1188 = vrot.slane %v398, 2
        %v1189 = vsel %vm1006, %v1187, %v1188
        %v1190 = vrot.slane %v399, 2
        %v1191 = vsel %vm1006, %v1188, %v1190
        %v1192 = vrot.slane %v400, 2
        %v1193 = vrot.slane %v401, 2
        %v1194 = vsel %vm1006, %v1192, %v1193
        %v1195 = vrot.slane %v402, 2
        %v1196 = vsel %vm1006, %v1193, %v1195
        %v1197 = vrot.slane %v403, 2
        %v1198 = vrot.slane %v404, 2
        %v1199 = vsel %vm1006, %v1197, %v1198
        %v1200 = vrot.slane %v405, 2
        %v1201 = vsel %vm1006, %v1198, %v1200
        %v1202 = vrot.slane %v406, 2
        %v1203 = vrot.slane %v407, 2
        %v1204 = vsel %vm1006, %v1202, %v1203
        %v1205 = vrot.slane %v408, 2
        %v1206 = vsel %vm1006, %v1203, %v1205
        %v1207 = vrot.slane %v409, 2
        %v1208 = vrot.slane %v410, 2
        %v1209 = vsel %vm1006, %v1207, %v1208
        %v1210 = vrot.slane %v411, 2
        %v1211 = vsel %vm1006, %v1208, %v1210
        %v1212 = vrot.slane %v412, 2
        %v1213 = vrot.slane %v413, 2
        %v1214 = vsel %vm1006, %v1212, %v1213
        %v1215 = vrot.slane %v414, 2
        %v1216 = vsel %vm1006, %v1213, %v1215
        %v1217 = vrot.slane %v415, 2
        %v1218 = vrot.slane %v416, 2
        %v1219 = vsel %vm1006, %v1217, %v1218
        %v1220 = vrot.slane %v417, 2
        %v1221 = vsel %vm1006, %v1218, %v1220
        %v1222 = vrot.slane %v418, 2
        %v1223 = vrot.slane %v419, 2
        %v1224 = vsel %vm1006, %v1222, %v1223
        %v1225 = vrot.slane %v420, 2
        %v1226 = vsel %vm1006, %v1223, %v1225
        %v1227 = vrot.slane %v421, 2
        %v1228 = vrot.slane %v422, 2
        %v1229 = vsel %vm1006, %v1227, %v1228
        %v1230 = vrot.slane %v423, 2
        %v1231 = vsel %vm1006, %v1228, %v1230
        %v1232 = vrot.slane %v424, 2
        %v1233 = vrot.slane %v425, 2
        %v1234 = vsel %vm1006, %v1232, %v1233
        %v1235 = vrot.slane %v426, 2
        %v1236 = vsel %vm1006, %v1233, %v1235
        %v1237 = vrot.slane %v427, 2
        %v1238 = vrot.slane %v428, 2
        %v1239 = vsel %vm1006, %v1237, %v1238
        %v1240 = vrot.slane %v429, 2
        %v1241 = vsel %vm1006, %v1238, %v1240
        %v1242 = vrot.slane %v430, 2
        %v1243 = vrot.slane %v431, 2
        %v1244 = vsel %vm1006, %v1242, %v1243
        %v1245 = vrot.slane %v432, 2
        %v1246 = vsel %vm1006, %v1243, %v1245
        %v1247 = vrot.slane %v439, 2
        %v1248 = vrot.slane %v440, 2
        %v1249 = vsel %vm1006, %v1247, %v1248
        %v1250 = vrot.slane %v441, 2
        %v1251 = vsel %vm1006, %v1248, %v1250
        %v1252 = vrot.slane %v442, 2
        %v1253 = vrot.slane %v443, 2
        %v1254 = vsel %vm1006, %v1252, %v1253
        %v1255 = vrot.slane %v444, 2
        %v1256 = vsel %vm1006, %v1253, %v1255
        %v1257 = vrot.slane %v445, 2
        %v1258 = vrot.slane %v446, 2
        %v1259 = vsel %vm1006, %v1257, %v1258
        %v1260 = vrot.slane %v447, 2
        %v1261 = vsel %vm1006, %v1258, %v1260
        %v1262 = vrot.slane %v448, 2
        %v1263 = vrot.slane %v449, 2
        %v1264 = vsel %vm1006, %v1262, %v1263
        %v1265 = vrot.slane %v450, 2
        %v1266 = vsel %vm1006, %v1263, %v1265
        %v1267 = vrot.slane %v451, 2
        %v1268 = vrot.slane %v452, 2
        %v1269 = vsel %vm1006, %v1267, %v1268
        %v1270 = vrot.slane %v453, 2
        %v1271 = vsel %vm1006, %v1268, %v1270
        %v1272 = vrot.slane %v454, 2
        %v1273 = vrot.slane %v455, 2
        %v1274 = vsel %vm1006, %v1272, %v1273
        %v1275 = vrot.slane %v456, 2
        %v1276 = vsel %vm1006, %v1273, %v1275
        %v1277 = vrot.slane %v457, 2
        %v1278 = vrot.slane %v458, 2
        %v1279 = vsel %vm1006, %v1277, %v1278
        %v1280 = vrot.slane %v459, 2
        %v1281 = vsel %vm1006, %v1278, %v1280
        %v1282 = vrot.slane %v460, 2
        %v1283 = vrot.slane %v461, 2
        %v1284 = vsel %vm1006, %v1282, %v1283
        %v1285 = vrot.slane %v462, 2
        %v1286 = vsel %vm1006, %v1283, %v1285
        %v1287 = vrot.slane %v463, 2
        %v1288 = vrot.slane %v464, 2
        %v1289 = vsel %vm1006, %v1287, %v1288
        %v1290 = vrot.slane %v465, 2
        %v1291 = vsel %vm1006, %v1288, %v1290
        %v1292 = vrot.slane %v466, 2
        %v1293 = vrot.slane %v467, 2
        %v1294 = vsel %vm1006, %v1292, %v1293
        %v1295 = vrot.slane %v468, 2
        %v1296 = vsel %vm1006, %v1293, %v1295
        %v1297 = vrot.slane %v469, 2
        %v1298 = vrot.slane %v470, 2
        %v1299 = vsel %vm1006, %v1297, %v1298
        %v1300 = vrot.slane %v471, 2
        %v1301 = vsel %vm1006, %v1298, %v1300
        %v1302 = vrot.slane %v472, 2
        %v1303 = vrot.slane %v473, 2
        %v1304 = vsel %vm1006, %v1302, %v1303
        %v1305 = vrot.slane %v474, 2
        %v1306 = vsel %vm1006, %v1303, %v1305
        %v1307 = vrot.slane %v475, 2
        %v1308 = vrot.slane %v476, 2
        %v1309 = vsel %vm1006, %v1307, %v1308
        %v1310 = vrot.slane %v477, 2
        %v1311 = vsel %vm1006, %v1308, %v1310
        %v1312 = vrot.slane %v478, 2
        %v1313 = vrot.slane %v479, 2
        %v1314 = vsel %vm1006, %v1312, %v1313
        %v1315 = vrot.slane %v480, 2
        %v1316 = vsel %vm1006, %v1313, %v1315
        %v1317 = vrot.slane %v481, 2
        %v1318 = vrot.slane %v482, 2
        %v1319 = vsel %vm1006, %v1317, %v1318
        %v1320 = vrot.slane %v483, 2
        %v1321 = vsel %vm1006, %v1318, %v1320
        %v1322 = vrot.slane %v484, 2
        %v1323 = vrot.slane %v485, 2
        %v1324 = vsel %vm1006, %v1322, %v1323
        %v1325 = vrot.slane %v486, 2
        %v1326 = vsel %vm1006, %v1323, %v1325
        %v1339 = vrot.slane %v325, 1
        %v1340 = vrot.slane %v326, 1
        %v1341 = vsel %vm685, %v1339, %v1340
        %v1342 = vrot.slane %v327, 1
        %v1343 = vsel %vm685, %v1340, %v1342
        %v1344 = vrot.slane %v379, 1
        %v1345 = vrot.slane %v380, 1
        %v1346 = vsel %vm685, %v1344, %v1345
        %v1347 = vrot.slane %v381, 1
        %v1348 = vsel %vm685, %v1345, %v1347
        %v1349 = vrot.slane %v433, 1
        %v1350 = vrot.slane %v434, 1
        %v1351 = vsel %vm685, %v1349, %v1350
        %v1352 = vrot.slane %v435, 1
        %v1353 = vsel %vm685, %v1350, %v1352
        %v1354 = vrot.slane %v487, 1
        %v1355 = vrot.slane %v488, 1
        %v1356 = vsel %vm685, %v1354, %v1355
        %v1357 = vrot.slane %v489, 1
        %v1358 = vsel %vm685, %v1355, %v1357
        %v1359 = vrot.slane %v325, 2
        %v1360 = vrot.slane %v326, 2
        %v1361 = vsel %vm1006, %v1359, %v1360
        %v1362 = vrot.slane %v327, 2
        %v1363 = vsel %vm1006, %v1360, %v1362
        %v1364 = vrot.slane %v379, 2
        %v1365 = vrot.slane %v380, 2
        %v1366 = vsel %vm1006, %v1364, %v1365
        %v1367 = vrot.slane %v381, 2
        %v1368 = vsel %vm1006, %v1365, %v1367
        %v1369 = vrot.slane %v433, 2
        %v1370 = vrot.slane %v434, 2
        %v1371 = vsel %vm1006, %v1369, %v1370
        %v1372 = vrot.slane %v435, 2
        %v1373 = vsel %vm1006, %v1370, %v1372
        %v1374 = vrot.slane %v487, 2
        %v1375 = vrot.slane %v488, 2
        %v1376 = vsel %vm1006, %v1374, %v1375
        %v1377 = vrot.slane %v489, 2
        %v1378 = vsel %vm1006, %v1375, %v1377
        %v1391 = vrot.slane %v328, 1
        %v1392 = vrot.slane %v329, 1
        %v1393 = vsel %vm685, %v1391, %v1392
        %v1394 = vrot.slane %v330, 1
        %v1395 = vsel %vm685, %v1392, %v1394
        %v1396 = vrot.slane %v382, 1
        %v1397 = vrot.slane %v383, 1
        %v1398 = vsel %vm685, %v1396, %v1397
        %v1399 = vrot.slane %v384, 1
        %v1400 = vsel %vm685, %v1397, %v1399
        %v1401 = vrot.slane %v436, 1
        %v1402 = vrot.slane %v437, 1
        %v1403 = vsel %vm685, %v1401, %v1402
        %v1404 = vrot.slane %v438, 1
        %v1405 = vsel %vm685, %v1402, %v1404
        %v1406 = vrot.slane %v490, 1
        %v1407 = vrot.slane %v491, 1
        %v1408 = vsel %vm685, %v1406, %v1407
        %v1409 = vrot.slane %v492, 1
        %v1410 = vsel %vm685, %v1407, %v1409
        %v1411 = vrot.slane %v328, 2
        %v1412 = vrot.slane %v329, 2
        %v1413 = vsel %vm1006, %v1411, %v1412
        %v1414 = vrot.slane %v330, 2
        %v1415 = vsel %vm1006, %v1412, %v1414
        %v1416 = vrot.slane %v382, 2
        %v1417 = vrot.slane %v383, 2
        %v1418 = vsel %vm1006, %v1416, %v1417
        %v1419 = vrot.slane %v384, 2
        %v1420 = vsel %vm1006, %v1417, %v1419
        %v1421 = vrot.slane %v436, 2
        %v1422 = vrot.slane %v437, 2
        %v1423 = vsel %vm1006, %v1421, %v1422
        %v1424 = vrot.slane %v438, 2
        %v1425 = vsel %vm1006, %v1422, %v1424
        %v1426 = vrot.slane %v490, 2
        %v1427 = vrot.slane %v491, 2
        %v1428 = vsel %vm1006, %v1426, %v1427
        %v1429 = vrot.slane %v492, 2
        %v1430 = vsel %vm1006, %v1427, %v1429
        %1431 = vrot.lane.b32.xlu0 %v688, 3
        %v1432 = vpop.permute.xlu0 %1431
        %1433 = vrot.lane.b32.xlu0 %v690, 3
        %v1434 = vpop.permute.xlu0 %1433
        %1435 = vrot.lane.b32.xlu0 %v693, 3
        %v1436 = vpop.permute.xlu0 %1435
        %1437 = vrot.lane.b32.xlu0 %v695, 3
        %v1438 = vpop.permute.xlu0 %1437
        %1439 = vrot.lane.b32.xlu0 %v698, 3
        %v1440 = vpop.permute.xlu0 %1439
        %1441 = vrot.lane.b32.xlu0 %v700, 3
        %v1442 = vpop.permute.xlu0 %1441
        %1443 = vrot.lane.b32.xlu0 %v703, 3
        %v1444 = vpop.permute.xlu0 %1443
        %1445 = vrot.lane.b32.xlu0 %v705, 3
        %v1446 = vpop.permute.xlu0 %1445
        %1447 = vrot.lane.b32.xlu0 %v708, 3
        %v1448 = vpop.permute.xlu0 %1447
        %1449 = vrot.lane.b32.xlu0 %v710, 3
        %v1450 = vpop.permute.xlu0 %1449
        %1451 = vrot.lane.b32.xlu0 %v713, 3
        %v1452 = vpop.permute.xlu0 %1451
        %1453 = vrot.lane.b32.xlu0 %v715, 3
        %v1454 = vpop.permute.xlu0 %1453
        %1455 = vrot.lane.b32.xlu0 %v718, 3
        %v1456 = vpop.permute.xlu0 %1455
        %1457 = vrot.lane.b32.xlu0 %v720, 3
        %v1458 = vpop.permute.xlu0 %1457
        %1459 = vrot.lane.b32.xlu0 %v723, 3
        %v1460 = vpop.permute.xlu0 %1459
        %1461 = vrot.lane.b32.xlu0 %v725, 3
        %v1462 = vpop.permute.xlu0 %1461
        %1463 = vrot.lane.b32.xlu0 %v728, 3
        %v1464 = vpop.permute.xlu0 %1463
        %1465 = vrot.lane.b32.xlu0 %v730, 3
        %v1466 = vpop.permute.xlu0 %1465
        %1467 = vrot.lane.b32.xlu0 %v733, 3
        %v1468 = vpop.permute.xlu0 %1467
        %1469 = vrot.lane.b32.xlu0 %v735, 3
        %v1470 = vpop.permute.xlu0 %1469
        %1471 = vrot.lane.b32.xlu0 %v738, 3
        %v1472 = vpop.permute.xlu0 %1471
        %1473 = vrot.lane.b32.xlu0 %v740, 3
        %v1474 = vpop.permute.xlu0 %1473
        %1475 = vrot.lane.b32.xlu0 %v743, 3
        %v1476 = vpop.permute.xlu0 %1475
        %1477 = vrot.lane.b32.xlu0 %v745, 3
        %v1478 = vpop.permute.xlu0 %1477
        %1479 = vrot.lane.b32.xlu0 %v748, 3
        %v1480 = vpop.permute.xlu0 %1479
        %1481 = vrot.lane.b32.xlu0 %v750, 3
        %v1482 = vpop.permute.xlu0 %1481
        %1483 = vrot.lane.b32.xlu0 %v753, 3
        %v1484 = vpop.permute.xlu0 %1483
        %1485 = vrot.lane.b32.xlu0 %v755, 3
        %v1486 = vpop.permute.xlu0 %1485
        %1487 = vrot.lane.b32.xlu0 %v758, 3
        %v1488 = vpop.permute.xlu0 %1487
        %1489 = vrot.lane.b32.xlu0 %v760, 3
        %v1490 = vpop.permute.xlu0 %1489
        %1491 = vrot.lane.b32.xlu0 %v763, 3
        %v1492 = vpop.permute.xlu0 %1491
        %1493 = vrot.lane.b32.xlu0 %v765, 3
        %v1494 = vpop.permute.xlu0 %1493
        %1495 = vrot.lane.b32.xlu0 %v768, 3
        %v1496 = vpop.permute.xlu0 %1495
        %1497 = vrot.lane.b32.xlu0 %v770, 3
        %v1498 = vpop.permute.xlu0 %1497
        %1499 = vrot.lane.b32.xlu0 %v773, 3
        %v1500 = vpop.permute.xlu0 %1499
        %1501 = vrot.lane.b32.xlu0 %v775, 3
        %v1502 = vpop.permute.xlu0 %1501
        %1503 = vrot.lane.b32.xlu0 %v778, 3
        %v1504 = vpop.permute.xlu0 %1503
        %1505 = vrot.lane.b32.xlu0 %v780, 3
        %v1506 = vpop.permute.xlu0 %1505
        %1507 = vrot.lane.b32.xlu0 %v783, 3
        %v1508 = vpop.permute.xlu0 %1507
        %1509 = vrot.lane.b32.xlu0 %v785, 3
        %v1510 = vpop.permute.xlu0 %1509
        %1511 = vrot.lane.b32.xlu0 %v788, 3
        %v1512 = vpop.permute.xlu0 %1511
        %1513 = vrot.lane.b32.xlu0 %v790, 3
        %v1514 = vpop.permute.xlu0 %1513
        %1515 = vrot.lane.b32.xlu0 %v793, 3
        %v1516 = vpop.permute.xlu0 %1515
        %1517 = vrot.lane.b32.xlu0 %v795, 3
        %v1518 = vpop.permute.xlu0 %1517
        %1519 = vrot.lane.b32.xlu0 %v798, 3
        %v1520 = vpop.permute.xlu0 %1519
        %1521 = vrot.lane.b32.xlu0 %v800, 3
        %v1522 = vpop.permute.xlu0 %1521
        %1523 = vrot.lane.b32.xlu0 %v803, 3
        %v1524 = vpop.permute.xlu0 %1523
        %1525 = vrot.lane.b32.xlu0 %v805, 3
        %v1526 = vpop.permute.xlu0 %1525
        %1527 = vrot.lane.b32.xlu0 %v808, 3
        %v1528 = vpop.permute.xlu0 %1527
        %1529 = vrot.lane.b32.xlu0 %v810, 3
        %v1530 = vpop.permute.xlu0 %1529
        %1531 = vrot.lane.b32.xlu0 %v813, 3
        %v1532 = vpop.permute.xlu0 %1531
        %1533 = vrot.lane.b32.xlu0 %v815, 3
        %v1534 = vpop.permute.xlu0 %1533
        %1535 = vrot.lane.b32.xlu0 %v818, 3
        %v1536 = vpop.permute.xlu0 %1535
        %1537 = vrot.lane.b32.xlu0 %v820, 3
        %v1538 = vpop.permute.xlu0 %1537
        %1539 = vrot.lane.b32.xlu0 %v823, 3
        %v1540 = vpop.permute.xlu0 %1539
        %1541 = vrot.lane.b32.xlu0 %v825, 3
        %v1542 = vpop.permute.xlu0 %1541
        %1543 = vrot.lane.b32.xlu0 %v828, 3
        %v1544 = vpop.permute.xlu0 %1543
        %1545 = vrot.lane.b32.xlu0 %v830, 3
        %v1546 = vpop.permute.xlu0 %1545
        %1547 = vrot.lane.b32.xlu0 %v833, 3
        %v1548 = vpop.permute.xlu0 %1547
        %1549 = vrot.lane.b32.xlu0 %v835, 3
        %v1550 = vpop.permute.xlu0 %1549
        %1551 = vrot.lane.b32.xlu0 %v838, 3
        %v1552 = vpop.permute.xlu0 %1551
        %1553 = vrot.lane.b32.xlu0 %v840, 3
        %v1554 = vpop.permute.xlu0 %1553
        %1555 = vrot.lane.b32.xlu0 %v843, 3
        %v1556 = vpop.permute.xlu0 %1555
        %1557 = vrot.lane.b32.xlu0 %v845, 3
        %v1558 = vpop.permute.xlu0 %1557
        %1559 = vrot.lane.b32.xlu0 %v848, 3
        %v1560 = vpop.permute.xlu0 %1559
        %1561 = vrot.lane.b32.xlu0 %v850, 3
        %v1562 = vpop.permute.xlu0 %1561
        %1563 = vrot.lane.b32.xlu0 %v853, 3
        %v1564 = vpop.permute.xlu0 %1563
        %1565 = vrot.lane.b32.xlu0 %v855, 3
        %v1566 = vpop.permute.xlu0 %1565
        %1567 = vrot.lane.b32.xlu0 %v858, 3
        %v1568 = vpop.permute.xlu0 %1567
        %1569 = vrot.lane.b32.xlu0 %v860, 3
        %v1570 = vpop.permute.xlu0 %1569
        %1571 = vrot.lane.b32.xlu0 %v863, 3
        %v1572 = vpop.permute.xlu0 %1571
        %1573 = vrot.lane.b32.xlu0 %v865, 3
        %v1574 = vpop.permute.xlu0 %1573
        %1575 = vrot.lane.b32.xlu0 %v868, 3
        %v1576 = vpop.permute.xlu0 %1575
        %1577 = vrot.lane.b32.xlu0 %v870, 3
        %v1578 = vpop.permute.xlu0 %1577
        %1579 = vrot.lane.b32.xlu0 %v873, 3
        %v1580 = vpop.permute.xlu0 %1579
        %1581 = vrot.lane.b32.xlu0 %v875, 3
        %v1582 = vpop.permute.xlu0 %1581
        %1583 = vrot.lane.b32.xlu0 %v878, 3
        %v1584 = vpop.permute.xlu0 %1583
        %1585 = vrot.lane.b32.xlu0 %v880, 3
        %v1586 = vpop.permute.xlu0 %1585
        %1587 = vrot.lane.b32.xlu0 %v883, 3
        %v1588 = vpop.permute.xlu0 %1587
        %1589 = vrot.lane.b32.xlu0 %v885, 3
        %v1590 = vpop.permute.xlu0 %1589
        %1591 = vrot.lane.b32.xlu0 %v888, 3
        %v1592 = vpop.permute.xlu0 %1591
        %1593 = vrot.lane.b32.xlu0 %v890, 3
        %v1594 = vpop.permute.xlu0 %1593
        %1595 = vrot.lane.b32.xlu0 %v893, 3
        %v1596 = vpop.permute.xlu0 %1595
        %1597 = vrot.lane.b32.xlu0 %v895, 3
        %v1598 = vpop.permute.xlu0 %1597
        %1599 = vrot.lane.b32.xlu0 %v898, 3
        %v1600 = vpop.permute.xlu0 %1599
        %1601 = vrot.lane.b32.xlu0 %v900, 3
        %v1602 = vpop.permute.xlu0 %1601
        %1603 = vrot.lane.b32.xlu0 %v903, 3
        %v1604 = vpop.permute.xlu0 %1603
        %1605 = vrot.lane.b32.xlu0 %v905, 3
        %v1606 = vpop.permute.xlu0 %1605
        %1607 = vrot.lane.b32.xlu0 %v908, 3
        %v1608 = vpop.permute.xlu0 %1607
        %1609 = vrot.lane.b32.xlu0 %v910, 3
        %v1610 = vpop.permute.xlu0 %1609
        %1611 = vrot.lane.b32.xlu0 %v913, 3
        %v1612 = vpop.permute.xlu0 %1611
        %1613 = vrot.lane.b32.xlu0 %v915, 3
        %v1614 = vpop.permute.xlu0 %1613
        %1615 = vrot.lane.b32.xlu0 %v918, 3
        %v1616 = vpop.permute.xlu0 %1615
        %1617 = vrot.lane.b32.xlu0 %v920, 3
        %v1618 = vpop.permute.xlu0 %1617
        %1619 = vrot.lane.b32.xlu0 %v923, 3
        %v1620 = vpop.permute.xlu0 %1619
        %1621 = vrot.lane.b32.xlu0 %v925, 3
        %v1622 = vpop.permute.xlu0 %1621
        %1623 = vrot.lane.b32.xlu0 %v928, 3
        %v1624 = vpop.permute.xlu0 %1623
        %1625 = vrot.lane.b32.xlu0 %v930, 3
        %v1626 = vpop.permute.xlu0 %1625
        %1627 = vrot.lane.b32.xlu0 %v933, 3
        %v1628 = vpop.permute.xlu0 %1627
        %1629 = vrot.lane.b32.xlu0 %v935, 3
        %v1630 = vpop.permute.xlu0 %1629
        %1631 = vrot.lane.b32.xlu0 %v938, 3
        %v1632 = vpop.permute.xlu0 %1631
        %1633 = vrot.lane.b32.xlu0 %v940, 3
        %v1634 = vpop.permute.xlu0 %1633
        %1635 = vrot.lane.b32.xlu0 %v943, 3
        %v1636 = vpop.permute.xlu0 %1635
        %1637 = vrot.lane.b32.xlu0 %v945, 3
        %v1638 = vpop.permute.xlu0 %1637
        %1639 = vrot.lane.b32.xlu0 %v948, 3
        %v1640 = vpop.permute.xlu0 %1639
        %1641 = vrot.lane.b32.xlu0 %v950, 3
        %v1642 = vpop.permute.xlu0 %1641
        %1643 = vrot.lane.b32.xlu0 %v953, 3
        %v1644 = vpop.permute.xlu0 %1643
        %1645 = vrot.lane.b32.xlu0 %v955, 3
        %v1646 = vpop.permute.xlu0 %1645
        %1647 = vrot.lane.b32.xlu0 %v958, 3
        %v1648 = vpop.permute.xlu0 %1647
        %1649 = vrot.lane.b32.xlu0 %v960, 3
        %v1650 = vpop.permute.xlu0 %1649
        %1651 = vrot.lane.b32.xlu0 %v963, 3
        %v1652 = vpop.permute.xlu0 %1651
        %1653 = vrot.lane.b32.xlu0 %v965, 3
        %v1654 = vpop.permute.xlu0 %1653
        %1655 = vrot.lane.b32.xlu0 %v968, 3
        %v1656 = vpop.permute.xlu0 %1655
        %1657 = vrot.lane.b32.xlu0 %v970, 3
        %v1658 = vpop.permute.xlu0 %1657
        %1659 = vrot.lane.b32.xlu0 %v973, 3
        %v1660 = vpop.permute.xlu0 %1659
        %1661 = vrot.lane.b32.xlu0 %v975, 3
        %v1662 = vpop.permute.xlu0 %1661
        %1663 = vrot.lane.b32.xlu0 %v978, 3
        %v1664 = vpop.permute.xlu0 %1663
        %1665 = vrot.lane.b32.xlu0 %v980, 3
        %v1666 = vpop.permute.xlu0 %1665
        %1667 = vrot.lane.b32.xlu0 %v983, 3
        %v1668 = vpop.permute.xlu0 %1667
        %1669 = vrot.lane.b32.xlu0 %v985, 3
        %v1670 = vpop.permute.xlu0 %1669
        %1671 = vrot.lane.b32.xlu0 %v988, 3
        %v1672 = vpop.permute.xlu0 %1671
        %1673 = vrot.lane.b32.xlu0 %v990, 3
        %v1674 = vpop.permute.xlu0 %1673
        %1675 = vrot.lane.b32.xlu0 %v993, 3
        %v1676 = vpop.permute.xlu0 %1675
        %1677 = vrot.lane.b32.xlu0 %v995, 3
        %v1678 = vpop.permute.xlu0 %1677
        %1679 = vrot.lane.b32.xlu0 %v998, 3
        %v1680 = vpop.permute.xlu0 %1679
        %1681 = vrot.lane.b32.xlu0 %v1000, 3
        %v1682 = vpop.permute.xlu0 %1681
        %1683 = vrot.lane.b32.xlu0 %v1003, 3
        %v1684 = vpop.permute.xlu0 %1683
        %1685 = vrot.lane.b32.xlu0 %v1005, 3
        %v1686 = vpop.permute.xlu0 %1685
        %1815 = vrot.lane.b32.xlu0 %v1009, 6
        %v1816 = vpop.permute.xlu0 %1815
        %1817 = vrot.lane.b32.xlu0 %v1011, 6
        %v1818 = vpop.permute.xlu0 %1817
        %1819 = vrot.lane.b32.xlu0 %v1014, 6
        %v1820 = vpop.permute.xlu0 %1819
        %1821 = vrot.lane.b32.xlu0 %v1016, 6
        %v1822 = vpop.permute.xlu0 %1821
        %1823 = vrot.lane.b32.xlu0 %v1019, 6
        %v1824 = vpop.permute.xlu0 %1823
        %1825 = vrot.lane.b32.xlu0 %v1021, 6
        %v1826 = vpop.permute.xlu0 %1825
        %1827 = vrot.lane.b32.xlu0 %v1024, 6
        %v1828 = vpop.permute.xlu0 %1827
        %1829 = vrot.lane.b32.xlu0 %v1026, 6
        %v1830 = vpop.permute.xlu0 %1829
        %1831 = vrot.lane.b32.xlu0 %v1029, 6
        %v1832 = vpop.permute.xlu0 %1831
        %1833 = vrot.lane.b32.xlu0 %v1031, 6
        %v1834 = vpop.permute.xlu0 %1833
        %1835 = vrot.lane.b32.xlu0 %v1034, 6
        %v1836 = vpop.permute.xlu0 %1835
        %1837 = vrot.lane.b32.xlu0 %v1036, 6
        %v1838 = vpop.permute.xlu0 %1837
        %1839 = vrot.lane.b32.xlu0 %v1039, 6
        %v1840 = vpop.permute.xlu0 %1839
        %1841 = vrot.lane.b32.xlu0 %v1041, 6
        %v1842 = vpop.permute.xlu0 %1841
        %1843 = vrot.lane.b32.xlu0 %v1044, 6
        %v1844 = vpop.permute.xlu0 %1843
        %1845 = vrot.lane.b32.xlu0 %v1046, 6
        %v1846 = vpop.permute.xlu0 %1845
        %1847 = vrot.lane.b32.xlu0 %v1049, 6
        %v1848 = vpop.permute.xlu0 %1847
        %1849 = vrot.lane.b32.xlu0 %v1051, 6
        %v1850 = vpop.permute.xlu0 %1849
        %1851 = vrot.lane.b32.xlu0 %v1054, 6
        %v1852 = vpop.permute.xlu0 %1851
        %1853 = vrot.lane.b32.xlu0 %v1056, 6
        %v1854 = vpop.permute.xlu0 %1853
        %1855 = vrot.lane.b32.xlu0 %v1059, 6
        %v1856 = vpop.permute.xlu0 %1855
        %1857 = vrot.lane.b32.xlu0 %v1061, 6
        %v1858 = vpop.permute.xlu0 %1857
        %1859 = vrot.lane.b32.xlu0 %v1064, 6
        %v1860 = vpop.permute.xlu0 %1859
        %1861 = vrot.lane.b32.xlu0 %v1066, 6
        %v1862 = vpop.permute.xlu0 %1861
        %1863 = vrot.lane.b32.xlu0 %v1069, 6
        %v1864 = vpop.permute.xlu0 %1863
        %1865 = vrot.lane.b32.xlu0 %v1071, 6
        %v1866 = vpop.permute.xlu0 %1865
        %1867 = vrot.lane.b32.xlu0 %v1074, 6
        %v1868 = vpop.permute.xlu0 %1867
        %1869 = vrot.lane.b32.xlu0 %v1076, 6
        %v1870 = vpop.permute.xlu0 %1869
        %1871 = vrot.lane.b32.xlu0 %v1079, 6
        %v1872 = vpop.permute.xlu0 %1871
        %1873 = vrot.lane.b32.xlu0 %v1081, 6
        %v1874 = vpop.permute.xlu0 %1873
        %1875 = vrot.lane.b32.xlu0 %v1084, 6
        %v1876 = vpop.permute.xlu0 %1875
        %1877 = vrot.lane.b32.xlu0 %v1086, 6
        %v1878 = vpop.permute.xlu0 %1877
        %1879 = vrot.lane.b32.xlu0 %v1089, 6
        %v1880 = vpop.permute.xlu0 %1879
        %1881 = vrot.lane.b32.xlu0 %v1091, 6
        %v1882 = vpop.permute.xlu0 %1881
        %1883 = vrot.lane.b32.xlu0 %v1094, 6
        %v1884 = vpop.permute.xlu0 %1883
        %1885 = vrot.lane.b32.xlu0 %v1096, 6
        %v1886 = vpop.permute.xlu0 %1885
        %1887 = vrot.lane.b32.xlu0 %v1099, 6
        %v1888 = vpop.permute.xlu0 %1887
        %1889 = vrot.lane.b32.xlu0 %v1101, 6
        %v1890 = vpop.permute.xlu0 %1889
        %1891 = vrot.lane.b32.xlu0 %v1104, 6
        %v1892 = vpop.permute.xlu0 %1891
        %1893 = vrot.lane.b32.xlu0 %v1106, 6
        %v1894 = vpop.permute.xlu0 %1893
        %1895 = vrot.lane.b32.xlu0 %v1109, 6
        %v1896 = vpop.permute.xlu0 %1895
        %1897 = vrot.lane.b32.xlu0 %v1111, 6
        %v1898 = vpop.permute.xlu0 %1897
        %1899 = vrot.lane.b32.xlu0 %v1114, 6
        %v1900 = vpop.permute.xlu0 %1899
        %1901 = vrot.lane.b32.xlu0 %v1116, 6
        %v1902 = vpop.permute.xlu0 %1901
        %1903 = vrot.lane.b32.xlu0 %v1119, 6
        %v1904 = vpop.permute.xlu0 %1903
        %1905 = vrot.lane.b32.xlu0 %v1121, 6
        %v1906 = vpop.permute.xlu0 %1905
        %1907 = vrot.lane.b32.xlu0 %v1124, 6
        %v1908 = vpop.permute.xlu0 %1907
        %1909 = vrot.lane.b32.xlu0 %v1126, 6
        %v1910 = vpop.permute.xlu0 %1909
        %1911 = vrot.lane.b32.xlu0 %v1129, 6
        %v1912 = vpop.permute.xlu0 %1911
        %1913 = vrot.lane.b32.xlu0 %v1131, 6
        %v1914 = vpop.permute.xlu0 %1913
        %1915 = vrot.lane.b32.xlu0 %v1134, 6
        %v1916 = vpop.permute.xlu0 %1915
        %1917 = vrot.lane.b32.xlu0 %v1136, 6
        %v1918 = vpop.permute.xlu0 %1917
        %1919 = vrot.lane.b32.xlu0 %v1139, 6
        %v1920 = vpop.permute.xlu0 %1919
        %1921 = vrot.lane.b32.xlu0 %v1141, 6
        %v1922 = vpop.permute.xlu0 %1921
        %1923 = vrot.lane.b32.xlu0 %v1144, 6
        %v1924 = vpop.permute.xlu0 %1923
        %1925 = vrot.lane.b32.xlu0 %v1146, 6
        %v1926 = vpop.permute.xlu0 %1925
        %1927 = vrot.lane.b32.xlu0 %v1149, 6
        %v1928 = vpop.permute.xlu0 %1927
        %1929 = vrot.lane.b32.xlu0 %v1151, 6
        %v1930 = vpop.permute.xlu0 %1929
        %1931 = vrot.lane.b32.xlu0 %v1154, 6
        %v1932 = vpop.permute.xlu0 %1931
        %1933 = vrot.lane.b32.xlu0 %v1156, 6
        %v1934 = vpop.permute.xlu0 %1933
        %1935 = vrot.lane.b32.xlu0 %v1159, 6
        %v1936 = vpop.permute.xlu0 %1935
        %1937 = vrot.lane.b32.xlu0 %v1161, 6
        %v1938 = vpop.permute.xlu0 %1937
        %1939 = vrot.lane.b32.xlu0 %v1164, 6
        %v1940 = vpop.permute.xlu0 %1939
        %1941 = vrot.lane.b32.xlu0 %v1166, 6
        %v1942 = vpop.permute.xlu0 %1941
        %1943 = vrot.lane.b32.xlu0 %v1169, 6
        %v1944 = vpop.permute.xlu0 %1943
        %1945 = vrot.lane.b32.xlu0 %v1171, 6
        %v1946 = vpop.permute.xlu0 %1945
        %1947 = vrot.lane.b32.xlu0 %v1174, 6
        %v1948 = vpop.permute.xlu0 %1947
        %1949 = vrot.lane.b32.xlu0 %v1176, 6
        %v1950 = vpop.permute.xlu0 %1949
        %1951 = vrot.lane.b32.xlu0 %v1179, 6
        %v1952 = vpop.permute.xlu0 %1951
        %1953 = vrot.lane.b32.xlu0 %v1181, 6
        %v1954 = vpop.permute.xlu0 %1953
        %1955 = vrot.lane.b32.xlu0 %v1184, 6
        %v1956 = vpop.permute.xlu0 %1955
        %1957 = vrot.lane.b32.xlu0 %v1186, 6
        %v1958 = vpop.permute.xlu0 %1957
        %1959 = vrot.lane.b32.xlu0 %v1189, 6
        %v1960 = vpop.permute.xlu0 %1959
        %1961 = vrot.lane.b32.xlu0 %v1191, 6
        %v1962 = vpop.permute.xlu0 %1961
        %1963 = vrot.lane.b32.xlu0 %v1194, 6
        %v1964 = vpop.permute.xlu0 %1963
        %1965 = vrot.lane.b32.xlu0 %v1196, 6
        %v1966 = vpop.permute.xlu0 %1965
        %1967 = vrot.lane.b32.xlu0 %v1199, 6
        %v1968 = vpop.permute.xlu0 %1967
        %1969 = vrot.lane.b32.xlu0 %v1201, 6
        %v1970 = vpop.permute.xlu0 %1969
        %1971 = vrot.lane.b32.xlu0 %v1204, 6
        %v1972 = vpop.permute.xlu0 %1971
        %1973 = vrot.lane.b32.xlu0 %v1206, 6
        %v1974 = vpop.permute.xlu0 %1973
        %1975 = vrot.lane.b32.xlu0 %v1209, 6
        %v1976 = vpop.permute.xlu0 %1975
        %1977 = vrot.lane.b32.xlu0 %v1211, 6
        %v1978 = vpop.permute.xlu0 %1977
        %1979 = vrot.lane.b32.xlu0 %v1214, 6
        %v1980 = vpop.permute.xlu0 %1979
        %1981 = vrot.lane.b32.xlu0 %v1216, 6
        %v1982 = vpop.permute.xlu0 %1981
        %1983 = vrot.lane.b32.xlu0 %v1219, 6
        %v1984 = vpop.permute.xlu0 %1983
        %1985 = vrot.lane.b32.xlu0 %v1221, 6
        %v1986 = vpop.permute.xlu0 %1985
        %1987 = vrot.lane.b32.xlu0 %v1224, 6
        %v1988 = vpop.permute.xlu0 %1987
        %1989 = vrot.lane.b32.xlu0 %v1226, 6
        %v1990 = vpop.permute.xlu0 %1989
        %1991 = vrot.lane.b32.xlu0 %v1229, 6
        %v1992 = vpop.permute.xlu0 %1991
        %1993 = vrot.lane.b32.xlu0 %v1231, 6
        %v1994 = vpop.permute.xlu0 %1993
        %1995 = vrot.lane.b32.xlu0 %v1234, 6
        %v1996 = vpop.permute.xlu0 %1995
        %1997 = vrot.lane.b32.xlu0 %v1236, 6
        %v1998 = vpop.permute.xlu0 %1997
        %1999 = vrot.lane.b32.xlu0 %v1239, 6
        %v2000 = vpop.permute.xlu0 %1999
        %2001 = vrot.lane.b32.xlu0 %v1241, 6
        %v2002 = vpop.permute.xlu0 %2001
        %2003 = vrot.lane.b32.xlu0 %v1244, 6
        %v2004 = vpop.permute.xlu0 %2003
        %2005 = vrot.lane.b32.xlu0 %v1246, 6
        %v2006 = vpop.permute.xlu0 %2005
        %2007 = vrot.lane.b32.xlu0 %v1249, 6
        %v2008 = vpop.permute.xlu0 %2007
        %2009 = vrot.lane.b32.xlu0 %v1251, 6
        %v2010 = vpop.permute.xlu0 %2009
        %2011 = vrot.lane.b32.xlu0 %v1254, 6
        %v2012 = vpop.permute.xlu0 %2011
        %2013 = vrot.lane.b32.xlu0 %v1256, 6
        %v2014 = vpop.permute.xlu0 %2013
        %2015 = vrot.lane.b32.xlu0 %v1259, 6
        %v2016 = vpop.permute.xlu0 %2015
        %2017 = vrot.lane.b32.xlu0 %v1261, 6
        %v2018 = vpop.permute.xlu0 %2017
        %2019 = vrot.lane.b32.xlu0 %v1264, 6
        %v2020 = vpop.permute.xlu0 %2019
        %2021 = vrot.lane.b32.xlu0 %v1266, 6
        %v2022 = vpop.permute.xlu0 %2021
        %2023 = vrot.lane.b32.xlu0 %v1269, 6
        %v2024 = vpop.permute.xlu0 %2023
        %2025 = vrot.lane.b32.xlu0 %v1271, 6
        %v2026 = vpop.permute.xlu0 %2025
        %2027 = vrot.lane.b32.xlu0 %v1274, 6
        %v2028 = vpop.permute.xlu0 %2027
        %2029 = vrot.lane.b32.xlu0 %v1276, 6
        %v2030 = vpop.permute.xlu0 %2029
        %2031 = vrot.lane.b32.xlu0 %v1279, 6
        %v2032 = vpop.permute.xlu0 %2031
        %2033 = vrot.lane.b32.xlu0 %v1281, 6
        %v2034 = vpop.permute.xlu0 %2033
        %2035 = vrot.lane.b32.xlu0 %v1284, 6
        %v2036 = vpop.permute.xlu0 %2035
        %2037 = vrot.lane.b32.xlu0 %v1286, 6
        %v2038 = vpop.permute.xlu0 %2037
        %2039 = vrot.lane.b32.xlu0 %v1289, 6
        %v2040 = vpop.permute.xlu0 %2039
        %2041 = vrot.lane.b32.xlu0 %v1291, 6
        %v2042 = vpop.permute.xlu0 %2041
        %2043 = vrot.lane.b32.xlu0 %v1294, 6
        %v2044 = vpop.permute.xlu0 %2043
        %2045 = vrot.lane.b32.xlu0 %v1296, 6
        %v2046 = vpop.permute.xlu0 %2045
        %2047 = vrot.lane.b32.xlu0 %v1299, 6
        %v2048 = vpop.permute.xlu0 %2047
        %2049 = vrot.lane.b32.xlu0 %v1301, 6
        %v2050 = vpop.permute.xlu0 %2049
        %2051 = vrot.lane.b32.xlu0 %v1304, 6
        %v2052 = vpop.permute.xlu0 %2051
        %2053 = vrot.lane.b32.xlu0 %v1306, 6
        %v2054 = vpop.permute.xlu0 %2053
        %2055 = vrot.lane.b32.xlu0 %v1309, 6
        %v2056 = vpop.permute.xlu0 %2055
        %2057 = vrot.lane.b32.xlu0 %v1311, 6
        %v2058 = vpop.permute.xlu0 %2057
        %2059 = vrot.lane.b32.xlu0 %v1314, 6
        %v2060 = vpop.permute.xlu0 %2059
        %2061 = vrot.lane.b32.xlu0 %v1316, 6
        %v2062 = vpop.permute.xlu0 %2061
        %2063 = vrot.lane.b32.xlu0 %v1319, 6
        %v2064 = vpop.permute.xlu0 %2063
        %2065 = vrot.lane.b32.xlu0 %v1321, 6
        %v2066 = vpop.permute.xlu0 %2065
        %2067 = vrot.lane.b32.xlu0 %v1324, 6
        %v2068 = vpop.permute.xlu0 %2067
        %2069 = vrot.lane.b32.xlu0 %v1326, 6
        %v2070 = vpop.permute.xlu0 %2069
        %2199 = vrot.lane.b32.xlu0 %v280, 9
        %v2200 = vpop.permute.xlu0 %2199
        %2201 = vrot.lane.b32.xlu0 %v281, 9
        %v2202 = vpop.permute.xlu0 %2201
        %2203 = vrot.lane.b32.xlu0 %v283, 9
        %v2204 = vpop.permute.xlu0 %2203
        %2205 = vrot.lane.b32.xlu0 %v284, 9
        %v2206 = vpop.permute.xlu0 %2205
        %2207 = vrot.lane.b32.xlu0 %v286, 9
        %v2208 = vpop.permute.xlu0 %2207
        %2209 = vrot.lane.b32.xlu0 %v287, 9
        %v2210 = vpop.permute.xlu0 %2209
        %2211 = vrot.lane.b32.xlu0 %v289, 9
        %v2212 = vpop.permute.xlu0 %2211
        %2213 = vrot.lane.b32.xlu0 %v290, 9
        %v2214 = vpop.permute.xlu0 %2213
        %2215 = vrot.lane.b32.xlu0 %v292, 9
        %v2216 = vpop.permute.xlu0 %2215
        %2217 = vrot.lane.b32.xlu0 %v293, 9
        %v2218 = vpop.permute.xlu0 %2217
        %2219 = vrot.lane.b32.xlu0 %v295, 9
        %v2220 = vpop.permute.xlu0 %2219
        %2221 = vrot.lane.b32.xlu0 %v296, 9
        %v2222 = vpop.permute.xlu0 %2221
        %2223 = vrot.lane.b32.xlu0 %v298, 9
        %v2224 = vpop.permute.xlu0 %2223
        %2225 = vrot.lane.b32.xlu0 %v299, 9
        %v2226 = vpop.permute.xlu0 %2225
        %2227 = vrot.lane.b32.xlu0 %v301, 9
        %v2228 = vpop.permute.xlu0 %2227
        %2229 = vrot.lane.b32.xlu0 %v302, 9
        %v2230 = vpop.permute.xlu0 %2229
        %2231 = vrot.lane.b32.xlu0 %v304, 9
        %v2232 = vpop.permute.xlu0 %2231
        %2233 = vrot.lane.b32.xlu0 %v305, 9
        %v2234 = vpop.permute.xlu0 %2233
        %2235 = vrot.lane.b32.xlu0 %v307, 9
        %v2236 = vpop.permute.xlu0 %2235
        %2237 = vrot.lane.b32.xlu0 %v308, 9
        %v2238 = vpop.permute.xlu0 %2237
        %2239 = vrot.lane.b32.xlu0 %v310, 9
        %v2240 = vpop.permute.xlu0 %2239
        %2241 = vrot.lane.b32.xlu0 %v311, 9
        %v2242 = vpop.permute.xlu0 %2241
        %2243 = vrot.lane.b32.xlu0 %v313, 9
        %v2244 = vpop.permute.xlu0 %2243
        %2245 = vrot.lane.b32.xlu0 %v314, 9
        %v2246 = vpop.permute.xlu0 %2245
        %2247 = vrot.lane.b32.xlu0 %v316, 9
        %v2248 = vpop.permute.xlu0 %2247
        %2249 = vrot.lane.b32.xlu0 %v317, 9
        %v2250 = vpop.permute.xlu0 %2249
        %2251 = vrot.lane.b32.xlu0 %v319, 9
        %v2252 = vpop.permute.xlu0 %2251
        %2253 = vrot.lane.b32.xlu0 %v320, 9
        %v2254 = vpop.permute.xlu0 %2253
        %2255 = vrot.lane.b32.xlu0 %v322, 9
        %v2256 = vpop.permute.xlu0 %2255
        %2257 = vrot.lane.b32.xlu0 %v323, 9
        %v2258 = vpop.permute.xlu0 %2257
        %2259 = vrot.lane.b32.xlu0 %v325, 9
        %v2260 = vpop.permute.xlu0 %2259
        %2261 = vrot.lane.b32.xlu0 %v326, 9
        %v2262 = vpop.permute.xlu0 %2261
        %2263 = vrot.lane.b32.xlu0 %v334, 9
        %v2264 = vpop.permute.xlu0 %2263
        %2265 = vrot.lane.b32.xlu0 %v335, 9
        %v2266 = vpop.permute.xlu0 %2265
        %2267 = vrot.lane.b32.xlu0 %v337, 9
        %v2268 = vpop.permute.xlu0 %2267
        %2269 = vrot.lane.b32.xlu0 %v338, 9
        %v2270 = vpop.permute.xlu0 %2269
        %2271 = vrot.lane.b32.xlu0 %v340, 9
        %v2272 = vpop.permute.xlu0 %2271
        %2273 = vrot.lane.b32.xlu0 %v341, 9
        %v2274 = vpop.permute.xlu0 %2273
        %2275 = vrot.lane.b32.xlu0 %v343, 9
        %v2276 = vpop.permute.xlu0 %2275
        %2277 = vrot.lane.b32.xlu0 %v344, 9
        %v2278 = vpop.permute.xlu0 %2277
        %2279 = vrot.lane.b32.xlu0 %v346, 9
        %v2280 = vpop.permute.xlu0 %2279
        %2281 = vrot.lane.b32.xlu0 %v347, 9
        %v2282 = vpop.permute.xlu0 %2281
        %2283 = vrot.lane.b32.xlu0 %v349, 9
        %v2284 = vpop.permute.xlu0 %2283
        %2285 = vrot.lane.b32.xlu0 %v350, 9
        %v2286 = vpop.permute.xlu0 %2285
        %2287 = vrot.lane.b32.xlu0 %v352, 9
        %v2288 = vpop.permute.xlu0 %2287
        %2289 = vrot.lane.b32.xlu0 %v353, 9
        %v2290 = vpop.permute.xlu0 %2289
        %2291 = vrot.lane.b32.xlu0 %v355, 9
        %v2292 = vpop.permute.xlu0 %2291
        %2293 = vrot.lane.b32.xlu0 %v356, 9
        %v2294 = vpop.permute.xlu0 %2293
        %2295 = vrot.lane.b32.xlu0 %v358, 9
        %v2296 = vpop.permute.xlu0 %2295
        %2297 = vrot.lane.b32.xlu0 %v359, 9
        %v2298 = vpop.permute.xlu0 %2297
        %2299 = vrot.lane.b32.xlu0 %v361, 9
        %v2300 = vpop.permute.xlu0 %2299
        %2301 = vrot.lane.b32.xlu0 %v362, 9
        %v2302 = vpop.permute.xlu0 %2301
        %2303 = vrot.lane.b32.xlu0 %v364, 9
        %v2304 = vpop.permute.xlu0 %2303
        %2305 = vrot.lane.b32.xlu0 %v365, 9
        %v2306 = vpop.permute.xlu0 %2305
        %2307 = vrot.lane.b32.xlu0 %v367, 9
        %v2308 = vpop.permute.xlu0 %2307
        %2309 = vrot.lane.b32.xlu0 %v368, 9
        %v2310 = vpop.permute.xlu0 %2309
        %2311 = vrot.lane.b32.xlu0 %v370, 9
        %v2312 = vpop.permute.xlu0 %2311
        %2313 = vrot.lane.b32.xlu0 %v371, 9
        %v2314 = vpop.permute.xlu0 %2313
        %2315 = vrot.lane.b32.xlu0 %v373, 9
        %v2316 = vpop.permute.xlu0 %2315
        %2317 = vrot.lane.b32.xlu0 %v374, 9
        %v2318 = vpop.permute.xlu0 %2317
        %2319 = vrot.lane.b32.xlu0 %v376, 9
        %v2320 = vpop.permute.xlu0 %2319
        %2321 = vrot.lane.b32.xlu0 %v377, 9
        %v2322 = vpop.permute.xlu0 %2321
        %2323 = vrot.lane.b32.xlu0 %v379, 9
        %v2324 = vpop.permute.xlu0 %2323
        %2325 = vrot.lane.b32.xlu0 %v380, 9
        %v2326 = vpop.permute.xlu0 %2325
        %2327 = vrot.lane.b32.xlu0 %v388, 9
        %v2328 = vpop.permute.xlu0 %2327
        %2329 = vrot.lane.b32.xlu0 %v389, 9
        %v2330 = vpop.permute.xlu0 %2329
        %2331 = vrot.lane.b32.xlu0 %v391, 9
        %v2332 = vpop.permute.xlu0 %2331
        %2333 = vrot.lane.b32.xlu0 %v392, 9
        %v2334 = vpop.permute.xlu0 %2333
        %2335 = vrot.lane.b32.xlu0 %v394, 9
        %v2336 = vpop.permute.xlu0 %2335
        %2337 = vrot.lane.b32.xlu0 %v395, 9
        %v2338 = vpop.permute.xlu0 %2337
        %2339 = vrot.lane.b32.xlu0 %v397, 9
        %v2340 = vpop.permute.xlu0 %2339
        %2341 = vrot.lane.b32.xlu0 %v398, 9
        %v2342 = vpop.permute.xlu0 %2341
        %2343 = vrot.lane.b32.xlu0 %v400, 9
        %v2344 = vpop.permute.xlu0 %2343
        %2345 = vrot.lane.b32.xlu0 %v401, 9
        %v2346 = vpop.permute.xlu0 %2345
        %2347 = vrot.lane.b32.xlu0 %v403, 9
        %v2348 = vpop.permute.xlu0 %2347
        %2349 = vrot.lane.b32.xlu0 %v404, 9
        %v2350 = vpop.permute.xlu0 %2349
        %2351 = vrot.lane.b32.xlu0 %v406, 9
        %v2352 = vpop.permute.xlu0 %2351
        %2353 = vrot.lane.b32.xlu0 %v407, 9
        %v2354 = vpop.permute.xlu0 %2353
        %2355 = vrot.lane.b32.xlu0 %v409, 9
        %v2356 = vpop.permute.xlu0 %2355
        %2357 = vrot.lane.b32.xlu0 %v410, 9
        %v2358 = vpop.permute.xlu0 %2357
        %2359 = vrot.lane.b32.xlu0 %v412, 9
        %v2360 = vpop.permute.xlu0 %2359
        %2361 = vrot.lane.b32.xlu0 %v413, 9
        %v2362 = vpop.permute.xlu0 %2361
        %2363 = vrot.lane.b32.xlu0 %v415, 9
        %v2364 = vpop.permute.xlu0 %2363
        %2365 = vrot.lane.b32.xlu0 %v416, 9
        %v2366 = vpop.permute.xlu0 %2365
        %2367 = vrot.lane.b32.xlu0 %v418, 9
        %v2368 = vpop.permute.xlu0 %2367
        %2369 = vrot.lane.b32.xlu0 %v419, 9
        %v2370 = vpop.permute.xlu0 %2369
        %2371 = vrot.lane.b32.xlu0 %v421, 9
        %v2372 = vpop.permute.xlu0 %2371
        %2373 = vrot.lane.b32.xlu0 %v422, 9
        %v2374 = vpop.permute.xlu0 %2373
        %2375 = vrot.lane.b32.xlu0 %v424, 9
        %v2376 = vpop.permute.xlu0 %2375
        %2377 = vrot.lane.b32.xlu0 %v425, 9
        %v2378 = vpop.permute.xlu0 %2377
        %2379 = vrot.lane.b32.xlu0 %v427, 9
        %v2380 = vpop.permute.xlu0 %2379
        %2381 = vrot.lane.b32.xlu0 %v428, 9
        %v2382 = vpop.permute.xlu0 %2381
        %2383 = vrot.lane.b32.xlu0 %v430, 9
        %v2384 = vpop.permute.xlu0 %2383
        %2385 = vrot.lane.b32.xlu0 %v431, 9
        %v2386 = vpop.permute.xlu0 %2385
        %2387 = vrot.lane.b32.xlu0 %v433, 9
        %v2388 = vpop.permute.xlu0 %2387
        %2389 = vrot.lane.b32.xlu0 %v434, 9
        %v2390 = vpop.permute.xlu0 %2389
        %2391 = vrot.lane.b32.xlu0 %v442, 9
        %v2392 = vpop.permute.xlu0 %2391
        %2393 = vrot.lane.b32.xlu0 %v443, 9
        %v2394 = vpop.permute.xlu0 %2393
        %2395 = vrot.lane.b32.xlu0 %v445, 9
        %v2396 = vpop.permute.xlu0 %2395
        %2397 = vrot.lane.b32.xlu0 %v446, 9
        %v2398 = vpop.permute.xlu0 %2397
        %2399 = vrot.lane.b32.xlu0 %v448, 9
        %v2400 = vpop.permute.xlu0 %2399
        %2401 = vrot.lane.b32.xlu0 %v449, 9
        %v2402 = vpop.permute.xlu0 %2401
        %2403 = vrot.lane.b32.xlu0 %v451, 9
        %v2404 = vpop.permute.xlu0 %2403
        %2405 = vrot.lane.b32.xlu0 %v452, 9
        %v2406 = vpop.permute.xlu0 %2405
        %2407 = vrot.lane.b32.xlu0 %v454, 9
        %v2408 = vpop.permute.xlu0 %2407
        %2409 = vrot.lane.b32.xlu0 %v455, 9
        %v2410 = vpop.permute.xlu0 %2409
        %2411 = vrot.lane.b32.xlu0 %v457, 9
        %v2412 = vpop.permute.xlu0 %2411
        %2413 = vrot.lane.b32.xlu0 %v458, 9
        %v2414 = vpop.permute.xlu0 %2413
        %2415 = vrot.lane.b32.xlu0 %v460, 9
        %v2416 = vpop.permute.xlu0 %2415
        %2417 = vrot.lane.b32.xlu0 %v461, 9
        %v2418 = vpop.permute.xlu0 %2417
        %2419 = vrot.lane.b32.xlu0 %v463, 9
        %v2420 = vpop.permute.xlu0 %2419
        %2421 = vrot.lane.b32.xlu0 %v464, 9
        %v2422 = vpop.permute.xlu0 %2421
        %2423 = vrot.lane.b32.xlu0 %v466, 9
        %v2424 = vpop.permute.xlu0 %2423
        %2425 = vrot.lane.b32.xlu0 %v467, 9
        %v2426 = vpop.permute.xlu0 %2425
        %2427 = vrot.lane.b32.xlu0 %v469, 9
        %v2428 = vpop.permute.xlu0 %2427
        %2429 = vrot.lane.b32.xlu0 %v470, 9
        %v2430 = vpop.permute.xlu0 %2429
        %2431 = vrot.lane.b32.xlu0 %v472, 9
        %v2432 = vpop.permute.xlu0 %2431
        %2433 = vrot.lane.b32.xlu0 %v473, 9
        %v2434 = vpop.permute.xlu0 %2433
        %2435 = vrot.lane.b32.xlu0 %v475, 9
        %v2436 = vpop.permute.xlu0 %2435
        %2437 = vrot.lane.b32.xlu0 %v476, 9
        %v2438 = vpop.permute.xlu0 %2437
        %2439 = vrot.lane.b32.xlu0 %v478, 9
        %v2440 = vpop.permute.xlu0 %2439
        %2441 = vrot.lane.b32.xlu0 %v479, 9
        %v2442 = vpop.permute.xlu0 %2441
        %2443 = vrot.lane.b32.xlu0 %v481, 9
        %v2444 = vpop.permute.xlu0 %2443
        %2445 = vrot.lane.b32.xlu0 %v482, 9
        %v2446 = vpop.permute.xlu0 %2445
        %2447 = vrot.lane.b32.xlu0 %v484, 9
        %v2448 = vpop.permute.xlu0 %2447
        %2449 = vrot.lane.b32.xlu0 %v485, 9
        %v2450 = vpop.permute.xlu0 %2449
        %2451 = vrot.lane.b32.xlu0 %v487, 9
        %v2452 = vpop.permute.xlu0 %2451
        %2453 = vrot.lane.b32.xlu0 %v488, 9
        %v2454 = vpop.permute.xlu0 %2453
        %2583 = vrot.lane.b32.xlu0 %v693, 12
        %v2584 = vpop.permute.xlu0 %2583
        %2585 = vrot.lane.b32.xlu0 %v695, 12
        %v2586 = vpop.permute.xlu0 %2585
        %2587 = vrot.lane.b32.xlu0 %v698, 12
        %v2588 = vpop.permute.xlu0 %2587
        %2589 = vrot.lane.b32.xlu0 %v700, 12
        %v2590 = vpop.permute.xlu0 %2589
        %2591 = vrot.lane.b32.xlu0 %v703, 12
        %v2592 = vpop.permute.xlu0 %2591
        %2593 = vrot.lane.b32.xlu0 %v705, 12
        %v2594 = vpop.permute.xlu0 %2593
        %2595 = vrot.lane.b32.xlu0 %v708, 12
        %v2596 = vpop.permute.xlu0 %2595
        %2597 = vrot.lane.b32.xlu0 %v710, 12
        %v2598 = vpop.permute.xlu0 %2597
        %2599 = vrot.lane.b32.xlu0 %v713, 12
        %v2600 = vpop.permute.xlu0 %2599
        %2601 = vrot.lane.b32.xlu0 %v715, 12
        %v2602 = vpop.permute.xlu0 %2601
        %2603 = vrot.lane.b32.xlu0 %v718, 12
        %v2604 = vpop.permute.xlu0 %2603
        %2605 = vrot.lane.b32.xlu0 %v720, 12
        %v2606 = vpop.permute.xlu0 %2605
        %2607 = vrot.lane.b32.xlu0 %v723, 12
        %v2608 = vpop.permute.xlu0 %2607
        %2609 = vrot.lane.b32.xlu0 %v725, 12
        %v2610 = vpop.permute.xlu0 %2609
        %2611 = vrot.lane.b32.xlu0 %v728, 12
        %v2612 = vpop.permute.xlu0 %2611
        %2613 = vrot.lane.b32.xlu0 %v730, 12
        %v2614 = vpop.permute.xlu0 %2613
        %2615 = vrot.lane.b32.xlu0 %v733, 12
        %v2616 = vpop.permute.xlu0 %2615
        %2617 = vrot.lane.b32.xlu0 %v735, 12
        %v2618 = vpop.permute.xlu0 %2617
        %2619 = vrot.lane.b32.xlu0 %v738, 12
        %v2620 = vpop.permute.xlu0 %2619
        %2621 = vrot.lane.b32.xlu0 %v740, 12
        %v2622 = vpop.permute.xlu0 %2621
        %2623 = vrot.lane.b32.xlu0 %v743, 12
        %v2624 = vpop.permute.xlu0 %2623
        %2625 = vrot.lane.b32.xlu0 %v745, 12
        %v2626 = vpop.permute.xlu0 %2625
        %2627 = vrot.lane.b32.xlu0 %v748, 12
        %v2628 = vpop.permute.xlu0 %2627
        %2629 = vrot.lane.b32.xlu0 %v750, 12
        %v2630 = vpop.permute.xlu0 %2629
        %2631 = vrot.lane.b32.xlu0 %v753, 12
        %v2632 = vpop.permute.xlu0 %2631
        %2633 = vrot.lane.b32.xlu0 %v755, 12
        %v2634 = vpop.permute.xlu0 %2633
        %2635 = vrot.lane.b32.xlu0 %v758, 12
        %v2636 = vpop.permute.xlu0 %2635
        %2637 = vrot.lane.b32.xlu0 %v760, 12
        %v2638 = vpop.permute.xlu0 %2637
        %2639 = vrot.lane.b32.xlu0 %v763, 12
        %v2640 = vpop.permute.xlu0 %2639
        %2641 = vrot.lane.b32.xlu0 %v765, 12
        %v2642 = vpop.permute.xlu0 %2641
        %2643 = vrot.lane.b32.xlu0 %v1341, 12
        %v2644 = vpop.permute.xlu0 %2643
        %2645 = vrot.lane.b32.xlu0 %v1343, 12
        %v2646 = vpop.permute.xlu0 %2645
        %2647 = vrot.lane.b32.xlu0 %v773, 12
        %v2648 = vpop.permute.xlu0 %2647
        %2649 = vrot.lane.b32.xlu0 %v775, 12
        %v2650 = vpop.permute.xlu0 %2649
        %2651 = vrot.lane.b32.xlu0 %v778, 12
        %v2652 = vpop.permute.xlu0 %2651
        %2653 = vrot.lane.b32.xlu0 %v780, 12
        %v2654 = vpop.permute.xlu0 %2653
        %2655 = vrot.lane.b32.xlu0 %v783, 12
        %v2656 = vpop.permute.xlu0 %2655
        %2657 = vrot.lane.b32.xlu0 %v785, 12
        %v2658 = vpop.permute.xlu0 %2657
        %2659 = vrot.lane.b32.xlu0 %v788, 12
        %v2660 = vpop.permute.xlu0 %2659
        %2661 = vrot.lane.b32.xlu0 %v790, 12
        %v2662 = vpop.permute.xlu0 %2661
        %2663 = vrot.lane.b32.xlu0 %v793, 12
        %v2664 = vpop.permute.xlu0 %2663
        %2665 = vrot.lane.b32.xlu0 %v795, 12
        %v2666 = vpop.permute.xlu0 %2665
        %2667 = vrot.lane.b32.xlu0 %v798, 12
        %v2668 = vpop.permute.xlu0 %2667
        %2669 = vrot.lane.b32.xlu0 %v800, 12
        %v2670 = vpop.permute.xlu0 %2669
        %2671 = vrot.lane.b32.xlu0 %v803, 12
        %v2672 = vpop.permute.xlu0 %2671
        %2673 = vrot.lane.b32.xlu0 %v805, 12
        %v2674 = vpop.permute.xlu0 %2673
        %2675 = vrot.lane.b32.xlu0 %v808, 12
        %v2676 = vpop.permute.xlu0 %2675
        %2677 = vrot.lane.b32.xlu0 %v810, 12
        %v2678 = vpop.permute.xlu0 %2677
        %2679 = vrot.lane.b32.xlu0 %v813, 12
        %v2680 = vpop.permute.xlu0 %2679
        %2681 = vrot.lane.b32.xlu0 %v815, 12
        %v2682 = vpop.permute.xlu0 %2681
        %2683 = vrot.lane.b32.xlu0 %v818, 12
        %v2684 = vpop.permute.xlu0 %2683
        %2685 = vrot.lane.b32.xlu0 %v820, 12
        %v2686 = vpop.permute.xlu0 %2685
        %2687 = vrot.lane.b32.xlu0 %v823, 12
        %v2688 = vpop.permute.xlu0 %2687
        %2689 = vrot.lane.b32.xlu0 %v825, 12
        %v2690 = vpop.permute.xlu0 %2689
        %2691 = vrot.lane.b32.xlu0 %v828, 12
        %v2692 = vpop.permute.xlu0 %2691
        %2693 = vrot.lane.b32.xlu0 %v830, 12
        %v2694 = vpop.permute.xlu0 %2693
        %2695 = vrot.lane.b32.xlu0 %v833, 12
        %v2696 = vpop.permute.xlu0 %2695
        %2697 = vrot.lane.b32.xlu0 %v835, 12
        %v2698 = vpop.permute.xlu0 %2697
        %2699 = vrot.lane.b32.xlu0 %v838, 12
        %v2700 = vpop.permute.xlu0 %2699
        %2701 = vrot.lane.b32.xlu0 %v840, 12
        %v2702 = vpop.permute.xlu0 %2701
        %2703 = vrot.lane.b32.xlu0 %v843, 12
        %v2704 = vpop.permute.xlu0 %2703
        %2705 = vrot.lane.b32.xlu0 %v845, 12
        %v2706 = vpop.permute.xlu0 %2705
        %2707 = vrot.lane.b32.xlu0 %v1346, 12
        %v2708 = vpop.permute.xlu0 %2707
        %2709 = vrot.lane.b32.xlu0 %v1348, 12
        %v2710 = vpop.permute.xlu0 %2709
        %2711 = vrot.lane.b32.xlu0 %v853, 12
        %v2712 = vpop.permute.xlu0 %2711
        %2713 = vrot.lane.b32.xlu0 %v855, 12
        %v2714 = vpop.permute.xlu0 %2713
        %2715 = vrot.lane.b32.xlu0 %v858, 12
        %v2716 = vpop.permute.xlu0 %2715
        %2717 = vrot.lane.b32.xlu0 %v860, 12
        %v2718 = vpop.permute.xlu0 %2717
        %2719 = vrot.lane.b32.xlu0 %v863, 12
        %v2720 = vpop.permute.xlu0 %2719
        %2721 = vrot.lane.b32.xlu0 %v865, 12
        %v2722 = vpop.permute.xlu0 %2721
        %2723 = vrot.lane.b32.xlu0 %v868, 12
        %v2724 = vpop.permute.xlu0 %2723
        %2725 = vrot.lane.b32.xlu0 %v870, 12
        %v2726 = vpop.permute.xlu0 %2725
        %2727 = vrot.lane.b32.xlu0 %v873, 12
        %v2728 = vpop.permute.xlu0 %2727
        %2729 = vrot.lane.b32.xlu0 %v875, 12
        %v2730 = vpop.permute.xlu0 %2729
        %2731 = vrot.lane.b32.xlu0 %v878, 12
        %v2732 = vpop.permute.xlu0 %2731
        %2733 = vrot.lane.b32.xlu0 %v880, 12
        %v2734 = vpop.permute.xlu0 %2733
        %2735 = vrot.lane.b32.xlu0 %v883, 12
        %v2736 = vpop.permute.xlu0 %2735
        %2737 = vrot.lane.b32.xlu0 %v885, 12
        %v2738 = vpop.permute.xlu0 %2737
        %2739 = vrot.lane.b32.xlu0 %v888, 12
        %v2740 = vpop.permute.xlu0 %2739
        %2741 = vrot.lane.b32.xlu0 %v890, 12
        %v2742 = vpop.permute.xlu0 %2741
        %2743 = vrot.lane.b32.xlu0 %v893, 12
        %v2744 = vpop.permute.xlu0 %2743
        %2745 = vrot.lane.b32.xlu0 %v895, 12
        %v2746 = vpop.permute.xlu0 %2745
        %2747 = vrot.lane.b32.xlu0 %v898, 12
        %v2748 = vpop.permute.xlu0 %2747
        %2749 = vrot.lane.b32.xlu0 %v900, 12
        %v2750 = vpop.permute.xlu0 %2749
        %2751 = vrot.lane.b32.xlu0 %v903, 12
        %v2752 = vpop.permute.xlu0 %2751
        %2753 = vrot.lane.b32.xlu0 %v905, 12
        %v2754 = vpop.permute.xlu0 %2753
        %2755 = vrot.lane.b32.xlu0 %v908, 12
        %v2756 = vpop.permute.xlu0 %2755
        %2757 = vrot.lane.b32.xlu0 %v910, 12
        %v2758 = vpop.permute.xlu0 %2757
        %2759 = vrot.lane.b32.xlu0 %v913, 12
        %v2760 = vpop.permute.xlu0 %2759
        %2761 = vrot.lane.b32.xlu0 %v915, 12
        %v2762 = vpop.permute.xlu0 %2761
        %2763 = vrot.lane.b32.xlu0 %v918, 12
        %v2764 = vpop.permute.xlu0 %2763
        %2765 = vrot.lane.b32.xlu0 %v920, 12
        %v2766 = vpop.permute.xlu0 %2765
        %2767 = vrot.lane.b32.xlu0 %v923, 12
        %v2768 = vpop.permute.xlu0 %2767
        %2769 = vrot.lane.b32.xlu0 %v925, 12
        %v2770 = vpop.permute.xlu0 %2769
        %2771 = vrot.lane.b32.xlu0 %v1351, 12
        %v2772 = vpop.permute.xlu0 %2771
        %2773 = vrot.lane.b32.xlu0 %v1353, 12
        %v2774 = vpop.permute.xlu0 %2773
        %2775 = vrot.lane.b32.xlu0 %v933, 12
        %v2776 = vpop.permute.xlu0 %2775
        %2777 = vrot.lane.b32.xlu0 %v935, 12
        %v2778 = vpop.permute.xlu0 %2777
        %2779 = vrot.lane.b32.xlu0 %v938, 12
        %v2780 = vpop.permute.xlu0 %2779
        %2781 = vrot.lane.b32.xlu0 %v940, 12
        %v2782 = vpop.permute.xlu0 %2781
        %2783 = vrot.lane.b32.xlu0 %v943, 12
        %v2784 = vpop.permute.xlu0 %2783
        %2785 = vrot.lane.b32.xlu0 %v945, 12
        %v2786 = vpop.permute.xlu0 %2785
        %2787 = vrot.lane.b32.xlu0 %v948, 12
        %v2788 = vpop.permute.xlu0 %2787
        %2789 = vrot.lane.b32.xlu0 %v950, 12
        %v2790 = vpop.permute.xlu0 %2789
        %2791 = vrot.lane.b32.xlu0 %v953, 12
        %v2792 = vpop.permute.xlu0 %2791
        %2793 = vrot.lane.b32.xlu0 %v955, 12
        %v2794 = vpop.permute.xlu0 %2793
        %2795 = vrot.lane.b32.xlu0 %v958, 12
        %v2796 = vpop.permute.xlu0 %2795
        %2797 = vrot.lane.b32.xlu0 %v960, 12
        %v2798 = vpop.permute.xlu0 %2797
        %2799 = vrot.lane.b32.xlu0 %v963, 12
        %v2800 = vpop.permute.xlu0 %2799
        %2801 = vrot.lane.b32.xlu0 %v965, 12
        %v2802 = vpop.permute.xlu0 %2801
        %2803 = vrot.lane.b32.xlu0 %v968, 12
        %v2804 = vpop.permute.xlu0 %2803
        %2805 = vrot.lane.b32.xlu0 %v970, 12
        %v2806 = vpop.permute.xlu0 %2805
        %2807 = vrot.lane.b32.xlu0 %v973, 12
        %v2808 = vpop.permute.xlu0 %2807
        %2809 = vrot.lane.b32.xlu0 %v975, 12
        %v2810 = vpop.permute.xlu0 %2809
        %2811 = vrot.lane.b32.xlu0 %v978, 12
        %v2812 = vpop.permute.xlu0 %2811
        %2813 = vrot.lane.b32.xlu0 %v980, 12
        %v2814 = vpop.permute.xlu0 %2813
        %2815 = vrot.lane.b32.xlu0 %v983, 12
        %v2816 = vpop.permute.xlu0 %2815
        %2817 = vrot.lane.b32.xlu0 %v985, 12
        %v2818 = vpop.permute.xlu0 %2817
        %2819 = vrot.lane.b32.xlu0 %v988, 12
        %v2820 = vpop.permute.xlu0 %2819
        %2821 = vrot.lane.b32.xlu0 %v990, 12
        %v2822 = vpop.permute.xlu0 %2821
        %2823 = vrot.lane.b32.xlu0 %v993, 12
        %v2824 = vpop.permute.xlu0 %2823
        %2825 = vrot.lane.b32.xlu0 %v995, 12
        %v2826 = vpop.permute.xlu0 %2825
        %2827 = vrot.lane.b32.xlu0 %v998, 12
        %v2828 = vpop.permute.xlu0 %2827
        %2829 = vrot.lane.b32.xlu0 %v1000, 12
        %v2830 = vpop.permute.xlu0 %2829
        %2831 = vrot.lane.b32.xlu0 %v1003, 12
        %v2832 = vpop.permute.xlu0 %2831
        %2833 = vrot.lane.b32.xlu0 %v1005, 12
        %v2834 = vpop.permute.xlu0 %2833
        %2835 = vrot.lane.b32.xlu0 %v1356, 12
        %v2836 = vpop.permute.xlu0 %2835
        %2837 = vrot.lane.b32.xlu0 %v1358, 12
        %v2838 = vpop.permute.xlu0 %2837
        %2967 = vrot.lane.b32.xlu0 %v1014, 15
        %v2968 = vpop.permute.xlu0 %2967
        %2969 = vrot.lane.b32.xlu0 %v1016, 15
        %v2970 = vpop.permute.xlu0 %2969
        %2971 = vrot.lane.b32.xlu0 %v1019, 15
        %v2972 = vpop.permute.xlu0 %2971
        %2973 = vrot.lane.b32.xlu0 %v1021, 15
        %v2974 = vpop.permute.xlu0 %2973
        %2975 = vrot.lane.b32.xlu0 %v1024, 15
        %v2976 = vpop.permute.xlu0 %2975
        %2977 = vrot.lane.b32.xlu0 %v1026, 15
        %v2978 = vpop.permute.xlu0 %2977
        %2979 = vrot.lane.b32.xlu0 %v1029, 15
        %v2980 = vpop.permute.xlu0 %2979
        %2981 = vrot.lane.b32.xlu0 %v1031, 15
        %v2982 = vpop.permute.xlu0 %2981
        %2983 = vrot.lane.b32.xlu0 %v1034, 15
        %v2984 = vpop.permute.xlu0 %2983
        %2985 = vrot.lane.b32.xlu0 %v1036, 15
        %v2986 = vpop.permute.xlu0 %2985
        %2987 = vrot.lane.b32.xlu0 %v1039, 15
        %v2988 = vpop.permute.xlu0 %2987
        %2989 = vrot.lane.b32.xlu0 %v1041, 15
        %v2990 = vpop.permute.xlu0 %2989
        %2991 = vrot.lane.b32.xlu0 %v1044, 15
        %v2992 = vpop.permute.xlu0 %2991
        %2993 = vrot.lane.b32.xlu0 %v1046, 15
        %v2994 = vpop.permute.xlu0 %2993
        %2995 = vrot.lane.b32.xlu0 %v1049, 15
        %v2996 = vpop.permute.xlu0 %2995
        %2997 = vrot.lane.b32.xlu0 %v1051, 15
        %v2998 = vpop.permute.xlu0 %2997
        %2999 = vrot.lane.b32.xlu0 %v1054, 15
        %v3000 = vpop.permute.xlu0 %2999
        %3001 = vrot.lane.b32.xlu0 %v1056, 15
        %v3002 = vpop.permute.xlu0 %3001
        %3003 = vrot.lane.b32.xlu0 %v1059, 15
        %v3004 = vpop.permute.xlu0 %3003
        %3005 = vrot.lane.b32.xlu0 %v1061, 15
        %v3006 = vpop.permute.xlu0 %3005
        %3007 = vrot.lane.b32.xlu0 %v1064, 15
        %v3008 = vpop.permute.xlu0 %3007
        %3009 = vrot.lane.b32.xlu0 %v1066, 15
        %v3010 = vpop.permute.xlu0 %3009
        %3011 = vrot.lane.b32.xlu0 %v1069, 15
        %v3012 = vpop.permute.xlu0 %3011
        %3013 = vrot.lane.b32.xlu0 %v1071, 15
        %v3014 = vpop.permute.xlu0 %3013
        %3015 = vrot.lane.b32.xlu0 %v1074, 15
        %v3016 = vpop.permute.xlu0 %3015
        %3017 = vrot.lane.b32.xlu0 %v1076, 15
        %v3018 = vpop.permute.xlu0 %3017
        %3019 = vrot.lane.b32.xlu0 %v1079, 15
        %v3020 = vpop.permute.xlu0 %3019
        %3021 = vrot.lane.b32.xlu0 %v1081, 15
        %v3022 = vpop.permute.xlu0 %3021
        %3023 = vrot.lane.b32.xlu0 %v1084, 15
        %v3024 = vpop.permute.xlu0 %3023
        %3025 = vrot.lane.b32.xlu0 %v1086, 15
        %v3026 = vpop.permute.xlu0 %3025
        %3027 = vrot.lane.b32.xlu0 %v1361, 15
        %v3028 = vpop.permute.xlu0 %3027
        %3029 = vrot.lane.b32.xlu0 %v1363, 15
        %v3030 = vpop.permute.xlu0 %3029
        %3031 = vrot.lane.b32.xlu0 %v1094, 15
        %v3032 = vpop.permute.xlu0 %3031
        %3033 = vrot.lane.b32.xlu0 %v1096, 15
        %v3034 = vpop.permute.xlu0 %3033
        %3035 = vrot.lane.b32.xlu0 %v1099, 15
        %v3036 = vpop.permute.xlu0 %3035
        %3037 = vrot.lane.b32.xlu0 %v1101, 15
        %v3038 = vpop.permute.xlu0 %3037
        %3039 = vrot.lane.b32.xlu0 %v1104, 15
        %v3040 = vpop.permute.xlu0 %3039
        %3041 = vrot.lane.b32.xlu0 %v1106, 15
        %v3042 = vpop.permute.xlu0 %3041
        %3043 = vrot.lane.b32.xlu0 %v1109, 15
        %v3044 = vpop.permute.xlu0 %3043
        %3045 = vrot.lane.b32.xlu0 %v1111, 15
        %v3046 = vpop.permute.xlu0 %3045
        %3047 = vrot.lane.b32.xlu0 %v1114, 15
        %v3048 = vpop.permute.xlu0 %3047
        %3049 = vrot.lane.b32.xlu0 %v1116, 15
        %v3050 = vpop.permute.xlu0 %3049
        %3051 = vrot.lane.b32.xlu0 %v1119, 15
        %v3052 = vpop.permute.xlu0 %3051
        %3053 = vrot.lane.b32.xlu0 %v1121, 15
        %v3054 = vpop.permute.xlu0 %3053
        %3055 = vrot.lane.b32.xlu0 %v1124, 15
        %v3056 = vpop.permute.xlu0 %3055
        %3057 = vrot.lane.b32.xlu0 %v1126, 15
        %v3058 = vpop.permute.xlu0 %3057
        %3059 = vrot.lane.b32.xlu0 %v1129, 15
        %v3060 = vpop.permute.xlu0 %3059
        %3061 = vrot.lane.b32.xlu0 %v1131, 15
        %v3062 = vpop.permute.xlu0 %3061
        %3063 = vrot.lane.b32.xlu0 %v1134, 15
        %v3064 = vpop.permute.xlu0 %3063
        %3065 = vrot.lane.b32.xlu0 %v1136, 15
        %v3066 = vpop.permute.xlu0 %3065
        %3067 = vrot.lane.b32.xlu0 %v1139, 15
        %v3068 = vpop.permute.xlu0 %3067
        %3069 = vrot.lane.b32.xlu0 %v1141, 15
        %v3070 = vpop.permute.xlu0 %3069
        %3071 = vrot.lane.b32.xlu0 %v1144, 15
        %v3072 = vpop.permute.xlu0 %3071
        %3073 = vrot.lane.b32.xlu0 %v1146, 15
        %v3074 = vpop.permute.xlu0 %3073
        %3075 = vrot.lane.b32.xlu0 %v1149, 15
        %v3076 = vpop.permute.xlu0 %3075
        %3077 = vrot.lane.b32.xlu0 %v1151, 15
        %v3078 = vpop.permute.xlu0 %3077
        %3079 = vrot.lane.b32.xlu0 %v1154, 15
        %v3080 = vpop.permute.xlu0 %3079
        %3081 = vrot.lane.b32.xlu0 %v1156, 15
        %v3082 = vpop.permute.xlu0 %3081
        %3083 = vrot.lane.b32.xlu0 %v1159, 15
        %v3084 = vpop.permute.xlu0 %3083
        %3085 = vrot.lane.b32.xlu0 %v1161, 15
        %v3086 = vpop.permute.xlu0 %3085
        %3087 = vrot.lane.b32.xlu0 %v1164, 15
        %v3088 = vpop.permute.xlu0 %3087
        %3089 = vrot.lane.b32.xlu0 %v1166, 15
        %v3090 = vpop.permute.xlu0 %3089
        %3091 = vrot.lane.b32.xlu0 %v1366, 15
        %v3092 = vpop.permute.xlu0 %3091
        %3093 = vrot.lane.b32.xlu0 %v1368, 15
        %v3094 = vpop.permute.xlu0 %3093
        %3095 = vrot.lane.b32.xlu0 %v1174, 15
        %v3096 = vpop.permute.xlu0 %3095
        %3097 = vrot.lane.b32.xlu0 %v1176, 15
        %v3098 = vpop.permute.xlu0 %3097
        %3099 = vrot.lane.b32.xlu0 %v1179, 15
        %v3100 = vpop.permute.xlu0 %3099
        %3101 = vrot.lane.b32.xlu0 %v1181, 15
        %v3102 = vpop.permute.xlu0 %3101
        %3103 = vrot.lane.b32.xlu0 %v1184, 15
        %v3104 = vpop.permute.xlu0 %3103
        %3105 = vrot.lane.b32.xlu0 %v1186, 15
        %v3106 = vpop.permute.xlu0 %3105
        %3107 = vrot.lane.b32.xlu0 %v1189, 15
        %v3108 = vpop.permute.xlu0 %3107
        %3109 = vrot.lane.b32.xlu0 %v1191, 15
        %v3110 = vpop.permute.xlu0 %3109
        %3111 = vrot.lane.b32.xlu0 %v1194, 15
        %v3112 = vpop.permute.xlu0 %3111
        %3113 = vrot.lane.b32.xlu0 %v1196, 15
        %v3114 = vpop.permute.xlu0 %3113
        %3115 = vrot.lane.b32.xlu0 %v1199, 15
        %v3116 = vpop.permute.xlu0 %3115
        %3117 = vrot.lane.b32.xlu0 %v1201, 15
        %v3118 = vpop.permute.xlu0 %3117
        %3119 = vrot.lane.b32.xlu0 %v1204, 15
        %v3120 = vpop.permute.xlu0 %3119
        %3121 = vrot.lane.b32.xlu0 %v1206, 15
        %v3122 = vpop.permute.xlu0 %3121
        %3123 = vrot.lane.b32.xlu0 %v1209, 15
        %v3124 = vpop.permute.xlu0 %3123
        %3125 = vrot.lane.b32.xlu0 %v1211, 15
        %v3126 = vpop.permute.xlu0 %3125
        %3127 = vrot.lane.b32.xlu0 %v1214, 15
        %v3128 = vpop.permute.xlu0 %3127
        %3129 = vrot.lane.b32.xlu0 %v1216, 15
        %v3130 = vpop.permute.xlu0 %3129
        %3131 = vrot.lane.b32.xlu0 %v1219, 15
        %v3132 = vpop.permute.xlu0 %3131
        %3133 = vrot.lane.b32.xlu0 %v1221, 15
        %v3134 = vpop.permute.xlu0 %3133
        %3135 = vrot.lane.b32.xlu0 %v1224, 15
        %v3136 = vpop.permute.xlu0 %3135
        %3137 = vrot.lane.b32.xlu0 %v1226, 15
        %v3138 = vpop.permute.xlu0 %3137
        %3139 = vrot.lane.b32.xlu0 %v1229, 15
        %v3140 = vpop.permute.xlu0 %3139
        %3141 = vrot.lane.b32.xlu0 %v1231, 15
        %v3142 = vpop.permute.xlu0 %3141
        %3143 = vrot.lane.b32.xlu0 %v1234, 15
        %v3144 = vpop.permute.xlu0 %3143
        %3145 = vrot.lane.b32.xlu0 %v1236, 15
        %v3146 = vpop.permute.xlu0 %3145
        %3147 = vrot.lane.b32.xlu0 %v1239, 15
        %v3148 = vpop.permute.xlu0 %3147
        %3149 = vrot.lane.b32.xlu0 %v1241, 15
        %v3150 = vpop.permute.xlu0 %3149
        %3151 = vrot.lane.b32.xlu0 %v1244, 15
        %v3152 = vpop.permute.xlu0 %3151
        %3153 = vrot.lane.b32.xlu0 %v1246, 15
        %v3154 = vpop.permute.xlu0 %3153
        %3155 = vrot.lane.b32.xlu0 %v1371, 15
        %v3156 = vpop.permute.xlu0 %3155
        %3157 = vrot.lane.b32.xlu0 %v1373, 15
        %v3158 = vpop.permute.xlu0 %3157
        %3159 = vrot.lane.b32.xlu0 %v1254, 15
        %v3160 = vpop.permute.xlu0 %3159
        %3161 = vrot.lane.b32.xlu0 %v1256, 15
        %v3162 = vpop.permute.xlu0 %3161
        %3163 = vrot.lane.b32.xlu0 %v1259, 15
        %v3164 = vpop.permute.xlu0 %3163
        %3165 = vrot.lane.b32.xlu0 %v1261, 15
        %v3166 = vpop.permute.xlu0 %3165
        %3167 = vrot.lane.b32.xlu0 %v1264, 15
        %v3168 = vpop.permute.xlu0 %3167
        %3169 = vrot.lane.b32.xlu0 %v1266, 15
        %v3170 = vpop.permute.xlu0 %3169
        %3171 = vrot.lane.b32.xlu0 %v1269, 15
        %v3172 = vpop.permute.xlu0 %3171
        %3173 = vrot.lane.b32.xlu0 %v1271, 15
        %v3174 = vpop.permute.xlu0 %3173
        %3175 = vrot.lane.b32.xlu0 %v1274, 15
        %v3176 = vpop.permute.xlu0 %3175
        %3177 = vrot.lane.b32.xlu0 %v1276, 15
        %v3178 = vpop.permute.xlu0 %3177
        %3179 = vrot.lane.b32.xlu0 %v1279, 15
        %v3180 = vpop.permute.xlu0 %3179
        %3181 = vrot.lane.b32.xlu0 %v1281, 15
        %v3182 = vpop.permute.xlu0 %3181
        %3183 = vrot.lane.b32.xlu0 %v1284, 15
        %v3184 = vpop.permute.xlu0 %3183
        %3185 = vrot.lane.b32.xlu0 %v1286, 15
        %v3186 = vpop.permute.xlu0 %3185
        %3187 = vrot.lane.b32.xlu0 %v1289, 15
        %v3188 = vpop.permute.xlu0 %3187
        %3189 = vrot.lane.b32.xlu0 %v1291, 15
        %v3190 = vpop.permute.xlu0 %3189
        %3191 = vrot.lane.b32.xlu0 %v1294, 15
        %v3192 = vpop.permute.xlu0 %3191
        %3193 = vrot.lane.b32.xlu0 %v1296, 15
        %v3194 = vpop.permute.xlu0 %3193
        %3195 = vrot.lane.b32.xlu0 %v1299, 15
        %v3196 = vpop.permute.xlu0 %3195
        %3197 = vrot.lane.b32.xlu0 %v1301, 15
        %v3198 = vpop.permute.xlu0 %3197
        %3199 = vrot.lane.b32.xlu0 %v1304, 15
        %v3200 = vpop.permute.xlu0 %3199
        %3201 = vrot.lane.b32.xlu0 %v1306, 15
        %v3202 = vpop.permute.xlu0 %3201
        %3203 = vrot.lane.b32.xlu0 %v1309, 15
        %v3204 = vpop.permute.xlu0 %3203
        %3205 = vrot.lane.b32.xlu0 %v1311, 15
        %v3206 = vpop.permute.xlu0 %3205
        %3207 = vrot.lane.b32.xlu0 %v1314, 15
        %v3208 = vpop.permute.xlu0 %3207
        %3209 = vrot.lane.b32.xlu0 %v1316, 15
        %v3210 = vpop.permute.xlu0 %3209
        %3211 = vrot.lane.b32.xlu0 %v1319, 15
        %v3212 = vpop.permute.xlu0 %3211
        %3213 = vrot.lane.b32.xlu0 %v1321, 15
        %v3214 = vpop.permute.xlu0 %3213
        %3215 = vrot.lane.b32.xlu0 %v1324, 15
        %v3216 = vpop.permute.xlu0 %3215
        %3217 = vrot.lane.b32.xlu0 %v1326, 15
        %v3218 = vpop.permute.xlu0 %3217
        %3219 = vrot.lane.b32.xlu0 %v1376, 15
        %v3220 = vpop.permute.xlu0 %3219
        %3221 = vrot.lane.b32.xlu0 %v1378, 15
        %v3222 = vpop.permute.xlu0 %3221
        %3351 = vrot.lane.b32.xlu0 %v283, 18
        %v3352 = vpop.permute.xlu0 %3351
        %3353 = vrot.lane.b32.xlu0 %v284, 18
        %v3354 = vpop.permute.xlu0 %3353
        %3355 = vrot.lane.b32.xlu0 %v286, 18
        %v3356 = vpop.permute.xlu0 %3355
        %3357 = vrot.lane.b32.xlu0 %v287, 18
        %v3358 = vpop.permute.xlu0 %3357
        %3359 = vrot.lane.b32.xlu0 %v289, 18
        %v3360 = vpop.permute.xlu0 %3359
        %3361 = vrot.lane.b32.xlu0 %v290, 18
        %v3362 = vpop.permute.xlu0 %3361
        %3363 = vrot.lane.b32.xlu0 %v292, 18
        %v3364 = vpop.permute.xlu0 %3363
        %3365 = vrot.lane.b32.xlu0 %v293, 18
        %v3366 = vpop.permute.xlu0 %3365
        %3367 = vrot.lane.b32.xlu0 %v295, 18
        %v3368 = vpop.permute.xlu0 %3367
        %3369 = vrot.lane.b32.xlu0 %v296, 18
        %v3370 = vpop.permute.xlu0 %3369
        %3371 = vrot.lane.b32.xlu0 %v298, 18
        %v3372 = vpop.permute.xlu0 %3371
        %3373 = vrot.lane.b32.xlu0 %v299, 18
        %v3374 = vpop.permute.xlu0 %3373
        %3375 = vrot.lane.b32.xlu0 %v301, 18
        %v3376 = vpop.permute.xlu0 %3375
        %3377 = vrot.lane.b32.xlu0 %v302, 18
        %v3378 = vpop.permute.xlu0 %3377
        %3379 = vrot.lane.b32.xlu0 %v304, 18
        %v3380 = vpop.permute.xlu0 %3379
        %3381 = vrot.lane.b32.xlu0 %v305, 18
        %v3382 = vpop.permute.xlu0 %3381
        %3383 = vrot.lane.b32.xlu0 %v307, 18
        %v3384 = vpop.permute.xlu0 %3383
        %3385 = vrot.lane.b32.xlu0 %v308, 18
        %v3386 = vpop.permute.xlu0 %3385
        %3387 = vrot.lane.b32.xlu0 %v310, 18
        %v3388 = vpop.permute.xlu0 %3387
        %3389 = vrot.lane.b32.xlu0 %v311, 18
        %v3390 = vpop.permute.xlu0 %3389
        %3391 = vrot.lane.b32.xlu0 %v313, 18
        %v3392 = vpop.permute.xlu0 %3391
        %3393 = vrot.lane.b32.xlu0 %v314, 18
        %v3394 = vpop.permute.xlu0 %3393
        %3395 = vrot.lane.b32.xlu0 %v316, 18
        %v3396 = vpop.permute.xlu0 %3395
        %3397 = vrot.lane.b32.xlu0 %v317, 18
        %v3398 = vpop.permute.xlu0 %3397
        %3399 = vrot.lane.b32.xlu0 %v319, 18
        %v3400 = vpop.permute.xlu0 %3399
        %3401 = vrot.lane.b32.xlu0 %v320, 18
        %v3402 = vpop.permute.xlu0 %3401
        %3403 = vrot.lane.b32.xlu0 %v322, 18
        %v3404 = vpop.permute.xlu0 %3403
        %3405 = vrot.lane.b32.xlu0 %v323, 18
        %v3406 = vpop.permute.xlu0 %3405
        %3407 = vrot.lane.b32.xlu0 %v325, 18
        %v3408 = vpop.permute.xlu0 %3407
        %3409 = vrot.lane.b32.xlu0 %v326, 18
        %v3410 = vpop.permute.xlu0 %3409
        %3411 = vrot.lane.b32.xlu0 %v328, 18
        %v3412 = vpop.permute.xlu0 %3411
        %3413 = vrot.lane.b32.xlu0 %v329, 18
        %v3414 = vpop.permute.xlu0 %3413
        %3415 = vrot.lane.b32.xlu0 %v337, 18
        %v3416 = vpop.permute.xlu0 %3415
        %3417 = vrot.lane.b32.xlu0 %v338, 18
        %v3418 = vpop.permute.xlu0 %3417
        %3419 = vrot.lane.b32.xlu0 %v340, 18
        %v3420 = vpop.permute.xlu0 %3419
        %3421 = vrot.lane.b32.xlu0 %v341, 18
        %v3422 = vpop.permute.xlu0 %3421
        %3423 = vrot.lane.b32.xlu0 %v343, 18
        %v3424 = vpop.permute.xlu0 %3423
        %3425 = vrot.lane.b32.xlu0 %v344, 18
        %v3426 = vpop.permute.xlu0 %3425
        %3427 = vrot.lane.b32.xlu0 %v346, 18
        %v3428 = vpop.permute.xlu0 %3427
        %3429 = vrot.lane.b32.xlu0 %v347, 18
        %v3430 = vpop.permute.xlu0 %3429
        %3431 = vrot.lane.b32.xlu0 %v349, 18
        %v3432 = vpop.permute.xlu0 %3431
        %3433 = vrot.lane.b32.xlu0 %v350, 18
        %v3434 = vpop.permute.xlu0 %3433
        %3435 = vrot.lane.b32.xlu0 %v352, 18
        %v3436 = vpop.permute.xlu0 %3435
        %3437 = vrot.lane.b32.xlu0 %v353, 18
        %v3438 = vpop.permute.xlu0 %3437
        %3439 = vrot.lane.b32.xlu0 %v355, 18
        %v3440 = vpop.permute.xlu0 %3439
        %3441 = vrot.lane.b32.xlu0 %v356, 18
        %v3442 = vpop.permute.xlu0 %3441
        %3443 = vrot.lane.b32.xlu0 %v358, 18
        %v3444 = vpop.permute.xlu0 %3443
        %3445 = vrot.lane.b32.xlu0 %v359, 18
        %v3446 = vpop.permute.xlu0 %3445
        %3447 = vrot.lane.b32.xlu0 %v361, 18
        %v3448 = vpop.permute.xlu0 %3447
        %3449 = vrot.lane.b32.xlu0 %v362, 18
        %v3450 = vpop.permute.xlu0 %3449
        %3451 = vrot.lane.b32.xlu0 %v364, 18
        %v3452 = vpop.permute.xlu0 %3451
        %3453 = vrot.lane.b32.xlu0 %v365, 18
        %v3454 = vpop.permute.xlu0 %3453
        %3455 = vrot.lane.b32.xlu0 %v367, 18
        %v3456 = vpop.permute.xlu0 %3455
        %3457 = vrot.lane.b32.xlu0 %v368, 18
        %v3458 = vpop.permute.xlu0 %3457
        %3459 = vrot.lane.b32.xlu0 %v370, 18
        %v3460 = vpop.permute.xlu0 %3459
        %3461 = vrot.lane.b32.xlu0 %v371, 18
        %v3462 = vpop.permute.xlu0 %3461
        %3463 = vrot.lane.b32.xlu0 %v373, 18
        %v3464 = vpop.permute.xlu0 %3463
        %3465 = vrot.lane.b32.xlu0 %v374, 18
        %v3466 = vpop.permute.xlu0 %3465
        %3467 = vrot.lane.b32.xlu0 %v376, 18
        %v3468 = vpop.permute.xlu0 %3467
        %3469 = vrot.lane.b32.xlu0 %v377, 18
        %v3470 = vpop.permute.xlu0 %3469
        %3471 = vrot.lane.b32.xlu0 %v379, 18
        %v3472 = vpop.permute.xlu0 %3471
        %3473 = vrot.lane.b32.xlu0 %v380, 18
        %v3474 = vpop.permute.xlu0 %3473
        %3475 = vrot.lane.b32.xlu0 %v382, 18
        %v3476 = vpop.permute.xlu0 %3475
        %3477 = vrot.lane.b32.xlu0 %v383, 18
        %v3478 = vpop.permute.xlu0 %3477
        %3479 = vrot.lane.b32.xlu0 %v391, 18
        %v3480 = vpop.permute.xlu0 %3479
        %3481 = vrot.lane.b32.xlu0 %v392, 18
        %v3482 = vpop.permute.xlu0 %3481
        %3483 = vrot.lane.b32.xlu0 %v394, 18
        %v3484 = vpop.permute.xlu0 %3483
        %3485 = vrot.lane.b32.xlu0 %v395, 18
        %v3486 = vpop.permute.xlu0 %3485
        %3487 = vrot.lane.b32.xlu0 %v397, 18
        %v3488 = vpop.permute.xlu0 %3487
        %3489 = vrot.lane.b32.xlu0 %v398, 18
        %v3490 = vpop.permute.xlu0 %3489
        %3491 = vrot.lane.b32.xlu0 %v400, 18
        %v3492 = vpop.permute.xlu0 %3491
        %3493 = vrot.lane.b32.xlu0 %v401, 18
        %v3494 = vpop.permute.xlu0 %3493
        %3495 = vrot.lane.b32.xlu0 %v403, 18
        %v3496 = vpop.permute.xlu0 %3495
        %3497 = vrot.lane.b32.xlu0 %v404, 18
        %v3498 = vpop.permute.xlu0 %3497
        %3499 = vrot.lane.b32.xlu0 %v406, 18
        %v3500 = vpop.permute.xlu0 %3499
        %3501 = vrot.lane.b32.xlu0 %v407, 18
        %v3502 = vpop.permute.xlu0 %3501
        %3503 = vrot.lane.b32.xlu0 %v409, 18
        %v3504 = vpop.permute.xlu0 %3503
        %3505 = vrot.lane.b32.xlu0 %v410, 18
        %v3506 = vpop.permute.xlu0 %3505
        %3507 = vrot.lane.b32.xlu0 %v412, 18
        %v3508 = vpop.permute.xlu0 %3507
        %3509 = vrot.lane.b32.xlu0 %v413, 18
        %v3510 = vpop.permute.xlu0 %3509
        %3511 = vrot.lane.b32.xlu0 %v415, 18
        %v3512 = vpop.permute.xlu0 %3511
        %3513 = vrot.lane.b32.xlu0 %v416, 18
        %v3514 = vpop.permute.xlu0 %3513
        %3515 = vrot.lane.b32.xlu0 %v418, 18
        %v3516 = vpop.permute.xlu0 %3515
        %3517 = vrot.lane.b32.xlu0 %v419, 18
        %v3518 = vpop.permute.xlu0 %3517
        %3519 = vrot.lane.b32.xlu0 %v421, 18
        %v3520 = vpop.permute.xlu0 %3519
        %3521 = vrot.lane.b32.xlu0 %v422, 18
        %v3522 = vpop.permute.xlu0 %3521
        %3523 = vrot.lane.b32.xlu0 %v424, 18
        %v3524 = vpop.permute.xlu0 %3523
        %3525 = vrot.lane.b32.xlu0 %v425, 18
        %v3526 = vpop.permute.xlu0 %3525
        %3527 = vrot.lane.b32.xlu0 %v427, 18
        %v3528 = vpop.permute.xlu0 %3527
        %3529 = vrot.lane.b32.xlu0 %v428, 18
        %v3530 = vpop.permute.xlu0 %3529
        %3531 = vrot.lane.b32.xlu0 %v430, 18
        %v3532 = vpop.permute.xlu0 %3531
        %3533 = vrot.lane.b32.xlu0 %v431, 18
        %v3534 = vpop.permute.xlu0 %3533
        %3535 = vrot.lane.b32.xlu0 %v433, 18
        %v3536 = vpop.permute.xlu0 %3535
        %3537 = vrot.lane.b32.xlu0 %v434, 18
        %v3538 = vpop.permute.xlu0 %3537
        %3539 = vrot.lane.b32.xlu0 %v436, 18
        %v3540 = vpop.permute.xlu0 %3539
        %3541 = vrot.lane.b32.xlu0 %v437, 18
        %v3542 = vpop.permute.xlu0 %3541
        %3543 = vrot.lane.b32.xlu0 %v445, 18
        %v3544 = vpop.permute.xlu0 %3543
        %3545 = vrot.lane.b32.xlu0 %v446, 18
        %v3546 = vpop.permute.xlu0 %3545
        %3547 = vrot.lane.b32.xlu0 %v448, 18
        %v3548 = vpop.permute.xlu0 %3547
        %3549 = vrot.lane.b32.xlu0 %v449, 18
        %v3550 = vpop.permute.xlu0 %3549
        %3551 = vrot.lane.b32.xlu0 %v451, 18
        %v3552 = vpop.permute.xlu0 %3551
        %3553 = vrot.lane.b32.xlu0 %v452, 18
        %v3554 = vpop.permute.xlu0 %3553
        %3555 = vrot.lane.b32.xlu0 %v454, 18
        %v3556 = vpop.permute.xlu0 %3555
        %3557 = vrot.lane.b32.xlu0 %v455, 18
        %v3558 = vpop.permute.xlu0 %3557
        %3559 = vrot.lane.b32.xlu0 %v457, 18
        %v3560 = vpop.permute.xlu0 %3559
        %3561 = vrot.lane.b32.xlu0 %v458, 18
        %v3562 = vpop.permute.xlu0 %3561
        %3563 = vrot.lane.b32.xlu0 %v460, 18
        %v3564 = vpop.permute.xlu0 %3563
        %3565 = vrot.lane.b32.xlu0 %v461, 18
        %v3566 = vpop.permute.xlu0 %3565
        %3567 = vrot.lane.b32.xlu0 %v463, 18
        %v3568 = vpop.permute.xlu0 %3567
        %3569 = vrot.lane.b32.xlu0 %v464, 18
        %v3570 = vpop.permute.xlu0 %3569
        %3571 = vrot.lane.b32.xlu0 %v466, 18
        %v3572 = vpop.permute.xlu0 %3571
        %3573 = vrot.lane.b32.xlu0 %v467, 18
        %v3574 = vpop.permute.xlu0 %3573
        %3575 = vrot.lane.b32.xlu0 %v469, 18
        %v3576 = vpop.permute.xlu0 %3575
        %3577 = vrot.lane.b32.xlu0 %v470, 18
        %v3578 = vpop.permute.xlu0 %3577
        %3579 = vrot.lane.b32.xlu0 %v472, 18
        %v3580 = vpop.permute.xlu0 %3579
        %3581 = vrot.lane.b32.xlu0 %v473, 18
        %v3582 = vpop.permute.xlu0 %3581
        %3583 = vrot.lane.b32.xlu0 %v475, 18
        %v3584 = vpop.permute.xlu0 %3583
        %3585 = vrot.lane.b32.xlu0 %v476, 18
        %v3586 = vpop.permute.xlu0 %3585
        %3587 = vrot.lane.b32.xlu0 %v478, 18
        %v3588 = vpop.permute.xlu0 %3587
        %3589 = vrot.lane.b32.xlu0 %v479, 18
        %v3590 = vpop.permute.xlu0 %3589
        %3591 = vrot.lane.b32.xlu0 %v481, 18
        %v3592 = vpop.permute.xlu0 %3591
        %3593 = vrot.lane.b32.xlu0 %v482, 18
        %v3594 = vpop.permute.xlu0 %3593
        %3595 = vrot.lane.b32.xlu0 %v484, 18
        %v3596 = vpop.permute.xlu0 %3595
        %3597 = vrot.lane.b32.xlu0 %v485, 18
        %v3598 = vpop.permute.xlu0 %3597
        %3599 = vrot.lane.b32.xlu0 %v487, 18
        %v3600 = vpop.permute.xlu0 %3599
        %3601 = vrot.lane.b32.xlu0 %v488, 18
        %v3602 = vpop.permute.xlu0 %3601
        %3603 = vrot.lane.b32.xlu0 %v490, 18
        %v3604 = vpop.permute.xlu0 %3603
        %3605 = vrot.lane.b32.xlu0 %v491, 18
        %v3606 = vpop.permute.xlu0 %3605
        %3735 = vrot.lane.b32.xlu0 %v698, 21
        %v3736 = vpop.permute.xlu0 %3735
        %3737 = vrot.lane.b32.xlu0 %v700, 21
        %v3738 = vpop.permute.xlu0 %3737
        %3739 = vrot.lane.b32.xlu0 %v703, 21
        %v3740 = vpop.permute.xlu0 %3739
        %3741 = vrot.lane.b32.xlu0 %v705, 21
        %v3742 = vpop.permute.xlu0 %3741
        %3743 = vrot.lane.b32.xlu0 %v708, 21
        %v3744 = vpop.permute.xlu0 %3743
        %3745 = vrot.lane.b32.xlu0 %v710, 21
        %v3746 = vpop.permute.xlu0 %3745
        %3747 = vrot.lane.b32.xlu0 %v713, 21
        %v3748 = vpop.permute.xlu0 %3747
        %3749 = vrot.lane.b32.xlu0 %v715, 21
        %v3750 = vpop.permute.xlu0 %3749
        %3751 = vrot.lane.b32.xlu0 %v718, 21
        %v3752 = vpop.permute.xlu0 %3751
        %3753 = vrot.lane.b32.xlu0 %v720, 21
        %v3754 = vpop.permute.xlu0 %3753
        %3755 = vrot.lane.b32.xlu0 %v723, 21
        %v3756 = vpop.permute.xlu0 %3755
        %3757 = vrot.lane.b32.xlu0 %v725, 21
        %v3758 = vpop.permute.xlu0 %3757
        %3759 = vrot.lane.b32.xlu0 %v728, 21
        %v3760 = vpop.permute.xlu0 %3759
        %3761 = vrot.lane.b32.xlu0 %v730, 21
        %v3762 = vpop.permute.xlu0 %3761
        %3763 = vrot.lane.b32.xlu0 %v733, 21
        %v3764 = vpop.permute.xlu0 %3763
        %3765 = vrot.lane.b32.xlu0 %v735, 21
        %v3766 = vpop.permute.xlu0 %3765
        %3767 = vrot.lane.b32.xlu0 %v738, 21
        %v3768 = vpop.permute.xlu0 %3767
        %3769 = vrot.lane.b32.xlu0 %v740, 21
        %v3770 = vpop.permute.xlu0 %3769
        %3771 = vrot.lane.b32.xlu0 %v743, 21
        %v3772 = vpop.permute.xlu0 %3771
        %3773 = vrot.lane.b32.xlu0 %v745, 21
        %v3774 = vpop.permute.xlu0 %3773
        %3775 = vrot.lane.b32.xlu0 %v748, 21
        %v3776 = vpop.permute.xlu0 %3775
        %3777 = vrot.lane.b32.xlu0 %v750, 21
        %v3778 = vpop.permute.xlu0 %3777
        %3779 = vrot.lane.b32.xlu0 %v753, 21
        %v3780 = vpop.permute.xlu0 %3779
        %3781 = vrot.lane.b32.xlu0 %v755, 21
        %v3782 = vpop.permute.xlu0 %3781
        %3783 = vrot.lane.b32.xlu0 %v758, 21
        %v3784 = vpop.permute.xlu0 %3783
        %3785 = vrot.lane.b32.xlu0 %v760, 21
        %v3786 = vpop.permute.xlu0 %3785
        %3787 = vrot.lane.b32.xlu0 %v763, 21
        %v3788 = vpop.permute.xlu0 %3787
        %3789 = vrot.lane.b32.xlu0 %v765, 21
        %v3790 = vpop.permute.xlu0 %3789
        %3791 = vrot.lane.b32.xlu0 %v1341, 21
        %v3792 = vpop.permute.xlu0 %3791
        %3793 = vrot.lane.b32.xlu0 %v1343, 21
        %v3794 = vpop.permute.xlu0 %3793
        %3795 = vrot.lane.b32.xlu0 %v1393, 21
        %v3796 = vpop.permute.xlu0 %3795
        %3797 = vrot.lane.b32.xlu0 %v1395, 21
        %v3798 = vpop.permute.xlu0 %3797
        %3799 = vrot.lane.b32.xlu0 %v778, 21
        %v3800 = vpop.permute.xlu0 %3799
        %3801 = vrot.lane.b32.xlu0 %v780, 21
        %v3802 = vpop.permute.xlu0 %3801
        %3803 = vrot.lane.b32.xlu0 %v783, 21
        %v3804 = vpop.permute.xlu0 %3803
        %3805 = vrot.lane.b32.xlu0 %v785, 21
        %v3806 = vpop.permute.xlu0 %3805
        %3807 = vrot.lane.b32.xlu0 %v788, 21
        %v3808 = vpop.permute.xlu0 %3807
        %3809 = vrot.lane.b32.xlu0 %v790, 21
        %v3810 = vpop.permute.xlu0 %3809
        %3811 = vrot.lane.b32.xlu0 %v793, 21
        %v3812 = vpop.permute.xlu0 %3811
        %3813 = vrot.lane.b32.xlu0 %v795, 21
        %v3814 = vpop.permute.xlu0 %3813
        %3815 = vrot.lane.b32.xlu0 %v798, 21
        %v3816 = vpop.permute.xlu0 %3815
        %3817 = vrot.lane.b32.xlu0 %v800, 21
        %v3818 = vpop.permute.xlu0 %3817
        %3819 = vrot.lane.b32.xlu0 %v803, 21
        %v3820 = vpop.permute.xlu0 %3819
        %3821 = vrot.lane.b32.xlu0 %v805, 21
        %v3822 = vpop.permute.xlu0 %3821
        %3823 = vrot.lane.b32.xlu0 %v808, 21
        %v3824 = vpop.permute.xlu0 %3823
        %3825 = vrot.lane.b32.xlu0 %v810, 21
        %v3826 = vpop.permute.xlu0 %3825
        %3827 = vrot.lane.b32.xlu0 %v813, 21
        %v3828 = vpop.permute.xlu0 %3827
        %3829 = vrot.lane.b32.xlu0 %v815, 21
        %v3830 = vpop.permute.xlu0 %3829
        %3831 = vrot.lane.b32.xlu0 %v818, 21
        %v3832 = vpop.permute.xlu0 %3831
        %3833 = vrot.lane.b32.xlu0 %v820, 21
        %v3834 = vpop.permute.xlu0 %3833
        %3835 = vrot.lane.b32.xlu0 %v823, 21
        %v3836 = vpop.permute.xlu0 %3835
        %3837 = vrot.lane.b32.xlu0 %v825, 21
        %v3838 = vpop.permute.xlu0 %3837
        %3839 = vrot.lane.b32.xlu0 %v828, 21
        %v3840 = vpop.permute.xlu0 %3839
        %3841 = vrot.lane.b32.xlu0 %v830, 21
        %v3842 = vpop.permute.xlu0 %3841
        %3843 = vrot.lane.b32.xlu0 %v833, 21
        %v3844 = vpop.permute.xlu0 %3843
        %3845 = vrot.lane.b32.xlu0 %v835, 21
        %v3846 = vpop.permute.xlu0 %3845
        %3847 = vrot.lane.b32.xlu0 %v838, 21
        %v3848 = vpop.permute.xlu0 %3847
        %3849 = vrot.lane.b32.xlu0 %v840, 21
        %v3850 = vpop.permute.xlu0 %3849
        %3851 = vrot.lane.b32.xlu0 %v843, 21
        %v3852 = vpop.permute.xlu0 %3851
        %3853 = vrot.lane.b32.xlu0 %v845, 21
        %v3854 = vpop.permute.xlu0 %3853
        %3855 = vrot.lane.b32.xlu0 %v1346, 21
        %v3856 = vpop.permute.xlu0 %3855
        %3857 = vrot.lane.b32.xlu0 %v1348, 21
        %v3858 = vpop.permute.xlu0 %3857
        %3859 = vrot.lane.b32.xlu0 %v1398, 21
        %v3860 = vpop.permute.xlu0 %3859
        %3861 = vrot.lane.b32.xlu0 %v1400, 21
        %v3862 = vpop.permute.xlu0 %3861
        %3863 = vrot.lane.b32.xlu0 %v858, 21
        %v3864 = vpop.permute.xlu0 %3863
        %3865 = vrot.lane.b32.xlu0 %v860, 21
        %v3866 = vpop.permute.xlu0 %3865
        %3867 = vrot.lane.b32.xlu0 %v863, 21
        %v3868 = vpop.permute.xlu0 %3867
        %3869 = vrot.lane.b32.xlu0 %v865, 21
        %v3870 = vpop.permute.xlu0 %3869
        %3871 = vrot.lane.b32.xlu0 %v868, 21
        %v3872 = vpop.permute.xlu0 %3871
        %3873 = vrot.lane.b32.xlu0 %v870, 21
        %v3874 = vpop.permute.xlu0 %3873
        %3875 = vrot.lane.b32.xlu0 %v873, 21
        %v3876 = vpop.permute.xlu0 %3875
        %3877 = vrot.lane.b32.xlu0 %v875, 21
        %v3878 = vpop.permute.xlu0 %3877
        %3879 = vrot.lane.b32.xlu0 %v878, 21
        %v3880 = vpop.permute.xlu0 %3879
        %3881 = vrot.lane.b32.xlu0 %v880, 21
        %v3882 = vpop.permute.xlu0 %3881
        %3883 = vrot.lane.b32.xlu0 %v883, 21
        %v3884 = vpop.permute.xlu0 %3883
        %3885 = vrot.lane.b32.xlu0 %v885, 21
        %v3886 = vpop.permute.xlu0 %3885
        %3887 = vrot.lane.b32.xlu0 %v888, 21
        %v3888 = vpop.permute.xlu0 %3887
        %3889 = vrot.lane.b32.xlu0 %v890, 21
        %v3890 = vpop.permute.xlu0 %3889
        %3891 = vrot.lane.b32.xlu0 %v893, 21
        %v3892 = vpop.permute.xlu0 %3891
        %3893 = vrot.lane.b32.xlu0 %v895, 21
        %v3894 = vpop.permute.xlu0 %3893
        %3895 = vrot.lane.b32.xlu0 %v898, 21
        %v3896 = vpop.permute.xlu0 %3895
        %3897 = vrot.lane.b32.xlu0 %v900, 21
        %v3898 = vpop.permute.xlu0 %3897
        %3899 = vrot.lane.b32.xlu0 %v903, 21
        %v3900 = vpop.permute.xlu0 %3899
        %3901 = vrot.lane.b32.xlu0 %v905, 21
        %v3902 = vpop.permute.xlu0 %3901
        %3903 = vrot.lane.b32.xlu0 %v908, 21
        %v3904 = vpop.permute.xlu0 %3903
        %3905 = vrot.lane.b32.xlu0 %v910, 21
        %v3906 = vpop.permute.xlu0 %3905
        %3907 = vrot.lane.b32.xlu0 %v913, 21
        %v3908 = vpop.permute.xlu0 %3907
        %3909 = vrot.lane.b32.xlu0 %v915, 21
        %v3910 = vpop.permute.xlu0 %3909
        %3911 = vrot.lane.b32.xlu0 %v918, 21
        %v3912 = vpop.permute.xlu0 %3911
        %3913 = vrot.lane.b32.xlu0 %v920, 21
        %v3914 = vpop.permute.xlu0 %3913
        %3915 = vrot.lane.b32.xlu0 %v923, 21
        %v3916 = vpop.permute.xlu0 %3915
        %3917 = vrot.lane.b32.xlu0 %v925, 21
        %v3918 = vpop.permute.xlu0 %3917
        %3919 = vrot.lane.b32.xlu0 %v1351, 21
        %v3920 = vpop.permute.xlu0 %3919
        %3921 = vrot.lane.b32.xlu0 %v1353, 21
        %v3922 = vpop.permute.xlu0 %3921
        %3923 = vrot.lane.b32.xlu0 %v1403, 21
        %v3924 = vpop.permute.xlu0 %3923
        %3925 = vrot.lane.b32.xlu0 %v1405, 21
        %v3926 = vpop.permute.xlu0 %3925
        %3927 = vrot.lane.b32.xlu0 %v938, 21
        %v3928 = vpop.permute.xlu0 %3927
        %3929 = vrot.lane.b32.xlu0 %v940, 21
        %v3930 = vpop.permute.xlu0 %3929
        %3931 = vrot.lane.b32.xlu0 %v943, 21
        %v3932 = vpop.permute.xlu0 %3931
        %3933 = vrot.lane.b32.xlu0 %v945, 21
        %v3934 = vpop.permute.xlu0 %3933
        %3935 = vrot.lane.b32.xlu0 %v948, 21
        %v3936 = vpop.permute.xlu0 %3935
        %3937 = vrot.lane.b32.xlu0 %v950, 21
        %v3938 = vpop.permute.xlu0 %3937
        %3939 = vrot.lane.b32.xlu0 %v953, 21
        %v3940 = vpop.permute.xlu0 %3939
        %3941 = vrot.lane.b32.xlu0 %v955, 21
        %v3942 = vpop.permute.xlu0 %3941
        %3943 = vrot.lane.b32.xlu0 %v958, 21
        %v3944 = vpop.permute.xlu0 %3943
        %3945 = vrot.lane.b32.xlu0 %v960, 21
        %v3946 = vpop.permute.xlu0 %3945
        %3947 = vrot.lane.b32.xlu0 %v963, 21
        %v3948 = vpop.permute.xlu0 %3947
        %3949 = vrot.lane.b32.xlu0 %v965, 21
        %v3950 = vpop.permute.xlu0 %3949
        %3951 = vrot.lane.b32.xlu0 %v968, 21
        %v3952 = vpop.permute.xlu0 %3951
        %3953 = vrot.lane.b32.xlu0 %v970, 21
        %v3954 = vpop.permute.xlu0 %3953
        %3955 = vrot.lane.b32.xlu0 %v973, 21
        %v3956 = vpop.permute.xlu0 %3955
        %3957 = vrot.lane.b32.xlu0 %v975, 21
        %v3958 = vpop.permute.xlu0 %3957
        %3959 = vrot.lane.b32.xlu0 %v978, 21
        %v3960 = vpop.permute.xlu0 %3959
        %3961 = vrot.lane.b32.xlu0 %v980, 21
        %v3962 = vpop.permute.xlu0 %3961
        %3963 = vrot.lane.b32.xlu0 %v983, 21
        %v3964 = vpop.permute.xlu0 %3963
        %3965 = vrot.lane.b32.xlu0 %v985, 21
        %v3966 = vpop.permute.xlu0 %3965
        %3967 = vrot.lane.b32.xlu0 %v988, 21
        %v3968 = vpop.permute.xlu0 %3967
        %3969 = vrot.lane.b32.xlu0 %v990, 21
        %v3970 = vpop.permute.xlu0 %3969
        %3971 = vrot.lane.b32.xlu0 %v993, 21
        %v3972 = vpop.permute.xlu0 %3971
        %3973 = vrot.lane.b32.xlu0 %v995, 21
        %v3974 = vpop.permute.xlu0 %3973
        %3975 = vrot.lane.b32.xlu0 %v998, 21
        %v3976 = vpop.permute.xlu0 %3975
        %3977 = vrot.lane.b32.xlu0 %v1000, 21
        %v3978 = vpop.permute.xlu0 %3977
        %3979 = vrot.lane.b32.xlu0 %v1003, 21
        %v3980 = vpop.permute.xlu0 %3979
        %3981 = vrot.lane.b32.xlu0 %v1005, 21
        %v3982 = vpop.permute.xlu0 %3981
        %3983 = vrot.lane.b32.xlu0 %v1356, 21
        %v3984 = vpop.permute.xlu0 %3983
        %3985 = vrot.lane.b32.xlu0 %v1358, 21
        %v3986 = vpop.permute.xlu0 %3985
        %3987 = vrot.lane.b32.xlu0 %v1408, 21
        %v3988 = vpop.permute.xlu0 %3987
        %3989 = vrot.lane.b32.xlu0 %v1410, 21
        %v3990 = vpop.permute.xlu0 %3989
        %4119 = vrot.lane.b32.xlu0 %v1019, 24
        %v4120 = vpop.permute.xlu0 %4119
        %4121 = vrot.lane.b32.xlu0 %v1021, 24
        %v4122 = vpop.permute.xlu0 %4121
        %4123 = vrot.lane.b32.xlu0 %v1024, 24
        %v4124 = vpop.permute.xlu0 %4123
        %4125 = vrot.lane.b32.xlu0 %v1026, 24
        %v4126 = vpop.permute.xlu0 %4125
        %4127 = vrot.lane.b32.xlu0 %v1029, 24
        %v4128 = vpop.permute.xlu0 %4127
        %4129 = vrot.lane.b32.xlu0 %v1031, 24
        %v4130 = vpop.permute.xlu0 %4129
        %4131 = vrot.lane.b32.xlu0 %v1034, 24
        %v4132 = vpop.permute.xlu0 %4131
        %4133 = vrot.lane.b32.xlu0 %v1036, 24
        %v4134 = vpop.permute.xlu0 %4133
        %4135 = vrot.lane.b32.xlu0 %v1039, 24
        %v4136 = vpop.permute.xlu0 %4135
        %4137 = vrot.lane.b32.xlu0 %v1041, 24
        %v4138 = vpop.permute.xlu0 %4137
        %4139 = vrot.lane.b32.xlu0 %v1044, 24
        %v4140 = vpop.permute.xlu0 %4139
        %4141 = vrot.lane.b32.xlu0 %v1046, 24
        %v4142 = vpop.permute.xlu0 %4141
        %4143 = vrot.lane.b32.xlu0 %v1049, 24
        %v4144 = vpop.permute.xlu0 %4143
        %4145 = vrot.lane.b32.xlu0 %v1051, 24
        %v4146 = vpop.permute.xlu0 %4145
        %4147 = vrot.lane.b32.xlu0 %v1054, 24
        %v4148 = vpop.permute.xlu0 %4147
        %4149 = vrot.lane.b32.xlu0 %v1056, 24
        %v4150 = vpop.permute.xlu0 %4149
        %4151 = vrot.lane.b32.xlu0 %v1059, 24
        %v4152 = vpop.permute.xlu0 %4151
        %4153 = vrot.lane.b32.xlu0 %v1061, 24
        %v4154 = vpop.permute.xlu0 %4153
        %4155 = vrot.lane.b32.xlu0 %v1064, 24
        %v4156 = vpop.permute.xlu0 %4155
        %4157 = vrot.lane.b32.xlu0 %v1066, 24
        %v4158 = vpop.permute.xlu0 %4157
        %4159 = vrot.lane.b32.xlu0 %v1069, 24
        %v4160 = vpop.permute.xlu0 %4159
        %4161 = vrot.lane.b32.xlu0 %v1071, 24
        %v4162 = vpop.permute.xlu0 %4161
        %4163 = vrot.lane.b32.xlu0 %v1074, 24
        %v4164 = vpop.permute.xlu0 %4163
        %4165 = vrot.lane.b32.xlu0 %v1076, 24
        %v4166 = vpop.permute.xlu0 %4165
        %4167 = vrot.lane.b32.xlu0 %v1079, 24
        %v4168 = vpop.permute.xlu0 %4167
        %4169 = vrot.lane.b32.xlu0 %v1081, 24
        %v4170 = vpop.permute.xlu0 %4169
        %4171 = vrot.lane.b32.xlu0 %v1084, 24
        %v4172 = vpop.permute.xlu0 %4171
        %4173 = vrot.lane.b32.xlu0 %v1086, 24
        %v4174 = vpop.permute.xlu0 %4173
        %4175 = vrot.lane.b32.xlu0 %v1361, 24
        %v4176 = vpop.permute.xlu0 %4175
        %4177 = vrot.lane.b32.xlu0 %v1363, 24
        %v4178 = vpop.permute.xlu0 %4177
        %4179 = vrot.lane.b32.xlu0 %v1413, 24
        %v4180 = vpop.permute.xlu0 %4179
        %4181 = vrot.lane.b32.xlu0 %v1415, 24
        %v4182 = vpop.permute.xlu0 %4181
        %4183 = vrot.lane.b32.xlu0 %v1099, 24
        %v4184 = vpop.permute.xlu0 %4183
        %4185 = vrot.lane.b32.xlu0 %v1101, 24
        %v4186 = vpop.permute.xlu0 %4185
        %4187 = vrot.lane.b32.xlu0 %v1104, 24
        %v4188 = vpop.permute.xlu0 %4187
        %4189 = vrot.lane.b32.xlu0 %v1106, 24
        %v4190 = vpop.permute.xlu0 %4189
        %4191 = vrot.lane.b32.xlu0 %v1109, 24
        %v4192 = vpop.permute.xlu0 %4191
        %4193 = vrot.lane.b32.xlu0 %v1111, 24
        %v4194 = vpop.permute.xlu0 %4193
        %4195 = vrot.lane.b32.xlu0 %v1114, 24
        %v4196 = vpop.permute.xlu0 %4195
        %4197 = vrot.lane.b32.xlu0 %v1116, 24
        %v4198 = vpop.permute.xlu0 %4197
        %4199 = vrot.lane.b32.xlu0 %v1119, 24
        %v4200 = vpop.permute.xlu0 %4199
        %4201 = vrot.lane.b32.xlu0 %v1121, 24
        %v4202 = vpop.permute.xlu0 %4201
        %4203 = vrot.lane.b32.xlu0 %v1124, 24
        %v4204 = vpop.permute.xlu0 %4203
        %4205 = vrot.lane.b32.xlu0 %v1126, 24
        %v4206 = vpop.permute.xlu0 %4205
        %4207 = vrot.lane.b32.xlu0 %v1129, 24
        %v4208 = vpop.permute.xlu0 %4207
        %4209 = vrot.lane.b32.xlu0 %v1131, 24
        %v4210 = vpop.permute.xlu0 %4209
        %4211 = vrot.lane.b32.xlu0 %v1134, 24
        %v4212 = vpop.permute.xlu0 %4211
        %4213 = vrot.lane.b32.xlu0 %v1136, 24
        %v4214 = vpop.permute.xlu0 %4213
        %4215 = vrot.lane.b32.xlu0 %v1139, 24
        %v4216 = vpop.permute.xlu0 %4215
        %4217 = vrot.lane.b32.xlu0 %v1141, 24
        %v4218 = vpop.permute.xlu0 %4217
        %4219 = vrot.lane.b32.xlu0 %v1144, 24
        %v4220 = vpop.permute.xlu0 %4219
        %4221 = vrot.lane.b32.xlu0 %v1146, 24
        %v4222 = vpop.permute.xlu0 %4221
        %4223 = vrot.lane.b32.xlu0 %v1149, 24
        %v4224 = vpop.permute.xlu0 %4223
        %4225 = vrot.lane.b32.xlu0 %v1151, 24
        %v4226 = vpop.permute.xlu0 %4225
        %4227 = vrot.lane.b32.xlu0 %v1154, 24
        %v4228 = vpop.permute.xlu0 %4227
        %4229 = vrot.lane.b32.xlu0 %v1156, 24
        %v4230 = vpop.permute.xlu0 %4229
        %4231 = vrot.lane.b32.xlu0 %v1159, 24
        %v4232 = vpop.permute.xlu0 %4231
        %4233 = vrot.lane.b32.xlu0 %v1161, 24
        %v4234 = vpop.permute.xlu0 %4233
        %4235 = vrot.lane.b32.xlu0 %v1164, 24
        %v4236 = vpop.permute.xlu0 %4235
        %4237 = vrot.lane.b32.xlu0 %v1166, 24
        %v4238 = vpop.permute.xlu0 %4237
        %4239 = vrot.lane.b32.xlu0 %v1366, 24
        %v4240 = vpop.permute.xlu0 %4239
        %4241 = vrot.lane.b32.xlu0 %v1368, 24
        %v4242 = vpop.permute.xlu0 %4241
        %4243 = vrot.lane.b32.xlu0 %v1418, 24
        %v4244 = vpop.permute.xlu0 %4243
        %4245 = vrot.lane.b32.xlu0 %v1420, 24
        %v4246 = vpop.permute.xlu0 %4245
        %4247 = vrot.lane.b32.xlu0 %v1179, 24
        %v4248 = vpop.permute.xlu0 %4247
        %4249 = vrot.lane.b32.xlu0 %v1181, 24
        %v4250 = vpop.permute.xlu0 %4249
        %4251 = vrot.lane.b32.xlu0 %v1184, 24
        %v4252 = vpop.permute.xlu0 %4251
        %4253 = vrot.lane.b32.xlu0 %v1186, 24
        %v4254 = vpop.permute.xlu0 %4253
        %4255 = vrot.lane.b32.xlu0 %v1189, 24
        %v4256 = vpop.permute.xlu0 %4255
        %4257 = vrot.lane.b32.xlu0 %v1191, 24
        %v4258 = vpop.permute.xlu0 %4257
        %4259 = vrot.lane.b32.xlu0 %v1194, 24
        %v4260 = vpop.permute.xlu0 %4259
        %4261 = vrot.lane.b32.xlu0 %v1196, 24
        %v4262 = vpop.permute.xlu0 %4261
        %4263 = vrot.lane.b32.xlu0 %v1199, 24
        %v4264 = vpop.permute.xlu0 %4263
        %4265 = vrot.lane.b32.xlu0 %v1201, 24
        %v4266 = vpop.permute.xlu0 %4265
        %4267 = vrot.lane.b32.xlu0 %v1204, 24
        %v4268 = vpop.permute.xlu0 %4267
        %4269 = vrot.lane.b32.xlu0 %v1206, 24
        %v4270 = vpop.permute.xlu0 %4269
        %4271 = vrot.lane.b32.xlu0 %v1209, 24
        %v4272 = vpop.permute.xlu0 %4271
        %4273 = vrot.lane.b32.xlu0 %v1211, 24
        %v4274 = vpop.permute.xlu0 %4273
        %4275 = vrot.lane.b32.xlu0 %v1214, 24
        %v4276 = vpop.permute.xlu0 %4275
        %4277 = vrot.lane.b32.xlu0 %v1216, 24
        %v4278 = vpop.permute.xlu0 %4277
        %4279 = vrot.lane.b32.xlu0 %v1219, 24
        %v4280 = vpop.permute.xlu0 %4279
        %4281 = vrot.lane.b32.xlu0 %v1221, 24
        %v4282 = vpop.permute.xlu0 %4281
        %4283 = vrot.lane.b32.xlu0 %v1224, 24
        %v4284 = vpop.permute.xlu0 %4283
        %4285 = vrot.lane.b32.xlu0 %v1226, 24
        %v4286 = vpop.permute.xlu0 %4285
        %4287 = vrot.lane.b32.xlu0 %v1229, 24
        %v4288 = vpop.permute.xlu0 %4287
        %4289 = vrot.lane.b32.xlu0 %v1231, 24
        %v4290 = vpop.permute.xlu0 %4289
        %4291 = vrot.lane.b32.xlu0 %v1234, 24
        %v4292 = vpop.permute.xlu0 %4291
        %4293 = vrot.lane.b32.xlu0 %v1236, 24
        %v4294 = vpop.permute.xlu0 %4293
        %4295 = vrot.lane.b32.xlu0 %v1239, 24
        %v4296 = vpop.permute.xlu0 %4295
        %4297 = vrot.lane.b32.xlu0 %v1241, 24
        %v4298 = vpop.permute.xlu0 %4297
        %4299 = vrot.lane.b32.xlu0 %v1244, 24
        %v4300 = vpop.permute.xlu0 %4299
        %4301 = vrot.lane.b32.xlu0 %v1246, 24
        %v4302 = vpop.permute.xlu0 %4301
        %4303 = vrot.lane.b32.xlu0 %v1371, 24
        %v4304 = vpop.permute.xlu0 %4303
        %4305 = vrot.lane.b32.xlu0 %v1373, 24
        %v4306 = vpop.permute.xlu0 %4305
        %4307 = vrot.lane.b32.xlu0 %v1423, 24
        %v4308 = vpop.permute.xlu0 %4307
        %4309 = vrot.lane.b32.xlu0 %v1425, 24
        %v4310 = vpop.permute.xlu0 %4309
        %4311 = vrot.lane.b32.xlu0 %v1259, 24
        %v4312 = vpop.permute.xlu0 %4311
        %4313 = vrot.lane.b32.xlu0 %v1261, 24
        %v4314 = vpop.permute.xlu0 %4313
        %4315 = vrot.lane.b32.xlu0 %v1264, 24
        %v4316 = vpop.permute.xlu0 %4315
        %4317 = vrot.lane.b32.xlu0 %v1266, 24
        %v4318 = vpop.permute.xlu0 %4317
        %4319 = vrot.lane.b32.xlu0 %v1269, 24
        %v4320 = vpop.permute.xlu0 %4319
        %4321 = vrot.lane.b32.xlu0 %v1271, 24
        %v4322 = vpop.permute.xlu0 %4321
        %4323 = vrot.lane.b32.xlu0 %v1274, 24
        %v4324 = vpop.permute.xlu0 %4323
        %4325 = vrot.lane.b32.xlu0 %v1276, 24
        %v4326 = vpop.permute.xlu0 %4325
        %4327 = vrot.lane.b32.xlu0 %v1279, 24
        %v4328 = vpop.permute.xlu0 %4327
        %4329 = vrot.lane.b32.xlu0 %v1281, 24
        %v4330 = vpop.permute.xlu0 %4329
        %4331 = vrot.lane.b32.xlu0 %v1284, 24
        %v4332 = vpop.permute.xlu0 %4331
        %4333 = vrot.lane.b32.xlu0 %v1286, 24
        %v4334 = vpop.permute.xlu0 %4333
        %4335 = vrot.lane.b32.xlu0 %v1289, 24
        %v4336 = vpop.permute.xlu0 %4335
        %4337 = vrot.lane.b32.xlu0 %v1291, 24
        %v4338 = vpop.permute.xlu0 %4337
        %4339 = vrot.lane.b32.xlu0 %v1294, 24
        %v4340 = vpop.permute.xlu0 %4339
        %4341 = vrot.lane.b32.xlu0 %v1296, 24
        %v4342 = vpop.permute.xlu0 %4341
        %4343 = vrot.lane.b32.xlu0 %v1299, 24
        %v4344 = vpop.permute.xlu0 %4343
        %4345 = vrot.lane.b32.xlu0 %v1301, 24
        %v4346 = vpop.permute.xlu0 %4345
        %4347 = vrot.lane.b32.xlu0 %v1304, 24
        %v4348 = vpop.permute.xlu0 %4347
        %4349 = vrot.lane.b32.xlu0 %v1306, 24
        %v4350 = vpop.permute.xlu0 %4349
        %4351 = vrot.lane.b32.xlu0 %v1309, 24
        %v4352 = vpop.permute.xlu0 %4351
        %4353 = vrot.lane.b32.xlu0 %v1311, 24
        %v4354 = vpop.permute.xlu0 %4353
        %4355 = vrot.lane.b32.xlu0 %v1314, 24
        %v4356 = vpop.permute.xlu0 %4355
        %4357 = vrot.lane.b32.xlu0 %v1316, 24
        %v4358 = vpop.permute.xlu0 %4357
        %4359 = vrot.lane.b32.xlu0 %v1319, 24
        %v4360 = vpop.permute.xlu0 %4359
        %4361 = vrot.lane.b32.xlu0 %v1321, 24
        %v4362 = vpop.permute.xlu0 %4361
        %4363 = vrot.lane.b32.xlu0 %v1324, 24
        %v4364 = vpop.permute.xlu0 %4363
        %4365 = vrot.lane.b32.xlu0 %v1326, 24
        %v4366 = vpop.permute.xlu0 %4365
        %4367 = vrot.lane.b32.xlu0 %v1376, 24
        %v4368 = vpop.permute.xlu0 %4367
        %4369 = vrot.lane.b32.xlu0 %v1378, 24
        %v4370 = vpop.permute.xlu0 %4369
        %4371 = vrot.lane.b32.xlu0 %v1428, 24
        %v4372 = vpop.permute.xlu0 %4371
        %4373 = vrot.lane.b32.xlu0 %v1430, 24
        %v4374 = vpop.permute.xlu0 %4373
        %vm4503 = vcmask 23552
        %v4504 = vsel %vm4503, %v277, %v1432
        %v4505 = vsel %vm4503, %v278, %v1434
        %v4506 = vsel %vm4503, %v280, %v1436
        %v4507 = vsel %vm4503, %v281, %v1438
        %v4508 = vsel %vm4503, %v283, %v1440
        %v4509 = vsel %vm4503, %v284, %v1442
        %v4510 = vsel %vm4503, %v286, %v1444
        %v4511 = vsel %vm4503, %v287, %v1446
        %v4512 = vsel %vm4503, %v289, %v1448
        %v4513 = vsel %vm4503, %v290, %v1450
        %v4514 = vsel %vm4503, %v292, %v1452
        %v4515 = vsel %vm4503, %v293, %v1454
        %v4516 = vsel %vm4503, %v295, %v1456
        %v4517 = vsel %vm4503, %v296, %v1458
        %v4518 = vsel %vm4503, %v298, %v1460
        %v4519 = vsel %vm4503, %v299, %v1462
        %v4520 = vsel %vm4503, %v301, %v1464
        %v4521 = vsel %vm4503, %v302, %v1466
        %v4522 = vsel %vm4503, %v304, %v1468
        %v4523 = vsel %vm4503, %v305, %v1470
        %v4524 = vsel %vm4503, %v307, %v1472
        %v4525 = vsel %vm4503, %v308, %v1474
        %v4526 = vsel %vm4503, %v310, %v1476
        %v4527 = vsel %vm4503, %v311, %v1478
        %v4528 = vsel %vm4503, %v313, %v1480
        %v4529 = vsel %vm4503, %v314, %v1482
        %v4530 = vsel %vm4503, %v316, %v1484
        %v4531 = vsel %vm4503, %v317, %v1486
        %v4532 = vsel %vm4503, %v319, %v1488
        %v4533 = vsel %vm4503, %v320, %v1490
        %v4534 = vsel %vm4503, %v322, %v1492
        %v4535 = vsel %vm4503, %v323, %v1494
        %v4536 = vsel %vm4503, %v331, %v1496
        %v4537 = vsel %vm4503, %v332, %v1498
        %v4538 = vsel %vm4503, %v334, %v1500
        %v4539 = vsel %vm4503, %v335, %v1502
        %v4540 = vsel %vm4503, %v337, %v1504
        %v4541 = vsel %vm4503, %v338, %v1506
        %v4542 = vsel %vm4503, %v340, %v1508
        %v4543 = vsel %vm4503, %v341, %v1510
        %v4544 = vsel %vm4503, %v343, %v1512
        %v4545 = vsel %vm4503, %v344, %v1514
        %v4546 = vsel %vm4503, %v346, %v1516
        %v4547 = vsel %vm4503, %v347, %v1518
        %v4548 = vsel %vm4503, %v349, %v1520
        %v4549 = vsel %vm4503, %v350, %v1522
        %v4550 = vsel %vm4503, %v352, %v1524
        %v4551 = vsel %vm4503, %v353, %v1526
        %v4552 = vsel %vm4503, %v355, %v1528
        %v4553 = vsel %vm4503, %v356, %v1530
        %v4554 = vsel %vm4503, %v358, %v1532
        %v4555 = vsel %vm4503, %v359, %v1534
        %v4556 = vsel %vm4503, %v361, %v1536
        %v4557 = vsel %vm4503, %v362, %v1538
        %v4558 = vsel %vm4503, %v364, %v1540
        %v4559 = vsel %vm4503, %v365, %v1542
        %v4560 = vsel %vm4503, %v367, %v1544
        %v4561 = vsel %vm4503, %v368, %v1546
        %v4562 = vsel %vm4503, %v370, %v1548
        %v4563 = vsel %vm4503, %v371, %v1550
        %v4564 = vsel %vm4503, %v373, %v1552
        %v4565 = vsel %vm4503, %v374, %v1554
        %v4566 = vsel %vm4503, %v376, %v1556
        %v4567 = vsel %vm4503, %v377, %v1558
        %v4568 = vsel %vm4503, %v385, %v1560
        %v4569 = vsel %vm4503, %v386, %v1562
        %v4570 = vsel %vm4503, %v388, %v1564
        %v4571 = vsel %vm4503, %v389, %v1566
        %v4572 = vsel %vm4503, %v391, %v1568
        %v4573 = vsel %vm4503, %v392, %v1570
        %v4574 = vsel %vm4503, %v394, %v1572
        %v4575 = vsel %vm4503, %v395, %v1574
        %v4576 = vsel %vm4503, %v397, %v1576
        %v4577 = vsel %vm4503, %v398, %v1578
        %v4578 = vsel %vm4503, %v400, %v1580
        %v4579 = vsel %vm4503, %v401, %v1582
        %v4580 = vsel %vm4503, %v403, %v1584
        %v4581 = vsel %vm4503, %v404, %v1586
        %v4582 = vsel %vm4503, %v406, %v1588
        %v4583 = vsel %vm4503, %v407, %v1590
        %v4584 = vsel %vm4503, %v409, %v1592
        %v4585 = vsel %vm4503, %v410, %v1594
        %v4586 = vsel %vm4503, %v412, %v1596
        %v4587 = vsel %vm4503, %v413, %v1598
        %v4588 = vsel %vm4503, %v415, %v1600
        %v4589 = vsel %vm4503, %v416, %v1602
        %v4590 = vsel %vm4503, %v418, %v1604
        %v4591 = vsel %vm4503, %v419, %v1606
        %v4592 = vsel %vm4503, %v421, %v1608
        %v4593 = vsel %vm4503, %v422, %v1610
        %v4594 = vsel %vm4503, %v424, %v1612
        %v4595 = vsel %vm4503, %v425, %v1614
        %v4596 = vsel %vm4503, %v427, %v1616
        %v4597 = vsel %vm4503, %v428, %v1618
        %v4598 = vsel %vm4503, %v430, %v1620
        %v4599 = vsel %vm4503, %v431, %v1622
        %v4600 = vsel %vm4503, %v439, %v1624
        %v4601 = vsel %vm4503, %v440, %v1626
        %v4602 = vsel %vm4503, %v442, %v1628
        %v4603 = vsel %vm4503, %v443, %v1630
        %v4604 = vsel %vm4503, %v445, %v1632
        %v4605 = vsel %vm4503, %v446, %v1634
        %v4606 = vsel %vm4503, %v448, %v1636
        %v4607 = vsel %vm4503, %v449, %v1638
        %v4608 = vsel %vm4503, %v451, %v1640
        %v4609 = vsel %vm4503, %v452, %v1642
        %v4610 = vsel %vm4503, %v454, %v1644
        %v4611 = vsel %vm4503, %v455, %v1646
        %v4612 = vsel %vm4503, %v457, %v1648
        %v4613 = vsel %vm4503, %v458, %v1650
        %v4614 = vsel %vm4503, %v460, %v1652
        %v4615 = vsel %vm4503, %v461, %v1654
        %v4616 = vsel %vm4503, %v463, %v1656
        %v4617 = vsel %vm4503, %v464, %v1658
        %v4618 = vsel %vm4503, %v466, %v1660
        %v4619 = vsel %vm4503, %v467, %v1662
        %v4620 = vsel %vm4503, %v469, %v1664
        %v4621 = vsel %vm4503, %v470, %v1666
        %v4622 = vsel %vm4503, %v472, %v1668
        %v4623 = vsel %vm4503, %v473, %v1670
        %v4624 = vsel %vm4503, %v475, %v1672
        %v4625 = vsel %vm4503, %v476, %v1674
        %v4626 = vsel %vm4503, %v478, %v1676
        %v4627 = vsel %vm4503, %v479, %v1678
        %v4628 = vsel %vm4503, %v481, %v1680
        %v4629 = vsel %vm4503, %v482, %v1682
        %v4630 = vsel %vm4503, %v484, %v1684
        %v4631 = vsel %vm4503, %v485, %v1686
        %vm4632 = vcmask 48128
        %v4633 = vsel %vm4632, %v4504, %v1816
        %v4634 = vsel %vm4632, %v4505, %v1818
        %v4635 = vsel %vm4632, %v4506, %v1820
        %v4636 = vsel %vm4632, %v4507, %v1822
        %v4637 = vsel %vm4632, %v4508, %v1824
        %v4638 = vsel %vm4632, %v4509, %v1826
        %v4639 = vsel %vm4632, %v4510, %v1828
        %v4640 = vsel %vm4632, %v4511, %v1830
        %v4641 = vsel %vm4632, %v4512, %v1832
        %v4642 = vsel %vm4632, %v4513, %v1834
        %v4643 = vsel %vm4632, %v4514, %v1836
        %v4644 = vsel %vm4632, %v4515, %v1838
        %v4645 = vsel %vm4632, %v4516, %v1840
        %v4646 = vsel %vm4632, %v4517, %v1842
        %v4647 = vsel %vm4632, %v4518, %v1844
        %v4648 = vsel %vm4632, %v4519, %v1846
        %v4649 = vsel %vm4632, %v4520, %v1848
        %v4650 = vsel %vm4632, %v4521, %v1850
        %v4651 = vsel %vm4632, %v4522, %v1852
        %v4652 = vsel %vm4632, %v4523, %v1854
        %v4653 = vsel %vm4632, %v4524, %v1856
        %v4654 = vsel %vm4632, %v4525, %v1858
        %v4655 = vsel %vm4632, %v4526, %v1860
        %v4656 = vsel %vm4632, %v4527, %v1862
        %v4657 = vsel %vm4632, %v4528, %v1864
        %v4658 = vsel %vm4632, %v4529, %v1866
        %v4659 = vsel %vm4632, %v4530, %v1868
        %v4660 = vsel %vm4632, %v4531, %v1870
        %v4661 = vsel %vm4632, %v4532, %v1872
        %v4662 = vsel %vm4632, %v4533, %v1874
        %v4663 = vsel %vm4632, %v4534, %v1876
        %v4664 = vsel %vm4632, %v4535, %v1878
        %v4665 = vsel %vm4632, %v4536, %v1880
        %v4666 = vsel %vm4632, %v4537, %v1882
        %v4667 = vsel %vm4632, %v4538, %v1884
        %v4668 = vsel %vm4632, %v4539, %v1886
        %v4669 = vsel %vm4632, %v4540, %v1888
        %v4670 = vsel %vm4632, %v4541, %v1890
        %v4671 = vsel %vm4632, %v4542, %v1892
        %v4672 = vsel %vm4632, %v4543, %v1894
        %v4673 = vsel %vm4632, %v4544, %v1896
        %v4674 = vsel %vm4632, %v4545, %v1898
        %v4675 = vsel %vm4632, %v4546, %v1900
        %v4676 = vsel %vm4632, %v4547, %v1902
        %v4677 = vsel %vm4632, %v4548, %v1904
        %v4678 = vsel %vm4632, %v4549, %v1906
        %v4679 = vsel %vm4632, %v4550, %v1908
        %v4680 = vsel %vm4632, %v4551, %v1910
        %v4681 = vsel %vm4632, %v4552, %v1912
        %v4682 = vsel %vm4632, %v4553, %v1914
        %v4683 = vsel %vm4632, %v4554, %v1916
        %v4684 = vsel %vm4632, %v4555, %v1918
        %v4685 = vsel %vm4632, %v4556, %v1920
        %v4686 = vsel %vm4632, %v4557, %v1922
        %v4687 = vsel %vm4632, %v4558, %v1924
        %v4688 = vsel %vm4632, %v4559, %v1926
        %v4689 = vsel %vm4632, %v4560, %v1928
        %v4690 = vsel %vm4632, %v4561, %v1930
        %v4691 = vsel %vm4632, %v4562, %v1932
        %v4692 = vsel %vm4632, %v4563, %v1934
        %v4693 = vsel %vm4632, %v4564, %v1936
        %v4694 = vsel %vm4632, %v4565, %v1938
        %v4695 = vsel %vm4632, %v4566, %v1940
        %v4696 = vsel %vm4632, %v4567, %v1942
        %v4697 = vsel %vm4632, %v4568, %v1944
        %v4698 = vsel %vm4632, %v4569, %v1946
        %v4699 = vsel %vm4632, %v4570, %v1948
        %v4700 = vsel %vm4632, %v4571, %v1950
        %v4701 = vsel %vm4632, %v4572, %v1952
        %v4702 = vsel %vm4632, %v4573, %v1954
        %v4703 = vsel %vm4632, %v4574, %v1956
        %v4704 = vsel %vm4632, %v4575, %v1958
        %v4705 = vsel %vm4632, %v4576, %v1960
        %v4706 = vsel %vm4632, %v4577, %v1962
        %v4707 = vsel %vm4632, %v4578, %v1964
        %v4708 = vsel %vm4632, %v4579, %v1966
        %v4709 = vsel %vm4632, %v4580, %v1968
        %v4710 = vsel %vm4632, %v4581, %v1970
        %v4711 = vsel %vm4632, %v4582, %v1972
        %v4712 = vsel %vm4632, %v4583, %v1974
        %v4713 = vsel %vm4632, %v4584, %v1976
        %v4714 = vsel %vm4632, %v4585, %v1978
        %v4715 = vsel %vm4632, %v4586, %v1980
        %v4716 = vsel %vm4632, %v4587, %v1982
        %v4717 = vsel %vm4632, %v4588, %v1984
        %v4718 = vsel %vm4632, %v4589, %v1986
        %v4719 = vsel %vm4632, %v4590, %v1988
        %v4720 = vsel %vm4632, %v4591, %v1990
        %v4721 = vsel %vm4632, %v4592, %v1992
        %v4722 = vsel %vm4632, %v4593, %v1994
        %v4723 = vsel %vm4632, %v4594, %v1996
        %v4724 = vsel %vm4632, %v4595, %v1998
        %v4725 = vsel %vm4632, %v4596, %v2000
        %v4726 = vsel %vm4632, %v4597, %v2002
        %v4727 = vsel %vm4632, %v4598, %v2004
        %v4728 = vsel %vm4632, %v4599, %v2006
        %v4729 = vsel %vm4632, %v4600, %v2008
        %v4730 = vsel %vm4632, %v4601, %v2010
        %v4731 = vsel %vm4632, %v4602, %v2012
        %v4732 = vsel %vm4632, %v4603, %v2014
        %v4733 = vsel %vm4632, %v4604, %v2016
        %v4734 = vsel %vm4632, %v4605, %v2018
        %v4735 = vsel %vm4632, %v4606, %v2020
        %v4736 = vsel %vm4632, %v4607, %v2022
        %v4737 = vsel %vm4632, %v4608, %v2024
        %v4738 = vsel %vm4632, %v4609, %v2026
        %v4739 = vsel %vm4632, %v4610, %v2028
        %v4740 = vsel %vm4632, %v4611, %v2030
        %v4741 = vsel %vm4632, %v4612, %v2032
        %v4742 = vsel %vm4632, %v4613, %v2034
        %v4743 = vsel %vm4632, %v4614, %v2036
        %v4744 = vsel %vm4632, %v4615, %v2038
        %v4745 = vsel %vm4632, %v4616, %v2040
        %v4746 = vsel %vm4632, %v4617, %v2042
        %v4747 = vsel %vm4632, %v4618, %v2044
        %v4748 = vsel %vm4632, %v4619, %v2046
        %v4749 = vsel %vm4632, %v4620, %v2048
        %v4750 = vsel %vm4632, %v4621, %v2050
        %v4751 = vsel %vm4632, %v4622, %v2052
        %v4752 = vsel %vm4632, %v4623, %v2054
        %v4753 = vsel %vm4632, %v4624, %v2056
        %v4754 = vsel %vm4632, %v4625, %v2058
        %v4755 = vsel %vm4632, %v4626, %v2060
        %v4756 = vsel %vm4632, %v4627, %v2062
        %v4757 = vsel %vm4632, %v4628, %v2064
        %v4758 = vsel %vm4632, %v4629, %v2066
        %v4759 = vsel %vm4632, %v4630, %v2068
        %v4760 = vsel %vm4632, %v4631, %v2070
        %vm4761 = vcmask 72704
        %v4762 = vsel %vm4761, %v4633, %v2200
        %v4763 = vsel %vm4761, %v4634, %v2202
        %v4764 = vsel %vm4761, %v4635, %v2204
        %v4765 = vsel %vm4761, %v4636, %v2206
        %v4766 = vsel %vm4761, %v4637, %v2208
        %v4767 = vsel %vm4761, %v4638, %v2210
        %v4768 = vsel %vm4761, %v4639, %v2212
        %v4769 = vsel %vm4761, %v4640, %v2214
        %v4770 = vsel %vm4761, %v4641, %v2216
        %v4771 = vsel %vm4761, %v4642, %v2218
        %v4772 = vsel %vm4761, %v4643, %v2220
        %v4773 = vsel %vm4761, %v4644, %v2222
        %v4774 = vsel %vm4761, %v4645, %v2224
        %v4775 = vsel %vm4761, %v4646, %v2226
        %v4776 = vsel %vm4761, %v4647, %v2228
        %v4777 = vsel %vm4761, %v4648, %v2230
        %v4778 = vsel %vm4761, %v4649, %v2232
        %v4779 = vsel %vm4761, %v4650, %v2234
        %v4780 = vsel %vm4761, %v4651, %v2236
        %v4781 = vsel %vm4761, %v4652, %v2238
        %v4782 = vsel %vm4761, %v4653, %v2240
        %v4783 = vsel %vm4761, %v4654, %v2242
        %v4784 = vsel %vm4761, %v4655, %v2244
        %v4785 = vsel %vm4761, %v4656, %v2246
        %v4786 = vsel %vm4761, %v4657, %v2248
        %v4787 = vsel %vm4761, %v4658, %v2250
        %v4788 = vsel %vm4761, %v4659, %v2252
        %v4789 = vsel %vm4761, %v4660, %v2254
        %v4790 = vsel %vm4761, %v4661, %v2256
        %v4791 = vsel %vm4761, %v4662, %v2258
        %v4792 = vsel %vm4761, %v4663, %v2260
        %v4793 = vsel %vm4761, %v4664, %v2262
        %v4794 = vsel %vm4761, %v4665, %v2264
        %v4795 = vsel %vm4761, %v4666, %v2266
        %v4796 = vsel %vm4761, %v4667, %v2268
        %v4797 = vsel %vm4761, %v4668, %v2270
        %v4798 = vsel %vm4761, %v4669, %v2272
        %v4799 = vsel %vm4761, %v4670, %v2274
        %v4800 = vsel %vm4761, %v4671, %v2276
        %v4801 = vsel %vm4761, %v4672, %v2278
        %v4802 = vsel %vm4761, %v4673, %v2280
        %v4803 = vsel %vm4761, %v4674, %v2282
        %v4804 = vsel %vm4761, %v4675, %v2284
        %v4805 = vsel %vm4761, %v4676, %v2286
        %v4806 = vsel %vm4761, %v4677, %v2288
        %v4807 = vsel %vm4761, %v4678, %v2290
        %v4808 = vsel %vm4761, %v4679, %v2292
        %v4809 = vsel %vm4761, %v4680, %v2294
        %v4810 = vsel %vm4761, %v4681, %v2296
        %v4811 = vsel %vm4761, %v4682, %v2298
        %v4812 = vsel %vm4761, %v4683, %v2300
        %v4813 = vsel %vm4761, %v4684, %v2302
        %v4814 = vsel %vm4761, %v4685, %v2304
        %v4815 = vsel %vm4761, %v4686, %v2306
        %v4816 = vsel %vm4761, %v4687, %v2308
        %v4817 = vsel %vm4761, %v4688, %v2310
        %v4818 = vsel %vm4761, %v4689, %v2312
        %v4819 = vsel %vm4761, %v4690, %v2314
        %v4820 = vsel %vm4761, %v4691, %v2316
        %v4821 = vsel %vm4761, %v4692, %v2318
        %v4822 = vsel %vm4761, %v4693, %v2320
        %v4823 = vsel %vm4761, %v4694, %v2322
        %v4824 = vsel %vm4761, %v4695, %v2324
        %v4825 = vsel %vm4761, %v4696, %v2326
        %v4826 = vsel %vm4761, %v4697, %v2328
        %v4827 = vsel %vm4761, %v4698, %v2330
        %v4828 = vsel %vm4761, %v4699, %v2332
        %v4829 = vsel %vm4761, %v4700, %v2334
        %v4830 = vsel %vm4761, %v4701, %v2336
        %v4831 = vsel %vm4761, %v4702, %v2338
        %v4832 = vsel %vm4761, %v4703, %v2340
        %v4833 = vsel %vm4761, %v4704, %v2342
        %v4834 = vsel %vm4761, %v4705, %v2344
        %v4835 = vsel %vm4761, %v4706, %v2346
        %v4836 = vsel %vm4761, %v4707, %v2348
        %v4837 = vsel %vm4761, %v4708, %v2350
        %v4838 = vsel %vm4761, %v4709, %v2352
        %v4839 = vsel %vm4761, %v4710, %v2354
        %v4840 = vsel %vm4761, %v4711, %v2356
        %v4841 = vsel %vm4761, %v4712, %v2358
        %v4842 = vsel %vm4761, %v4713, %v2360
        %v4843 = vsel %vm4761, %v4714, %v2362
        %v4844 = vsel %vm4761, %v4715, %v2364
        %v4845 = vsel %vm4761, %v4716, %v2366
        %v4846 = vsel %vm4761, %v4717, %v2368
        %v4847 = vsel %vm4761, %v4718, %v2370
        %v4848 = vsel %vm4761, %v4719, %v2372
        %v4849 = vsel %vm4761, %v4720, %v2374
        %v4850 = vsel %vm4761, %v4721, %v2376
        %v4851 = vsel %vm4761, %v4722, %v2378
        %v4852 = vsel %vm4761, %v4723, %v2380
        %v4853 = vsel %vm4761, %v4724, %v2382
        %v4854 = vsel %vm4761, %v4725, %v2384
        %v4855 = vsel %vm4761, %v4726, %v2386
        %v4856 = vsel %vm4761, %v4727, %v2388
        %v4857 = vsel %vm4761, %v4728, %v2390
        %v4858 = vsel %vm4761, %v4729, %v2392
        %v4859 = vsel %vm4761, %v4730, %v2394
        %v4860 = vsel %vm4761, %v4731, %v2396
        %v4861 = vsel %vm4761, %v4732, %v2398
        %v4862 = vsel %vm4761, %v4733, %v2400
        %v4863 = vsel %vm4761, %v4734, %v2402
        %v4864 = vsel %vm4761, %v4735, %v2404
        %v4865 = vsel %vm4761, %v4736, %v2406
        %v4866 = vsel %vm4761, %v4737, %v2408
        %v4867 = vsel %vm4761, %v4738, %v2410
        %v4868 = vsel %vm4761, %v4739, %v2412
        %v4869 = vsel %vm4761, %v4740, %v2414
        %v4870 = vsel %vm4761, %v4741, %v2416
        %v4871 = vsel %vm4761, %v4742, %v2418
        %v4872 = vsel %vm4761, %v4743, %v2420
        %v4873 = vsel %vm4761, %v4744, %v2422
        %v4874 = vsel %vm4761, %v4745, %v2424
        %v4875 = vsel %vm4761, %v4746, %v2426
        %v4876 = vsel %vm4761, %v4747, %v2428
        %v4877 = vsel %vm4761, %v4748, %v2430
        %v4878 = vsel %vm4761, %v4749, %v2432
        %v4879 = vsel %vm4761, %v4750, %v2434
        %v4880 = vsel %vm4761, %v4751, %v2436
        %v4881 = vsel %vm4761, %v4752, %v2438
        %v4882 = vsel %vm4761, %v4753, %v2440
        %v4883 = vsel %vm4761, %v4754, %v2442
        %v4884 = vsel %vm4761, %v4755, %v2444
        %v4885 = vsel %vm4761, %v4756, %v2446
        %v4886 = vsel %vm4761, %v4757, %v2448
        %v4887 = vsel %vm4761, %v4758, %v2450
        %v4888 = vsel %vm4761, %v4759, %v2452
        %v4889 = vsel %vm4761, %v4760, %v2454
        %vm4890 = vcmask 97280
        %v4891 = vsel %vm4890, %v4762, %v2584
        %v4892 = vsel %vm4890, %v4763, %v2586
        %v4893 = vsel %vm4890, %v4764, %v2588
        %v4894 = vsel %vm4890, %v4765, %v2590
        %v4895 = vsel %vm4890, %v4766, %v2592
        %v4896 = vsel %vm4890, %v4767, %v2594
        %v4897 = vsel %vm4890, %v4768, %v2596
        %v4898 = vsel %vm4890, %v4769, %v2598
        %v4899 = vsel %vm4890, %v4770, %v2600
        %v4900 = vsel %vm4890, %v4771, %v2602
        %v4901 = vsel %vm4890, %v4772, %v2604
        %v4902 = vsel %vm4890, %v4773, %v2606
        %v4903 = vsel %vm4890, %v4774, %v2608
        %v4904 = vsel %vm4890, %v4775, %v2610
        %v4905 = vsel %vm4890, %v4776, %v2612
        %v4906 = vsel %vm4890, %v4777, %v2614
        %v4907 = vsel %vm4890, %v4778, %v2616
        %v4908 = vsel %vm4890, %v4779, %v2618
        %v4909 = vsel %vm4890, %v4780, %v2620
        %v4910 = vsel %vm4890, %v4781, %v2622
        %v4911 = vsel %vm4890, %v4782, %v2624
        %v4912 = vsel %vm4890, %v4783, %v2626
        %v4913 = vsel %vm4890, %v4784, %v2628
        %v4914 = vsel %vm4890, %v4785, %v2630
        %v4915 = vsel %vm4890, %v4786, %v2632
        %v4916 = vsel %vm4890, %v4787, %v2634
        %v4917 = vsel %vm4890, %v4788, %v2636
        %v4918 = vsel %vm4890, %v4789, %v2638
        %v4919 = vsel %vm4890, %v4790, %v2640
        %v4920 = vsel %vm4890, %v4791, %v2642
        %v4921 = vsel %vm4890, %v4792, %v2644
        %v4922 = vsel %vm4890, %v4793, %v2646
        %v4923 = vsel %vm4890, %v4794, %v2648
        %v4924 = vsel %vm4890, %v4795, %v2650
        %v4925 = vsel %vm4890, %v4796, %v2652
        %v4926 = vsel %vm4890, %v4797, %v2654
        %v4927 = vsel %vm4890, %v4798, %v2656
        %v4928 = vsel %vm4890, %v4799, %v2658
        %v4929 = vsel %vm4890, %v4800, %v2660
        %v4930 = vsel %vm4890, %v4801, %v2662
        %v4931 = vsel %vm4890, %v4802, %v2664
        %v4932 = vsel %vm4890, %v4803, %v2666
        %v4933 = vsel %vm4890, %v4804, %v2668
        %v4934 = vsel %vm4890, %v4805, %v2670
        %v4935 = vsel %vm4890, %v4806, %v2672
        %v4936 = vsel %vm4890, %v4807, %v2674
        %v4937 = vsel %vm4890, %v4808, %v2676
        %v4938 = vsel %vm4890, %v4809, %v2678
        %v4939 = vsel %vm4890, %v4810, %v2680
        %v4940 = vsel %vm4890, %v4811, %v2682
        %v4941 = vsel %vm4890, %v4812, %v2684
        %v4942 = vsel %vm4890, %v4813, %v2686
        %v4943 = vsel %vm4890, %v4814, %v2688
        %v4944 = vsel %vm4890, %v4815, %v2690
        %v4945 = vsel %vm4890, %v4816, %v2692
        %v4946 = vsel %vm4890, %v4817, %v2694
        %v4947 = vsel %vm4890, %v4818, %v2696
        %v4948 = vsel %vm4890, %v4819, %v2698
        %v4949 = vsel %vm4890, %v4820, %v2700
        %v4950 = vsel %vm4890, %v4821, %v2702
        %v4951 = vsel %vm4890, %v4822, %v2704
        %v4952 = vsel %vm4890, %v4823, %v2706
        %v4953 = vsel %vm4890, %v4824, %v2708
        %v4954 = vsel %vm4890, %v4825, %v2710
        %v4955 = vsel %vm4890, %v4826, %v2712
        %v4956 = vsel %vm4890, %v4827, %v2714
        %v4957 = vsel %vm4890, %v4828, %v2716
        %v4958 = vsel %vm4890, %v4829, %v2718
        %v4959 = vsel %vm4890, %v4830, %v2720
        %v4960 = vsel %vm4890, %v4831, %v2722
        %v4961 = vsel %vm4890, %v4832, %v2724
        %v4962 = vsel %vm4890, %v4833, %v2726
        %v4963 = vsel %vm4890, %v4834, %v2728
        %v4964 = vsel %vm4890, %v4835, %v2730
        %v4965 = vsel %vm4890, %v4836, %v2732
        %v4966 = vsel %vm4890, %v4837, %v2734
        %v4967 = vsel %vm4890, %v4838, %v2736
        %v4968 = vsel %vm4890, %v4839, %v2738
        %v4969 = vsel %vm4890, %v4840, %v2740
        %v4970 = vsel %vm4890, %v4841, %v2742
        %v4971 = vsel %vm4890, %v4842, %v2744
        %v4972 = vsel %vm4890, %v4843, %v2746
        %v4973 = vsel %vm4890, %v4844, %v2748
        %v4974 = vsel %vm4890, %v4845, %v2750
        %v4975 = vsel %vm4890, %v4846, %v2752
        %v4976 = vsel %vm4890, %v4847, %v2754
        %v4977 = vsel %vm4890, %v4848, %v2756
        %v4978 = vsel %vm4890, %v4849, %v2758
        %v4979 = vsel %vm4890, %v4850, %v2760
        %v4980 = vsel %vm4890, %v4851, %v2762
        %v4981 = vsel %vm4890, %v4852, %v2764
        %v4982 = vsel %vm4890, %v4853, %v2766
        %v4983 = vsel %vm4890, %v4854, %v2768
        %v4984 = vsel %vm4890, %v4855, %v2770
        %v4985 = vsel %vm4890, %v4856, %v2772
        %v4986 = vsel %vm4890, %v4857, %v2774
        %v4987 = vsel %vm4890, %v4858, %v2776
        %v4988 = vsel %vm4890, %v4859, %v2778
        %v4989 = vsel %vm4890, %v4860, %v2780
        %v4990 = vsel %vm4890, %v4861, %v2782
        %v4991 = vsel %vm4890, %v4862, %v2784
        %v4992 = vsel %vm4890, %v4863, %v2786
        %v4993 = vsel %vm4890, %v4864, %v2788
        %v4994 = vsel %vm4890, %v4865, %v2790
        %v4995 = vsel %vm4890, %v4866, %v2792
        %v4996 = vsel %vm4890, %v4867, %v2794
        %v4997 = vsel %vm4890, %v4868, %v2796
        %v4998 = vsel %vm4890, %v4869, %v2798
        %v4999 = vsel %vm4890, %v4870, %v2800
        %v5000 = vsel %vm4890, %v4871, %v2802
        %v5001 = vsel %vm4890, %v4872, %v2804
        %v5002 = vsel %vm4890, %v4873, %v2806
        %v5003 = vsel %vm4890, %v4874, %v2808
        %v5004 = vsel %vm4890, %v4875, %v2810
        %v5005 = vsel %vm4890, %v4876, %v2812
        %v5006 = vsel %vm4890, %v4877, %v2814
        %v5007 = vsel %vm4890, %v4878, %v2816
        %v5008 = vsel %vm4890, %v4879, %v2818
        %v5009 = vsel %vm4890, %v4880, %v2820
        %v5010 = vsel %vm4890, %v4881, %v2822
        %v5011 = vsel %vm4890, %v4882, %v2824
        %v5012 = vsel %vm4890, %v4883, %v2826
        %v5013 = vsel %vm4890, %v4884, %v2828
        %v5014 = vsel %vm4890, %v4885, %v2830
        %v5015 = vsel %vm4890, %v4886, %v2832
        %v5016 = vsel %vm4890, %v4887, %v2834
        %v5017 = vsel %vm4890, %v4888, %v2836
        %v5018 = vsel %vm4890, %v4889, %v2838
        %vm5019 = vcmask 121856
        %v5020 = vsel %vm5019, %v4891, %v2968
        %v5021 = vsel %vm5019, %v4892, %v2970
        %v5022 = vsel %vm5019, %v4893, %v2972
        %v5023 = vsel %vm5019, %v4894, %v2974
        %v5024 = vsel %vm5019, %v4895, %v2976
        %v5025 = vsel %vm5019, %v4896, %v2978
        %v5026 = vsel %vm5019, %v4897, %v2980
        %v5027 = vsel %vm5019, %v4898, %v2982
        %v5028 = vsel %vm5019, %v4899, %v2984
        %v5029 = vsel %vm5019, %v4900, %v2986
        %v5030 = vsel %vm5019, %v4901, %v2988
        %v5031 = vsel %vm5019, %v4902, %v2990
        %v5032 = vsel %vm5019, %v4903, %v2992
        %v5033 = vsel %vm5019, %v4904, %v2994
        %v5034 = vsel %vm5019, %v4905, %v2996
        %v5035 = vsel %vm5019, %v4906, %v2998
        %v5036 = vsel %vm5019, %v4907, %v3000
        %v5037 = vsel %vm5019, %v4908, %v3002
        %v5038 = vsel %vm5019, %v4909, %v3004
        %v5039 = vsel %vm5019, %v4910, %v3006
        %v5040 = vsel %vm5019, %v4911, %v3008
        %v5041 = vsel %vm5019, %v4912, %v3010
        %v5042 = vsel %vm5019, %v4913, %v3012
        %v5043 = vsel %vm5019, %v4914, %v3014
        %v5044 = vsel %vm5019, %v4915, %v3016
        %v5045 = vsel %vm5019, %v4916, %v3018
        %v5046 = vsel %vm5019, %v4917, %v3020
        %v5047 = vsel %vm5019, %v4918, %v3022
        %v5048 = vsel %vm5019, %v4919, %v3024
        %v5049 = vsel %vm5019, %v4920, %v3026
        %v5050 = vsel %vm5019, %v4921, %v3028
        %v5051 = vsel %vm5019, %v4922, %v3030
        %v5052 = vsel %vm5019, %v4923, %v3032
        %v5053 = vsel %vm5019, %v4924, %v3034
        %v5054 = vsel %vm5019, %v4925, %v3036
        %v5055 = vsel %vm5019, %v4926, %v3038
        %v5056 = vsel %vm5019, %v4927, %v3040
        %v5057 = vsel %vm5019, %v4928, %v3042
        %v5058 = vsel %vm5019, %v4929, %v3044
        %v5059 = vsel %vm5019, %v4930, %v3046
        %v5060 = vsel %vm5019, %v4931, %v3048
        %v5061 = vsel %vm5019, %v4932, %v3050
        %v5062 = vsel %vm5019, %v4933, %v3052
        %v5063 = vsel %vm5019, %v4934, %v3054
        %v5064 = vsel %vm5019, %v4935, %v3056
        %v5065 = vsel %vm5019, %v4936, %v3058
        %v5066 = vsel %vm5019, %v4937, %v3060
        %v5067 = vsel %vm5019, %v4938, %v3062
        %v5068 = vsel %vm5019, %v4939, %v3064
        %v5069 = vsel %vm5019, %v4940, %v3066
        %v5070 = vsel %vm5019, %v4941, %v3068
        %v5071 = vsel %vm5019, %v4942, %v3070
        %v5072 = vsel %vm5019, %v4943, %v3072
        %v5073 = vsel %vm5019, %v4944, %v3074
        %v5074 = vsel %vm5019, %v4945, %v3076
        %v5075 = vsel %vm5019, %v4946, %v3078
        %v5076 = vsel %vm5019, %v4947, %v3080
        %v5077 = vsel %vm5019, %v4948, %v3082
        %v5078 = vsel %vm5019, %v4949, %v3084
        %v5079 = vsel %vm5019, %v4950, %v3086
        %v5080 = vsel %vm5019, %v4951, %v3088
        %v5081 = vsel %vm5019, %v4952, %v3090
        %v5082 = vsel %vm5019, %v4953, %v3092
        %v5083 = vsel %vm5019, %v4954, %v3094
        %v5084 = vsel %vm5019, %v4955, %v3096
        %v5085 = vsel %vm5019, %v4956, %v3098
        %v5086 = vsel %vm5019, %v4957, %v3100
        %v5087 = vsel %vm5019, %v4958, %v3102
        %v5088 = vsel %vm5019, %v4959, %v3104
        %v5089 = vsel %vm5019, %v4960, %v3106
        %v5090 = vsel %vm5019, %v4961, %v3108
        %v5091 = vsel %vm5019, %v4962, %v3110
        %v5092 = vsel %vm5019, %v4963, %v3112
        %v5093 = vsel %vm5019, %v4964, %v3114
        %v5094 = vsel %vm5019, %v4965, %v3116
        %v5095 = vsel %vm5019, %v4966, %v3118
        %v5096 = vsel %vm5019, %v4967, %v3120
        %v5097 = vsel %vm5019, %v4968, %v3122
        %v5098 = vsel %vm5019, %v4969, %v3124
        %v5099 = vsel %vm5019, %v4970, %v3126
        %v5100 = vsel %vm5019, %v4971, %v3128
        %v5101 = vsel %vm5019, %v4972, %v3130
        %v5102 = vsel %vm5019, %v4973, %v3132
        %v5103 = vsel %vm5019, %v4974, %v3134
        %v5104 = vsel %vm5019, %v4975, %v3136
        %v5105 = vsel %vm5019, %v4976, %v3138
        %v5106 = vsel %vm5019, %v4977, %v3140
        %v5107 = vsel %vm5019, %v4978, %v3142
        %v5108 = vsel %vm5019, %v4979, %v3144
        %v5109 = vsel %vm5019, %v4980, %v3146
        %v5110 = vsel %vm5019, %v4981, %v3148
        %v5111 = vsel %vm5019, %v4982, %v3150
        %v5112 = vsel %vm5019, %v4983, %v3152
        %v5113 = vsel %vm5019, %v4984, %v3154
        %v5114 = vsel %vm5019, %v4985, %v3156
        %v5115 = vsel %vm5019, %v4986, %v3158
        %v5116 = vsel %vm5019, %v4987, %v3160
        %v5117 = vsel %vm5019, %v4988, %v3162
        %v5118 = vsel %vm5019, %v4989, %v3164
        %v5119 = vsel %vm5019, %v4990, %v3166
        %v5120 = vsel %vm5019, %v4991, %v3168
        %v5121 = vsel %vm5019, %v4992, %v3170
        %v5122 = vsel %vm5019, %v4993, %v3172
        %v5123 = vsel %vm5019, %v4994, %v3174
        %v5124 = vsel %vm5019, %v4995, %v3176
        %v5125 = vsel %vm5019, %v4996, %v3178
        %v5126 = vsel %vm5019, %v4997, %v3180
        %v5127 = vsel %vm5019, %v4998, %v3182
        %v5128 = vsel %vm5019, %v4999, %v3184
        %v5129 = vsel %vm5019, %v5000, %v3186
        %v5130 = vsel %vm5019, %v5001, %v3188
        %v5131 = vsel %vm5019, %v5002, %v3190
        %v5132 = vsel %vm5019, %v5003, %v3192
        %v5133 = vsel %vm5019, %v5004, %v3194
        %v5134 = vsel %vm5019, %v5005, %v3196
        %v5135 = vsel %vm5019, %v5006, %v3198
        %v5136 = vsel %vm5019, %v5007, %v3200
        %v5137 = vsel %vm5019, %v5008, %v3202
        %v5138 = vsel %vm5019, %v5009, %v3204
        %v5139 = vsel %vm5019, %v5010, %v3206
        %v5140 = vsel %vm5019, %v5011, %v3208
        %v5141 = vsel %vm5019, %v5012, %v3210
        %v5142 = vsel %vm5019, %v5013, %v3212
        %v5143 = vsel %vm5019, %v5014, %v3214
        %v5144 = vsel %vm5019, %v5015, %v3216
        %v5145 = vsel %vm5019, %v5016, %v3218
        %v5146 = vsel %vm5019, %v5017, %v3220
        %v5147 = vsel %vm5019, %v5018, %v3222
        %vm5148 = vcmask 146432
        %v5149 = vsel %vm5148, %v5020, %v3352
        %v5150 = vsel %vm5148, %v5021, %v3354
        %v5151 = vsel %vm5148, %v5022, %v3356
        %v5152 = vsel %vm5148, %v5023, %v3358
        %v5153 = vsel %vm5148, %v5024, %v3360
        %v5154 = vsel %vm5148, %v5025, %v3362
        %v5155 = vsel %vm5148, %v5026, %v3364
        %v5156 = vsel %vm5148, %v5027, %v3366
        %v5157 = vsel %vm5148, %v5028, %v3368
        %v5158 = vsel %vm5148, %v5029, %v3370
        %v5159 = vsel %vm5148, %v5030, %v3372
        %v5160 = vsel %vm5148, %v5031, %v3374
        %v5161 = vsel %vm5148, %v5032, %v3376
        %v5162 = vsel %vm5148, %v5033, %v3378
        %v5163 = vsel %vm5148, %v5034, %v3380
        %v5164 = vsel %vm5148, %v5035, %v3382
        %v5165 = vsel %vm5148, %v5036, %v3384
        %v5166 = vsel %vm5148, %v5037, %v3386
        %v5167 = vsel %vm5148, %v5038, %v3388
        %v5168 = vsel %vm5148, %v5039, %v3390
        %v5169 = vsel %vm5148, %v5040, %v3392
        %v5170 = vsel %vm5148, %v5041, %v3394
        %v5171 = vsel %vm5148, %v5042, %v3396
        %v5172 = vsel %vm5148, %v5043, %v3398
        %v5173 = vsel %vm5148, %v5044, %v3400
        %v5174 = vsel %vm5148, %v5045, %v3402
        %v5175 = vsel %vm5148, %v5046, %v3404
        %v5176 = vsel %vm5148, %v5047, %v3406
        %v5177 = vsel %vm5148, %v5048, %v3408
        %v5178 = vsel %vm5148, %v5049, %v3410
        %v5179 = vsel %vm5148, %v5050, %v3412
        %v5180 = vsel %vm5148, %v5051, %v3414
        %v5181 = vsel %vm5148, %v5052, %v3416
        %v5182 = vsel %vm5148, %v5053, %v3418
        %v5183 = vsel %vm5148, %v5054, %v3420
        %v5184 = vsel %vm5148, %v5055, %v3422
        %v5185 = vsel %vm5148, %v5056, %v3424
        %v5186 = vsel %vm5148, %v5057, %v3426
        %v5187 = vsel %vm5148, %v5058, %v3428
        %v5188 = vsel %vm5148, %v5059, %v3430
        %v5189 = vsel %vm5148, %v5060, %v3432
        %v5190 = vsel %vm5148, %v5061, %v3434
        %v5191 = vsel %vm5148, %v5062, %v3436
        %v5192 = vsel %vm5148, %v5063, %v3438
        %v5193 = vsel %vm5148, %v5064, %v3440
        %v5194 = vsel %vm5148, %v5065, %v3442
        %v5195 = vsel %vm5148, %v5066, %v3444
        %v5196 = vsel %vm5148, %v5067, %v3446
        %v5197 = vsel %vm5148, %v5068, %v3448
        %v5198 = vsel %vm5148, %v5069, %v3450
        %v5199 = vsel %vm5148, %v5070, %v3452
        %v5200 = vsel %vm5148, %v5071, %v3454
        %v5201 = vsel %vm5148, %v5072, %v3456
        %v5202 = vsel %vm5148, %v5073, %v3458
        %v5203 = vsel %vm5148, %v5074, %v3460
        %v5204 = vsel %vm5148, %v5075, %v3462
        %v5205 = vsel %vm5148, %v5076, %v3464
        %v5206 = vsel %vm5148, %v5077, %v3466
        %v5207 = vsel %vm5148, %v5078, %v3468
        %v5208 = vsel %vm5148, %v5079, %v3470
        %v5209 = vsel %vm5148, %v5080, %v3472
        %v5210 = vsel %vm5148, %v5081, %v3474
        %v5211 = vsel %vm5148, %v5082, %v3476
        %v5212 = vsel %vm5148, %v5083, %v3478
        %v5213 = vsel %vm5148, %v5084, %v3480
        %v5214 = vsel %vm5148, %v5085, %v3482
        %v5215 = vsel %vm5148, %v5086, %v3484
        %v5216 = vsel %vm5148, %v5087, %v3486
        %v5217 = vsel %vm5148, %v5088, %v3488
        %v5218 = vsel %vm5148, %v5089, %v3490
        %v5219 = vsel %vm5148, %v5090, %v3492
        %v5220 = vsel %vm5148, %v5091, %v3494
        %v5221 = vsel %vm5148, %v5092, %v3496
        %v5222 = vsel %vm5148, %v5093, %v3498
        %v5223 = vsel %vm5148, %v5094, %v3500
        %v5224 = vsel %vm5148, %v5095, %v3502
        %v5225 = vsel %vm5148, %v5096, %v3504
        %v5226 = vsel %vm5148, %v5097, %v3506
        %v5227 = vsel %vm5148, %v5098, %v3508
        %v5228 = vsel %vm5148, %v5099, %v3510
        %v5229 = vsel %vm5148, %v5100, %v3512
        %v5230 = vsel %vm5148, %v5101, %v3514
        %v5231 = vsel %vm5148, %v5102, %v3516
        %v5232 = vsel %vm5148, %v5103, %v3518
        %v5233 = vsel %vm5148, %v5104, %v3520
        %v5234 = vsel %vm5148, %v5105, %v3522
        %v5235 = vsel %vm5148, %v5106, %v3524
        %v5236 = vsel %vm5148, %v5107, %v3526
        %v5237 = vsel %vm5148, %v5108, %v3528
        %v5238 = vsel %vm5148, %v5109, %v3530
        %v5239 = vsel %vm5148, %v5110, %v3532
        %v5240 = vsel %vm5148, %v5111, %v3534
        %v5241 = vsel %vm5148, %v5112, %v3536
        %v5242 = vsel %vm5148, %v5113, %v3538
        %v5243 = vsel %vm5148, %v5114, %v3540
        %v5244 = vsel %vm5148, %v5115, %v3542
        %v5245 = vsel %vm5148, %v5116, %v3544
        %v5246 = vsel %vm5148, %v5117, %v3546
        %v5247 = vsel %vm5148, %v5118, %v3548
        %v5248 = vsel %vm5148, %v5119, %v3550
        %v5249 = vsel %vm5148, %v5120, %v3552
        %v5250 = vsel %vm5148, %v5121, %v3554
        %v5251 = vsel %vm5148, %v5122, %v3556
        %v5252 = vsel %vm5148, %v5123, %v3558
        %v5253 = vsel %vm5148, %v5124, %v3560
        %v5254 = vsel %vm5148, %v5125, %v3562
        %v5255 = vsel %vm5148, %v5126, %v3564
        %v5256 = vsel %vm5148, %v5127, %v3566
        %v5257 = vsel %vm5148, %v5128, %v3568
        %v5258 = vsel %vm5148, %v5129, %v3570
        %v5259 = vsel %vm5148, %v5130, %v3572
        %v5260 = vsel %vm5148, %v5131, %v3574
        %v5261 = vsel %vm5148, %v5132, %v3576
        %v5262 = vsel %vm5148, %v5133, %v3578
        %v5263 = vsel %vm5148, %v5134, %v3580
        %v5264 = vsel %vm5148, %v5135, %v3582
        %v5265 = vsel %vm5148, %v5136, %v3584
        %v5266 = vsel %vm5148, %v5137, %v3586
        %v5267 = vsel %vm5148, %v5138, %v3588
        %v5268 = vsel %vm5148, %v5139, %v3590
        %v5269 = vsel %vm5148, %v5140, %v3592
        %v5270 = vsel %vm5148, %v5141, %v3594
        %v5271 = vsel %vm5148, %v5142, %v3596
        %v5272 = vsel %vm5148, %v5143, %v3598
        %v5273 = vsel %vm5148, %v5144, %v3600
        %v5274 = vsel %vm5148, %v5145, %v3602
        %v5275 = vsel %vm5148, %v5146, %v3604
        %v5276 = vsel %vm5148, %v5147, %v3606
        %vm5277 = vcmask 171008
        %v5278 = vsel %vm5277, %v5149, %v3736
        %v5279 = vsel %vm5277, %v5150, %v3738
        %v5280 = vsel %vm5277, %v5151, %v3740
        %v5281 = vsel %vm5277, %v5152, %v3742
        %v5282 = vsel %vm5277, %v5153, %v3744
        %v5283 = vsel %vm5277, %v5154, %v3746
        %v5284 = vsel %vm5277, %v5155, %v3748
        %v5285 = vsel %vm5277, %v5156, %v3750
        %v5286 = vsel %vm5277, %v5157, %v3752
        %v5287 = vsel %vm5277, %v5158, %v3754
        %v5288 = vsel %vm5277, %v5159, %v3756
        %v5289 = vsel %vm5277, %v5160, %v3758
        %v5290 = vsel %vm5277, %v5161, %v3760
        %v5291 = vsel %vm5277, %v5162, %v3762
        %v5292 = vsel %vm5277, %v5163, %v3764
        %v5293 = vsel %vm5277, %v5164, %v3766
        %v5294 = vsel %vm5277, %v5165, %v3768
        %v5295 = vsel %vm5277, %v5166, %v3770
        %v5296 = vsel %vm5277, %v5167, %v3772
        %v5297 = vsel %vm5277, %v5168, %v3774
        %v5298 = vsel %vm5277, %v5169, %v3776
        %v5299 = vsel %vm5277, %v5170, %v3778
        %v5300 = vsel %vm5277, %v5171, %v3780
        %v5301 = vsel %vm5277, %v5172, %v3782
        %v5302 = vsel %vm5277, %v5173, %v3784
        %v5303 = vsel %vm5277, %v5174, %v3786
        %v5304 = vsel %vm5277, %v5175, %v3788
        %v5305 = vsel %vm5277, %v5176, %v3790
        %v5306 = vsel %vm5277, %v5177, %v3792
        %v5307 = vsel %vm5277, %v5178, %v3794
        %v5308 = vsel %vm5277, %v5179, %v3796
        %v5309 = vsel %vm5277, %v5180, %v3798
        %v5310 = vsel %vm5277, %v5181, %v3800
        %v5311 = vsel %vm5277, %v5182, %v3802
        %v5312 = vsel %vm5277, %v5183, %v3804
        %v5313 = vsel %vm5277, %v5184, %v3806
        %v5314 = vsel %vm5277, %v5185, %v3808
        %v5315 = vsel %vm5277, %v5186, %v3810
        %v5316 = vsel %vm5277, %v5187, %v3812
        %v5317 = vsel %vm5277, %v5188, %v3814
        %v5318 = vsel %vm5277, %v5189, %v3816
        %v5319 = vsel %vm5277, %v5190, %v3818
        %v5320 = vsel %vm5277, %v5191, %v3820
        %v5321 = vsel %vm5277, %v5192, %v3822
        %v5322 = vsel %vm5277, %v5193, %v3824
        %v5323 = vsel %vm5277, %v5194, %v3826
        %v5324 = vsel %vm5277, %v5195, %v3828
        %v5325 = vsel %vm5277, %v5196, %v3830
        %v5326 = vsel %vm5277, %v5197, %v3832
        %v5327 = vsel %vm5277, %v5198, %v3834
        %v5328 = vsel %vm5277, %v5199, %v3836
        %v5329 = vsel %vm5277, %v5200, %v3838
        %v5330 = vsel %vm5277, %v5201, %v3840
        %v5331 = vsel %vm5277, %v5202, %v3842
        %v5332 = vsel %vm5277, %v5203, %v3844
        %v5333 = vsel %vm5277, %v5204, %v3846
        %v5334 = vsel %vm5277, %v5205, %v3848
        %v5335 = vsel %vm5277, %v5206, %v3850
        %v5336 = vsel %vm5277, %v5207, %v3852
        %v5337 = vsel %vm5277, %v5208, %v3854
        %v5338 = vsel %vm5277, %v5209, %v3856
        %v5339 = vsel %vm5277, %v5210, %v3858
        %v5340 = vsel %vm5277, %v5211, %v3860
        %v5341 = vsel %vm5277, %v5212, %v3862
        %v5342 = vsel %vm5277, %v5213, %v3864
        %v5343 = vsel %vm5277, %v5214, %v3866
        %v5344 = vsel %vm5277, %v5215, %v3868
        %v5345 = vsel %vm5277, %v5216, %v3870
        %v5346 = vsel %vm5277, %v5217, %v3872
        %v5347 = vsel %vm5277, %v5218, %v3874
        %v5348 = vsel %vm5277, %v5219, %v3876
        %v5349 = vsel %vm5277, %v5220, %v3878
        %v5350 = vsel %vm5277, %v5221, %v3880
        %v5351 = vsel %vm5277, %v5222, %v3882
        %v5352 = vsel %vm5277, %v5223, %v3884
        %v5353 = vsel %vm5277, %v5224, %v3886
        %v5354 = vsel %vm5277, %v5225, %v3888
        %v5355 = vsel %vm5277, %v5226, %v3890
        %v5356 = vsel %vm5277, %v5227, %v3892
        %v5357 = vsel %vm5277, %v5228, %v3894
        %v5358 = vsel %vm5277, %v5229, %v3896
        %v5359 = vsel %vm5277, %v5230, %v3898
        %v5360 = vsel %vm5277, %v5231, %v3900
        %v5361 = vsel %vm5277, %v5232, %v3902
        %v5362 = vsel %vm5277, %v5233, %v3904
        %v5363 = vsel %vm5277, %v5234, %v3906
        %v5364 = vsel %vm5277, %v5235, %v3908
        %v5365 = vsel %vm5277, %v5236, %v3910
        %v5366 = vsel %vm5277, %v5237, %v3912
        %v5367 = vsel %vm5277, %v5238, %v3914
        %v5368 = vsel %vm5277, %v5239, %v3916
        %v5369 = vsel %vm5277, %v5240, %v3918
        %v5370 = vsel %vm5277, %v5241, %v3920
        %v5371 = vsel %vm5277, %v5242, %v3922
        %v5372 = vsel %vm5277, %v5243, %v3924
        %v5373 = vsel %vm5277, %v5244, %v3926
        %v5374 = vsel %vm5277, %v5245, %v3928
        %v5375 = vsel %vm5277, %v5246, %v3930
        %v5376 = vsel %vm5277, %v5247, %v3932
        %v5377 = vsel %vm5277, %v5248, %v3934
        %v5378 = vsel %vm5277, %v5249, %v3936
        %v5379 = vsel %vm5277, %v5250, %v3938
        %v5380 = vsel %vm5277, %v5251, %v3940
        %v5381 = vsel %vm5277, %v5252, %v3942
        %v5382 = vsel %vm5277, %v5253, %v3944
        %v5383 = vsel %vm5277, %v5254, %v3946
        %v5384 = vsel %vm5277, %v5255, %v3948
        %v5385 = vsel %vm5277, %v5256, %v3950
        %v5386 = vsel %vm5277, %v5257, %v3952
        %v5387 = vsel %vm5277, %v5258, %v3954
        %v5388 = vsel %vm5277, %v5259, %v3956
        %v5389 = vsel %vm5277, %v5260, %v3958
        %v5390 = vsel %vm5277, %v5261, %v3960
        %v5391 = vsel %vm5277, %v5262, %v3962
        %v5392 = vsel %vm5277, %v5263, %v3964
        %v5393 = vsel %vm5277, %v5264, %v3966
        %v5394 = vsel %vm5277, %v5265, %v3968
        %v5395 = vsel %vm5277, %v5266, %v3970
        %v5396 = vsel %vm5277, %v5267, %v3972
        %v5397 = vsel %vm5277, %v5268, %v3974
        %v5398 = vsel %vm5277, %v5269, %v3976
        %v5399 = vsel %vm5277, %v5270, %v3978
        %v5400 = vsel %vm5277, %v5271, %v3980
        %v5401 = vsel %vm5277, %v5272, %v3982
        %v5402 = vsel %vm5277, %v5273, %v3984
        %v5403 = vsel %vm5277, %v5274, %v3986
        %v5404 = vsel %vm5277, %v5275, %v3988
        %v5405 = vsel %vm5277, %v5276, %v3990
        %vm5406 = vcmask 195584
        %v5407 = vsel %vm5406, %v5278, %v4120
        %v5408 = vsel %vm5406, %v5279, %v4122
        %v5409 = vsel %vm5406, %v5280, %v4124
        %v5410 = vsel %vm5406, %v5281, %v4126
        %v5411 = vsel %vm5406, %v5282, %v4128
        %v5412 = vsel %vm5406, %v5283, %v4130
        %v5413 = vsel %vm5406, %v5284, %v4132
        %v5414 = vsel %vm5406, %v5285, %v4134
        %v5415 = vsel %vm5406, %v5286, %v4136
        %v5416 = vsel %vm5406, %v5287, %v4138
        %v5417 = vsel %vm5406, %v5288, %v4140
        %v5418 = vsel %vm5406, %v5289, %v4142
        %v5419 = vsel %vm5406, %v5290, %v4144
        %v5420 = vsel %vm5406, %v5291, %v4146
        %v5421 = vsel %vm5406, %v5292, %v4148
        %v5422 = vsel %vm5406, %v5293, %v4150
        %v5423 = vsel %vm5406, %v5294, %v4152
        %v5424 = vsel %vm5406, %v5295, %v4154
        %v5425 = vsel %vm5406, %v5296, %v4156
        %v5426 = vsel %vm5406, %v5297, %v4158
        %v5427 = vsel %vm5406, %v5298, %v4160
        %v5428 = vsel %vm5406, %v5299, %v4162
        %v5429 = vsel %vm5406, %v5300, %v4164
        %v5430 = vsel %vm5406, %v5301, %v4166
        %v5431 = vsel %vm5406, %v5302, %v4168
        %v5432 = vsel %vm5406, %v5303, %v4170
        %v5433 = vsel %vm5406, %v5304, %v4172
        %v5434 = vsel %vm5406, %v5305, %v4174
        %v5435 = vsel %vm5406, %v5306, %v4176
        %v5436 = vsel %vm5406, %v5307, %v4178
        %v5437 = vsel %vm5406, %v5308, %v4180
        %v5438 = vsel %vm5406, %v5309, %v4182
        %v5439 = vsel %vm5406, %v5310, %v4184
        %v5440 = vsel %vm5406, %v5311, %v4186
        %v5441 = vsel %vm5406, %v5312, %v4188
        %v5442 = vsel %vm5406, %v5313, %v4190
        %v5443 = vsel %vm5406, %v5314, %v4192
        %v5444 = vsel %vm5406, %v5315, %v4194
        %v5445 = vsel %vm5406, %v5316, %v4196
        %v5446 = vsel %vm5406, %v5317, %v4198
        %v5447 = vsel %vm5406, %v5318, %v4200
        %v5448 = vsel %vm5406, %v5319, %v4202
        %v5449 = vsel %vm5406, %v5320, %v4204
        %v5450 = vsel %vm5406, %v5321, %v4206
        %v5451 = vsel %vm5406, %v5322, %v4208
        %v5452 = vsel %vm5406, %v5323, %v4210
        %v5453 = vsel %vm5406, %v5324, %v4212
        %v5454 = vsel %vm5406, %v5325, %v4214
        %v5455 = vsel %vm5406, %v5326, %v4216
        %v5456 = vsel %vm5406, %v5327, %v4218
        %v5457 = vsel %vm5406, %v5328, %v4220
        %v5458 = vsel %vm5406, %v5329, %v4222
        %v5459 = vsel %vm5406, %v5330, %v4224
        %v5460 = vsel %vm5406, %v5331, %v4226
        %v5461 = vsel %vm5406, %v5332, %v4228
        %v5462 = vsel %vm5406, %v5333, %v4230
        %v5463 = vsel %vm5406, %v5334, %v4232
        %v5464 = vsel %vm5406, %v5335, %v4234
        %v5465 = vsel %vm5406, %v5336, %v4236
        %v5466 = vsel %vm5406, %v5337, %v4238
        %v5467 = vsel %vm5406, %v5338, %v4240
        %v5468 = vsel %vm5406, %v5339, %v4242
        %v5469 = vsel %vm5406, %v5340, %v4244
        %v5470 = vsel %vm5406, %v5341, %v4246
        %v5471 = vsel %vm5406, %v5342, %v4248
        %v5472 = vsel %vm5406, %v5343, %v4250
        %v5473 = vsel %vm5406, %v5344, %v4252
        %v5474 = vsel %vm5406, %v5345, %v4254
        %v5475 = vsel %vm5406, %v5346, %v4256
        %v5476 = vsel %vm5406, %v5347, %v4258
        %v5477 = vsel %vm5406, %v5348, %v4260
        %v5478 = vsel %vm5406, %v5349, %v4262
        %v5479 = vsel %vm5406, %v5350, %v4264
        %v5480 = vsel %vm5406, %v5351, %v4266
        %v5481 = vsel %vm5406, %v5352, %v4268
        %v5482 = vsel %vm5406, %v5353, %v4270
        %v5483 = vsel %vm5406, %v5354, %v4272
        %v5484 = vsel %vm5406, %v5355, %v4274
        %v5485 = vsel %vm5406, %v5356, %v4276
        %v5486 = vsel %vm5406, %v5357, %v4278
        %v5487 = vsel %vm5406, %v5358, %v4280
        %v5488 = vsel %vm5406, %v5359, %v4282
        %v5489 = vsel %vm5406, %v5360, %v4284
        %v5490 = vsel %vm5406, %v5361, %v4286
        %v5491 = vsel %vm5406, %v5362, %v4288
        %v5492 = vsel %vm5406, %v5363, %v4290
        %v5493 = vsel %vm5406, %v5364, %v4292
        %v5494 = vsel %vm5406, %v5365, %v4294
        %v5495 = vsel %vm5406, %v5366, %v4296
        %v5496 = vsel %vm5406, %v5367, %v4298
        %v5497 = vsel %vm5406, %v5368, %v4300
        %v5498 = vsel %vm5406, %v5369, %v4302
        %v5499 = vsel %vm5406, %v5370, %v4304
        %v5500 = vsel %vm5406, %v5371, %v4306
        %v5501 = vsel %vm5406, %v5372, %v4308
        %v5502 = vsel %vm5406, %v5373, %v4310
        %v5503 = vsel %vm5406, %v5374, %v4312
        %v5504 = vsel %vm5406, %v5375, %v4314
        %v5505 = vsel %vm5406, %v5376, %v4316
        %v5506 = vsel %vm5406, %v5377, %v4318
        %v5507 = vsel %vm5406, %v5378, %v4320
        %v5508 = vsel %vm5406, %v5379, %v4322
        %v5509 = vsel %vm5406, %v5380, %v4324
        %v5510 = vsel %vm5406, %v5381, %v4326
        %v5511 = vsel %vm5406, %v5382, %v4328
        %v5512 = vsel %vm5406, %v5383, %v4330
        %v5513 = vsel %vm5406, %v5384, %v4332
        %v5514 = vsel %vm5406, %v5385, %v4334
        %v5515 = vsel %vm5406, %v5386, %v4336
        %v5516 = vsel %vm5406, %v5387, %v4338
        %v5517 = vsel %vm5406, %v5388, %v4340
        %v5518 = vsel %vm5406, %v5389, %v4342
        %v5519 = vsel %vm5406, %v5390, %v4344
        %v5520 = vsel %vm5406, %v5391, %v4346
        %v5521 = vsel %vm5406, %v5392, %v4348
        %v5522 = vsel %vm5406, %v5393, %v4350
        %v5523 = vsel %vm5406, %v5394, %v4352
        %v5524 = vsel %vm5406, %v5395, %v4354
        %v5525 = vsel %vm5406, %v5396, %v4356
        %v5526 = vsel %vm5406, %v5397, %v4358
        %v5527 = vsel %vm5406, %v5398, %v4360
        %v5528 = vsel %vm5406, %v5399, %v4362
        %v5529 = vsel %vm5406, %v5400, %v4364
        %v5530 = vsel %vm5406, %v5401, %v4366
        %v5531 = vsel %vm5406, %v5402, %v4368
        %v5532 = vsel %vm5406, %v5403, %v4370
        %v5533 = vsel %vm5406, %v5404, %v4372
        %v5534 = vsel %vm5406, %v5405, %v4374
        %v5535 = vpack.c.bf16 %v5408, %v5407
        %v5536 = vpack.c.bf16 %v5410, %v5409
        %v5537 = vpack.c.bf16 %v5412, %v5411
        %v5538 = vpack.c.bf16 %v5414, %v5413
        %v5539 = vpack.c.bf16 %v5416, %v5415
        %v5540 = vpack.c.bf16 %v5418, %v5417
        %v5541 = vpack.c.bf16 %v5420, %v5419
        %v5542 = vpack.c.bf16 %v5422, %v5421
        %v5543 = vpack.c.bf16 %v5424, %v5423
        %v5544 = vpack.c.bf16 %v5426, %v5425
        %v5545 = vpack.c.bf16 %v5428, %v5427
        %v5546 = vpack.c.bf16 %v5430, %v5429
        %v5547 = vpack.c.bf16 %v5432, %v5431
        %v5548 = vpack.c.bf16 %v5434, %v5433
        %v5549 = vpack.c.bf16 %v5436, %v5435
        %v5550 = vpack.c.bf16 %v5438, %v5437
        %v5551 = vpack.c.bf16 %v5440, %v5439
        %v5552 = vpack.c.bf16 %v5442, %v5441
        %v5553 = vpack.c.bf16 %v5444, %v5443
        %v5554 = vpack.c.bf16 %v5446, %v5445
        %v5555 = vpack.c.bf16 %v5448, %v5447
        %v5556 = vpack.c.bf16 %v5450, %v5449
        %v5557 = vpack.c.bf16 %v5452, %v5451
        %v5558 = vpack.c.bf16 %v5454, %v5453
        %v5559 = vpack.c.bf16 %v5456, %v5455
        %v5560 = vpack.c.bf16 %v5458, %v5457
        %v5561 = vpack.c.bf16 %v5460, %v5459
        %v5562 = vpack.c.bf16 %v5462, %v5461
        %v5563 = vpack.c.bf16 %v5464, %v5463
        %v5564 = vpack.c.bf16 %v5466, %v5465
        %v5565 = vpack.c.bf16 %v5468, %v5467
        %v5566 = vpack.c.bf16 %v5470, %v5469
        %v5567 = vpack.c.bf16 %v5472, %v5471
        %v5568 = vpack.c.bf16 %v5474, %v5473
        %v5569 = vpack.c.bf16 %v5476, %v5475
        %v5570 = vpack.c.bf16 %v5478, %v5477
        %v5571 = vpack.c.bf16 %v5480, %v5479
        %v5572 = vpack.c.bf16 %v5482, %v5481
        %v5573 = vpack.c.bf16 %v5484, %v5483
        %v5574 = vpack.c.bf16 %v5486, %v5485
        %v5575 = vpack.c.bf16 %v5488, %v5487
        %v5576 = vpack.c.bf16 %v5490, %v5489
        %v5577 = vpack.c.bf16 %v5492, %v5491
        %v5578 = vpack.c.bf16 %v5494, %v5493
        %v5579 = vpack.c.bf16 %v5496, %v5495
        %v5580 = vpack.c.bf16 %v5498, %v5497
        %v5581 = vpack.c.bf16 %v5500, %v5499
        %v5582 = vpack.c.bf16 %v5502, %v5501
        %v5583 = vpack.c.bf16 %v5504, %v5503
        %v5584 = vpack.c.bf16 %v5506, %v5505
        %v5585 = vpack.c.bf16 %v5508, %v5507
        %v5586 = vpack.c.bf16 %v5510, %v5509
        %v5587 = vpack.c.bf16 %v5512, %v5511
        %v5588 = vpack.c.bf16 %v5514, %v5513
        %v5589 = vpack.c.bf16 %v5516, %v5515
        %v5590 = vpack.c.bf16 %v5518, %v5517
        %v5591 = vpack.c.bf16 %v5520, %v5519
        %v5592 = vpack.c.bf16 %v5522, %v5521
        %v5593 = vpack.c.bf16 %v5524, %v5523
        %v5594 = vpack.c.bf16 %v5526, %v5525
        %v5595 = vpack.c.bf16 %v5528, %v5527
        %v5596 = vpack.c.bf16 %v5530, %v5529
        %v5597 = vpack.c.bf16 %v5532, %v5531
        %v5598 = vpack.c.bf16 %v5534, %v5533
        %v5599 = vld [vmem:[%s1] sm:$0xf]
        %v5600 = vld [vmem:[%s1 + $0x4] sm:$0xf]
        %v5601 = vld [vmem:[%s1 + $0x8] sm:$0xf]
        %v5602 = vld [vmem:[%s1 + $0xc] sm:$0x3]
        %v5603 = vld [vmem:[%s2] sm:$0x1]
        %v5605 = vperm.slane %v5603, 0
        %v5611 = vunpack.c.l.b16 %v5599
        %v5612 = vunpack.c.l.b16 %v5600
        %v5613 = vunpack.c.l.b16 %v5601
        %v5614 = vunpack.c.l.b16 %v5602
        %v5615 = vpack.c.b16 %v5612, %v5611
        %v5616 = vpack.c.b16 %v5614, %v5613
        %vm5618 = vcmask 220160
        %v5620 = vsel %vm5618, %v5535, 0
        %v5623 = vsel %vm5618, %v5536, 0
        %v5626 = vsel %vm5618, %v5537, 0
        %v5629 = vsel %vm5618, %v5538, 0
        %v5632 = vsel %vm5618, %v5539, 0
        %v5635 = vsel %vm5618, %v5540, 0
        %v5638 = vsel %vm5618, %v5541, 0
        %v5641 = vsel %vm5618, %v5542, 0
        %v5644 = vsel %vm5618, %v5543, 0
        %v5647 = vsel %vm5618, %v5544, 0
        %v5650 = vsel %vm5618, %v5545, 0
        %v5653 = vsel %vm5618, %v5546, 0
        %v5656 = vsel %vm5618, %v5547, 0
        %v5659 = vsel %vm5618, %v5548, 0
        %v5662 = vsel %vm5618, %v5549, 0
        %v5665 = vsel %vm5618, %v5550, 0
        %v5668 = vsel %vm5618, %v5551, 0
        %v5671 = vsel %vm5618, %v5552, 0
        %v5674 = vsel %vm5618, %v5553, 0
        %v5677 = vsel %vm5618, %v5554, 0
        %v5680 = vsel %vm5618, %v5555, 0
        %v5683 = vsel %vm5618, %v5556, 0
        %v5686 = vsel %vm5618, %v5557, 0
        %v5689 = vsel %vm5618, %v5558, 0
        %v5692 = vsel %vm5618, %v5559, 0
        %v5695 = vsel %vm5618, %v5560, 0
        %v5698 = vsel %vm5618, %v5561, 0
        %v5701 = vsel %vm5618, %v5562, 0
        %v5704 = vsel %vm5618, %v5563, 0
        %v5707 = vsel %vm5618, %v5564, 0
        %v5710 = vsel %vm5618, %v5565, 0
        %v5713 = vsel %vm5618, %v5566, 0
        %v5716 = vsel %vm5618, %v5567, 0
        %v5719 = vsel %vm5618, %v5568, 0
        %v5722 = vsel %vm5618, %v5569, 0
        %v5725 = vsel %vm5618, %v5570, 0
        %v5728 = vsel %vm5618, %v5571, 0
        %v5731 = vsel %vm5618, %v5572, 0
        %v5734 = vsel %vm5618, %v5573, 0
        %v5737 = vsel %vm5618, %v5574, 0
        %v5740 = vsel %vm5618, %v5575, 0
        %v5743 = vsel %vm5618, %v5576, 0
        %v5746 = vsel %vm5618, %v5577, 0
        %v5749 = vsel %vm5618, %v5578, 0
        %v5752 = vsel %vm5618, %v5579, 0
        %v5755 = vsel %vm5618, %v5580, 0
        %v5758 = vsel %vm5618, %v5581, 0
        %v5761 = vsel %vm5618, %v5582, 0
        %v5764 = vsel %vm5618, %v5583, 0
        %v5767 = vsel %vm5618, %v5584, 0
        %v5770 = vsel %vm5618, %v5585, 0
        %v5773 = vsel %vm5618, %v5586, 0
        %v5776 = vsel %vm5618, %v5587, 0
        %v5779 = vsel %vm5618, %v5588, 0
        %v5782 = vsel %vm5618, %v5589, 0
        %v5785 = vsel %vm5618, %v5590, 0
        %v5788 = vsel %vm5618, %v5591, 0
        %v5791 = vsel %vm5618, %v5592, 0
        %v5794 = vsel %vm5618, %v5593, 0
        %v5797 = vsel %vm5618, %v5594, 0
        %v5800 = vsel %vm5618, %v5595, 0
        %v5803 = vsel %vm5618, %v5596, 0
        %v5806 = vsel %vm5618, %v5597, 0
        %v5809 = vsel %vm5618, %v5598, 0
        %vm5811 = vcmask 1044480
        %v5812 = vsel %vm5811, 4294967295, 65535
        %v5813 = vsel %vm1006, %v5812, 0
        %v5815 = vand.u32 %v5616, %v5813
        %5817 = vmatpush.bf16.msra.mxu0 0
        %5818 = vmatpush.bf16.msra.mxu0 0
        %5819 = vmatpush.bf16.msra.mxu0 0
        %5820 = vmatpush.bf16.msra.mxu0 0
        %5821 = vmatpush.bf16.msra.mxu0 0
        %5822 = vmatpush.bf16.msra.mxu0 0
        %5823 = vmatpush.bf16.msra.mxu0 %v5815
        %5824 = vmatpush.bf16.msra.mxu0 %v5615
        %5825 = vmatmul.bf16.gmra.mxu0 %v5620
        %v5826 = vpop.f32.mrf.mxu0
        %v5827 = vadd.f32 %v5605, %v5826
        %v5828 = vpop.f32.mrf.mxu0
        %v5829 = vadd.f32 %v5605, %v5828
        %5830 = vmatmul.bf16.gmra.mxu0 %v5623
        %v5831 = vpop.f32.mrf.mxu0
        %v5832 = vadd.f32 %v5605, %v5831
        %v5833 = vpop.f32.mrf.mxu0
        %v5834 = vadd.f32 %v5605, %v5833
        %5835 = vmatmul.bf16.gmra.mxu0 %v5626
        %v5836 = vpop.f32.mrf.mxu0
        %v5837 = vadd.f32 %v5605, %v5836
        %v5838 = vpop.f32.mrf.mxu0
        %v5839 = vadd.f32 %v5605, %v5838
        %5840 = vmatmul.bf16.gmra.mxu0 %v5629
        %v5841 = vpop.f32.mrf.mxu0
        %v5842 = vadd.f32 %v5605, %v5841
        %v5843 = vpop.f32.mrf.mxu0
        %v5844 = vadd.f32 %v5605, %v5843
        %5845 = vmatmul.bf16.gmra.mxu0 %v5632
        %v5846 = vpop.f32.mrf.mxu0
        %v5847 = vadd.f32 %v5605, %v5846
        %v5848 = vpop.f32.mrf.mxu0
        %v5849 = vadd.f32 %v5605, %v5848
        %5850 = vmatmul.bf16.gmra.mxu0 %v5635
        %v5851 = vpop.f32.mrf.mxu0
        %v5852 = vadd.f32 %v5605, %v5851
        %v5853 = vpop.f32.mrf.mxu0
        %v5854 = vadd.f32 %v5605, %v5853
        %5855 = vmatmul.bf16.gmra.mxu0 %v5638
        %v5856 = vpop.f32.mrf.mxu0
        %v5857 = vadd.f32 %v5605, %v5856
        %v5858 = vpop.f32.mrf.mxu0
        %v5859 = vadd.f32 %v5605, %v5858
        %5860 = vmatmul.bf16.gmra.mxu0 %v5641
        %v5861 = vpop.f32.mrf.mxu0
        %v5862 = vadd.f32 %v5605, %v5861
        %v5863 = vpop.f32.mrf.mxu0
        %v5864 = vadd.f32 %v5605, %v5863
        %5865 = vmatmul.bf16.gmra.mxu0 %v5644
        %v5866 = vpop.f32.mrf.mxu0
        %v5867 = vadd.f32 %v5605, %v5866
        %v5868 = vpop.f32.mrf.mxu0
        %v5869 = vadd.f32 %v5605, %v5868
        %5870 = vmatmul.bf16.gmra.mxu0 %v5647
        %v5871 = vpop.f32.mrf.mxu0
        %v5872 = vadd.f32 %v5605, %v5871
        %v5873 = vpop.f32.mrf.mxu0
        %v5874 = vadd.f32 %v5605, %v5873
        %5875 = vmatmul.bf16.gmra.mxu0 %v5650
        %v5876 = vpop.f32.mrf.mxu0
        %v5877 = vadd.f32 %v5605, %v5876
        %v5878 = vpop.f32.mrf.mxu0
        %v5879 = vadd.f32 %v5605, %v5878
        %5880 = vmatmul.bf16.gmra.mxu0 %v5653
        %v5881 = vpop.f32.mrf.mxu0
        %v5882 = vadd.f32 %v5605, %v5881
        %v5883 = vpop.f32.mrf.mxu0
        %v5884 = vadd.f32 %v5605, %v5883
        %5885 = vmatmul.bf16.gmra.mxu0 %v5656
        %v5886 = vpop.f32.mrf.mxu0
        %v5887 = vadd.f32 %v5605, %v5886
        %v5888 = vpop.f32.mrf.mxu0
        %v5889 = vadd.f32 %v5605, %v5888
        %5890 = vmatmul.bf16.gmra.mxu0 %v5659
        %v5891 = vpop.f32.mrf.mxu0
        %v5892 = vadd.f32 %v5605, %v5891
        %v5893 = vpop.f32.mrf.mxu0
        %v5894 = vadd.f32 %v5605, %v5893
        %5895 = vmatmul.bf16.gmra.mxu0 %v5662
        %v5896 = vpop.f32.mrf.mxu0
        %v5897 = vadd.f32 %v5605, %v5896
        %v5898 = vpop.f32.mrf.mxu0
        %v5899 = vadd.f32 %v5605, %v5898
        %5900 = vmatmul.bf16.gmra.mxu0 %v5665
        %v5901 = vpop.f32.mrf.mxu0
        %v5902 = vadd.f32 %v5605, %v5901
        %v5903 = vpop.f32.mrf.mxu0
        %v5904 = vadd.f32 %v5605, %v5903
        %5905 = vmatmul.bf16.gmra.mxu0 %v5668
        %v5906 = vpop.f32.mrf.mxu0
        %v5907 = vadd.f32 %v5605, %v5906
        %v5908 = vpop.f32.mrf.mxu0
        %v5909 = vadd.f32 %v5605, %v5908
        %5910 = vmatmul.bf16.gmra.mxu0 %v5671
        %v5911 = vpop.f32.mrf.mxu0
        %v5912 = vadd.f32 %v5605, %v5911
        %v5913 = vpop.f32.mrf.mxu0
        %v5914 = vadd.f32 %v5605, %v5913
        %5915 = vmatmul.bf16.gmra.mxu0 %v5674
        %v5916 = vpop.f32.mrf.mxu0
        %v5917 = vadd.f32 %v5605, %v5916
        %v5918 = vpop.f32.mrf.mxu0
        %v5919 = vadd.f32 %v5605, %v5918
        %5920 = vmatmul.bf16.gmra.mxu0 %v5677
        %v5921 = vpop.f32.mrf.mxu0
        %v5922 = vadd.f32 %v5605, %v5921
        %v5923 = vpop.f32.mrf.mxu0
        %v5924 = vadd.f32 %v5605, %v5923
        %5925 = vmatmul.bf16.gmra.mxu0 %v5680
        %v5926 = vpop.f32.mrf.mxu0
        %v5927 = vadd.f32 %v5605, %v5926
        %v5928 = vpop.f32.mrf.mxu0
        %v5929 = vadd.f32 %v5605, %v5928
        %5930 = vmatmul.bf16.gmra.mxu0 %v5683
        %v5931 = vpop.f32.mrf.mxu0
        %v5932 = vadd.f32 %v5605, %v5931
        %v5933 = vpop.f32.mrf.mxu0
        %v5934 = vadd.f32 %v5605, %v5933
        %5935 = vmatmul.bf16.gmra.mxu0 %v5686
        %v5936 = vpop.f32.mrf.mxu0
        %v5937 = vadd.f32 %v5605, %v5936
        %v5938 = vpop.f32.mrf.mxu0
        %v5939 = vadd.f32 %v5605, %v5938
        %5940 = vmatmul.bf16.gmra.mxu0 %v5689
        %v5941 = vpop.f32.mrf.mxu0
        %v5942 = vadd.f32 %v5605, %v5941
        %v5943 = vpop.f32.mrf.mxu0
        %v5944 = vadd.f32 %v5605, %v5943
        %5945 = vmatmul.bf16.gmra.mxu0 %v5692
        %v5946 = vpop.f32.mrf.mxu0
        %v5947 = vadd.f32 %v5605, %v5946
        %v5948 = vpop.f32.mrf.mxu0
        %v5949 = vadd.f32 %v5605, %v5948
        %5950 = vmatmul.bf16.gmra.mxu0 %v5695
        %v5951 = vpop.f32.mrf.mxu0
        %v5952 = vadd.f32 %v5605, %v5951
        %v5953 = vpop.f32.mrf.mxu0
        %v5954 = vadd.f32 %v5605, %v5953
        %5955 = vmatmul.bf16.gmra.mxu0 %v5698
        %v5956 = vpop.f32.mrf.mxu0
        %v5957 = vadd.f32 %v5605, %v5956
        %v5958 = vpop.f32.mrf.mxu0
        %v5959 = vadd.f32 %v5605, %v5958
        %5960 = vmatmul.bf16.gmra.mxu0 %v5701
        %v5961 = vpop.f32.mrf.mxu0
        %v5962 = vadd.f32 %v5605, %v5961
        %v5963 = vpop.f32.mrf.mxu0
        %v5964 = vadd.f32 %v5605, %v5963
        %5965 = vmatmul.bf16.gmra.mxu0 %v5704
        %v5966 = vpop.f32.mrf.mxu0
        %v5967 = vadd.f32 %v5605, %v5966
        %v5968 = vpop.f32.mrf.mxu0
        %v5969 = vadd.f32 %v5605, %v5968
        %5970 = vmatmul.bf16.gmra.mxu0 %v5707
        %v5971 = vpop.f32.mrf.mxu0
        %v5972 = vadd.f32 %v5605, %v5971
        %v5973 = vpop.f32.mrf.mxu0
        %v5974 = vadd.f32 %v5605, %v5973
        %5975 = vmatmul.bf16.gmra.mxu0 %v5710
        %v5976 = vpop.f32.mrf.mxu0
        %v5977 = vadd.f32 %v5605, %v5976
        %v5978 = vpop.f32.mrf.mxu0
        %v5979 = vadd.f32 %v5605, %v5978
        %5980 = vmatmul.bf16.gmra.mxu0 %v5713
        %v5981 = vpop.f32.mrf.mxu0
        %v5982 = vadd.f32 %v5605, %v5981
        %v5983 = vpop.f32.mrf.mxu0
        %v5984 = vadd.f32 %v5605, %v5983
        %5985 = vmatmul.bf16.gmra.mxu0 %v5716
        %v5986 = vpop.f32.mrf.mxu0
        %v5987 = vadd.f32 %v5605, %v5986
        %v5988 = vpop.f32.mrf.mxu0
        %v5989 = vadd.f32 %v5605, %v5988
        %5990 = vmatmul.bf16.gmra.mxu0 %v5719
        %v5991 = vpop.f32.mrf.mxu0
        %v5992 = vadd.f32 %v5605, %v5991
        %v5993 = vpop.f32.mrf.mxu0
        %v5994 = vadd.f32 %v5605, %v5993
        %5995 = vmatmul.bf16.gmra.mxu0 %v5722
        %v5996 = vpop.f32.mrf.mxu0
        %v5997 = vadd.f32 %v5605, %v5996
        %v5998 = vpop.f32.mrf.mxu0
        %v5999 = vadd.f32 %v5605, %v5998
        %6000 = vmatmul.bf16.gmra.mxu0 %v5725
        %v6001 = vpop.f32.mrf.mxu0
        %v6002 = vadd.f32 %v5605, %v6001
        %v6003 = vpop.f32.mrf.mxu0
        %v6004 = vadd.f32 %v5605, %v6003
        %6005 = vmatmul.bf16.gmra.mxu0 %v5728
        %v6006 = vpop.f32.mrf.mxu0
        %v6007 = vadd.f32 %v5605, %v6006
        %v6008 = vpop.f32.mrf.mxu0
        %v6009 = vadd.f32 %v5605, %v6008
        %6010 = vmatmul.bf16.gmra.mxu0 %v5731
        %v6011 = vpop.f32.mrf.mxu0
        %v6012 = vadd.f32 %v5605, %v6011
        %v6013 = vpop.f32.mrf.mxu0
        %v6014 = vadd.f32 %v5605, %v6013
        %6015 = vmatmul.bf16.gmra.mxu0 %v5734
        %v6016 = vpop.f32.mrf.mxu0
        %v6017 = vadd.f32 %v5605, %v6016
        %v6018 = vpop.f32.mrf.mxu0
        %v6019 = vadd.f32 %v5605, %v6018
        %6020 = vmatmul.bf16.gmra.mxu0 %v5737
        %v6021 = vpop.f32.mrf.mxu0
        %v6022 = vadd.f32 %v5605, %v6021
        %v6023 = vpop.f32.mrf.mxu0
        %v6024 = vadd.f32 %v5605, %v6023
        %6025 = vmatmul.bf16.gmra.mxu0 %v5740
        %v6026 = vpop.f32.mrf.mxu0
        %v6027 = vadd.f32 %v5605, %v6026
        %v6028 = vpop.f32.mrf.mxu0
        %v6029 = vadd.f32 %v5605, %v6028
        %6030 = vmatmul.bf16.gmra.mxu0 %v5743
        %v6031 = vpop.f32.mrf.mxu0
        %v6032 = vadd.f32 %v5605, %v6031
        %v6033 = vpop.f32.mrf.mxu0
        %v6034 = vadd.f32 %v5605, %v6033
        %6035 = vmatmul.bf16.gmra.mxu0 %v5746
        %v6036 = vpop.f32.mrf.mxu0
        %v6037 = vadd.f32 %v5605, %v6036
        %v6038 = vpop.f32.mrf.mxu0
        %v6039 = vadd.f32 %v5605, %v6038
        %6040 = vmatmul.bf16.gmra.mxu0 %v5749
        %v6041 = vpop.f32.mrf.mxu0
        %v6042 = vadd.f32 %v5605, %v6041
        %v6043 = vpop.f32.mrf.mxu0
        %v6044 = vadd.f32 %v5605, %v6043
        %6045 = vmatmul.bf16.gmra.mxu0 %v5752
        %v6046 = vpop.f32.mrf.mxu0
        %v6047 = vadd.f32 %v5605, %v6046
        %v6048 = vpop.f32.mrf.mxu0
        %v6049 = vadd.f32 %v5605, %v6048
        %6050 = vmatmul.bf16.gmra.mxu0 %v5755
        %v6051 = vpop.f32.mrf.mxu0
        %v6052 = vadd.f32 %v5605, %v6051
        %v6053 = vpop.f32.mrf.mxu0
        %v6054 = vadd.f32 %v5605, %v6053
        %6055 = vmatmul.bf16.gmra.mxu0 %v5758
        %v6056 = vpop.f32.mrf.mxu0
        %v6057 = vadd.f32 %v5605, %v6056
        %v6058 = vpop.f32.mrf.mxu0
        %v6059 = vadd.f32 %v5605, %v6058
        %6060 = vmatmul.bf16.gmra.mxu0 %v5761
        %v6061 = vpop.f32.mrf.mxu0
        %v6062 = vadd.f32 %v5605, %v6061
        %v6063 = vpop.f32.mrf.mxu0
        %v6064 = vadd.f32 %v5605, %v6063
        %6065 = vmatmul.bf16.gmra.mxu0 %v5764
        %v6066 = vpop.f32.mrf.mxu0
        %v6067 = vadd.f32 %v5605, %v6066
        %v6068 = vpop.f32.mrf.mxu0
        %v6069 = vadd.f32 %v5605, %v6068
        %6070 = vmatmul.bf16.gmra.mxu0 %v5767
        %v6071 = vpop.f32.mrf.mxu0
        %v6072 = vadd.f32 %v5605, %v6071
        %v6073 = vpop.f32.mrf.mxu0
        %v6074 = vadd.f32 %v5605, %v6073
        %6075 = vmatmul.bf16.gmra.mxu0 %v5770
        %v6076 = vpop.f32.mrf.mxu0
        %v6077 = vadd.f32 %v5605, %v6076
        %v6078 = vpop.f32.mrf.mxu0
        %v6079 = vadd.f32 %v5605, %v6078
        %6080 = vmatmul.bf16.gmra.mxu0 %v5773
        %v6081 = vpop.f32.mrf.mxu0
        %v6082 = vadd.f32 %v5605, %v6081
        %v6083 = vpop.f32.mrf.mxu0
        %v6084 = vadd.f32 %v5605, %v6083
        %6085 = vmatmul.bf16.gmra.mxu0 %v5776
        %v6086 = vpop.f32.mrf.mxu0
        %v6087 = vadd.f32 %v5605, %v6086
        %v6088 = vpop.f32.mrf.mxu0
        %v6089 = vadd.f32 %v5605, %v6088
        %6090 = vmatmul.bf16.gmra.mxu0 %v5779
        %v6091 = vpop.f32.mrf.mxu0
        %v6092 = vadd.f32 %v5605, %v6091
        %v6093 = vpop.f32.mrf.mxu0
        %v6094 = vadd.f32 %v5605, %v6093
        %6095 = vmatmul.bf16.gmra.mxu0 %v5782
        %v6096 = vpop.f32.mrf.mxu0
        %v6097 = vadd.f32 %v5605, %v6096
        %v6098 = vpop.f32.mrf.mxu0
        %v6099 = vadd.f32 %v5605, %v6098
        %6100 = vmatmul.bf16.gmra.mxu0 %v5785
        %v6101 = vpop.f32.mrf.mxu0
        %v6102 = vadd.f32 %v5605, %v6101
        %v6103 = vpop.f32.mrf.mxu0
        %v6104 = vadd.f32 %v5605, %v6103
        %6105 = vmatmul.bf16.gmra.mxu0 %v5788
        %v6106 = vpop.f32.mrf.mxu0
        %v6107 = vadd.f32 %v5605, %v6106
        %v6108 = vpop.f32.mrf.mxu0
        %v6109 = vadd.f32 %v5605, %v6108
        %6110 = vmatmul.bf16.gmra.mxu0 %v5791
        %v6111 = vpop.f32.mrf.mxu0
        %v6112 = vadd.f32 %v5605, %v6111
        %v6113 = vpop.f32.mrf.mxu0
        %v6114 = vadd.f32 %v5605, %v6113
        %6115 = vmatmul.bf16.gmra.mxu0 %v5794
        %v6116 = vpop.f32.mrf.mxu0
        %v6117 = vadd.f32 %v5605, %v6116
        %v6118 = vpop.f32.mrf.mxu0
        %v6119 = vadd.f32 %v5605, %v6118
        %6120 = vmatmul.bf16.gmra.mxu0 %v5797
        %v6121 = vpop.f32.mrf.mxu0
        %v6122 = vadd.f32 %v5605, %v6121
        %v6123 = vpop.f32.mrf.mxu0
        %v6124 = vadd.f32 %v5605, %v6123
        %6125 = vmatmul.bf16.gmra.mxu0 %v5800
        %v6126 = vpop.f32.mrf.mxu0
        %v6127 = vadd.f32 %v5605, %v6126
        %v6128 = vpop.f32.mrf.mxu0
        %v6129 = vadd.f32 %v5605, %v6128
        %6130 = vmatmul.bf16.gmra.mxu0 %v5803
        %v6131 = vpop.f32.mrf.mxu0
        %v6132 = vadd.f32 %v5605, %v6131
        %v6133 = vpop.f32.mrf.mxu0
        %v6134 = vadd.f32 %v5605, %v6133
        %6135 = vmatmul.bf16.gmra.mxu0 %v5806
        %v6136 = vpop.f32.mrf.mxu0
        %v6137 = vadd.f32 %v5605, %v6136
        %v6138 = vpop.f32.mrf.mxu0
        %v6139 = vadd.f32 %v5605, %v6138
        %6140 = vmatmul.bf16.gmra.mxu0 %v5809
        %v6141 = vpop.f32.mrf.mxu0
        %v6142 = vadd.f32 %v5605, %v6141
        %v6143 = vpop.f32.mrf.mxu0
        %v6144 = vadd.f32 %v5605, %v6143
        %6145 = vdwg.mxu0
        %v6146 = vmax.f32 %v5827, 0.0
        %v6147 = vmax.f32 %v5829, 0.0
        %v6148 = vmax.f32 %v5832, 0.0
        %v6149 = vmax.f32 %v5834, 0.0
        %v6150 = vmax.f32 %v5837, 0.0
        %v6151 = vmax.f32 %v5839, 0.0
        %v6152 = vmax.f32 %v5842, 0.0
        %v6153 = vmax.f32 %v5844, 0.0
        %v6154 = vmax.f32 %v5847, 0.0
        %v6155 = vmax.f32 %v5849, 0.0
        %v6156 = vmax.f32 %v5852, 0.0
        %v6157 = vmax.f32 %v5854, 0.0
        %v6158 = vmax.f32 %v5857, 0.0
        %v6159 = vmax.f32 %v5859, 0.0
        %v6160 = vmax.f32 %v5862, 0.0
        %v6161 = vmax.f32 %v5864, 0.0
        %v6162 = vmax.f32 %v5867, 0.0
        %v6163 = vmax.f32 %v5869, 0.0
        %v6164 = vmax.f32 %v5872, 0.0
        %v6165 = vmax.f32 %v5874, 0.0
        %v6166 = vmax.f32 %v5877, 0.0
        %v6167 = vmax.f32 %v5879, 0.0
        %v6168 = vmax.f32 %v5882, 0.0
        %v6169 = vmax.f32 %v5884, 0.0
        %v6170 = vmax.f32 %v5887, 0.0
        %v6171 = vmax.f32 %v5889, 0.0
        %v6172 = vmax.f32 %v5892, 0.0
        %v6173 = vmax.f32 %v5894, 0.0
        %v6174 = vmax.f32 %v5897, 0.0
        %v6175 = vmax.f32 %v5899, 0.0
        %v6176 = vmax.f32 %v5902, 0.0
        %v6177 = vmax.f32 %v5904, 0.0
        %v6178 = vmax.f32 %v5907, 0.0
        %v6179 = vmax.f32 %v5909, 0.0
        %v6180 = vmax.f32 %v5912, 0.0
        %v6181 = vmax.f32 %v5914, 0.0
        %v6182 = vmax.f32 %v5917, 0.0
        %v6183 = vmax.f32 %v5919, 0.0
        %v6184 = vmax.f32 %v5922, 0.0
        %v6185 = vmax.f32 %v5924, 0.0
        %v6186 = vmax.f32 %v5927, 0.0
        %v6187 = vmax.f32 %v5929, 0.0
        %v6188 = vmax.f32 %v5932, 0.0
        %v6189 = vmax.f32 %v5934, 0.0
        %v6190 = vmax.f32 %v5937, 0.0
        %v6191 = vmax.f32 %v5939, 0.0
        %v6192 = vmax.f32 %v5942, 0.0
        %v6193 = vmax.f32 %v5944, 0.0
        %v6194 = vmax.f32 %v5947, 0.0
        %v6195 = vmax.f32 %v5949, 0.0
        %v6196 = vmax.f32 %v5952, 0.0
        %v6197 = vmax.f32 %v5954, 0.0
        %v6198 = vmax.f32 %v5957, 0.0
        %v6199 = vmax.f32 %v5959, 0.0
        %v6200 = vmax.f32 %v5962, 0.0
        %v6201 = vmax.f32 %v5964, 0.0
        %v6202 = vmax.f32 %v5967, 0.0
        %v6203 = vmax.f32 %v5969, 0.0
        %v6204 = vmax.f32 %v5972, 0.0
        %v6205 = vmax.f32 %v5974, 0.0
        %v6206 = vmax.f32 %v5977, 0.0
        %v6207 = vmax.f32 %v5979, 0.0
        %v6208 = vmax.f32 %v5982, 0.0
        %v6209 = vmax.f32 %v5984, 0.0
        %v6210 = vmax.f32 %v5987, 0.0
        %v6211 = vmax.f32 %v5989, 0.0
        %v6212 = vmax.f32 %v5992, 0.0
        %v6213 = vmax.f32 %v5994, 0.0
        %v6214 = vmax.f32 %v5997, 0.0
        %v6215 = vmax.f32 %v5999, 0.0
        %v6216 = vmax.f32 %v6002, 0.0
        %v6217 = vmax.f32 %v6004, 0.0
        %v6218 = vmax.f32 %v6007, 0.0
        %v6219 = vmax.f32 %v6009, 0.0
        %v6220 = vmax.f32 %v6012, 0.0
        %v6221 = vmax.f32 %v6014, 0.0
        %v6222 = vmax.f32 %v6017, 0.0
        %v6223 = vmax.f32 %v6019, 0.0
        %v6224 = vmax.f32 %v6022, 0.0
        %v6225 = vmax.f32 %v6024, 0.0
        %v6226 = vmax.f32 %v6027, 0.0
        %v6227 = vmax.f32 %v6029, 0.0
        %v6228 = vmax.f32 %v6032, 0.0
        %v6229 = vmax.f32 %v6034, 0.0
        %v6230 = vmax.f32 %v6037, 0.0
        %v6231 = vmax.f32 %v6039, 0.0
        %v6232 = vmax.f32 %v6042, 0.0
        %v6233 = vmax.f32 %v6044, 0.0
        %v6234 = vmax.f32 %v6047, 0.0
        %v6235 = vmax.f32 %v6049, 0.0
        %v6236 = vmax.f32 %v6052, 0.0
        %v6237 = vmax.f32 %v6054, 0.0
        %v6238 = vmax.f32 %v6057, 0.0
        %v6239 = vmax.f32 %v6059, 0.0
        %v6240 = vmax.f32 %v6062, 0.0
        %v6241 = vmax.f32 %v6064, 0.0
        %v6242 = vmax.f32 %v6067, 0.0
        %v6243 = vmax.f32 %v6069, 0.0
        %v6244 = vmax.f32 %v6072, 0.0
        %v6245 = vmax.f32 %v6074, 0.0
        %v6246 = vmax.f32 %v6077, 0.0
        %v6247 = vmax.f32 %v6079, 0.0
        %v6248 = vmax.f32 %v6082, 0.0
        %v6249 = vmax.f32 %v6084, 0.0
        %v6250 = vmax.f32 %v6087, 0.0
        %v6251 = vmax.f32 %v6089, 0.0
        %v6252 = vmax.f32 %v6092, 0.0
        %v6253 = vmax.f32 %v6094, 0.0
        %v6254 = vmax.f32 %v6097, 0.0
        %v6255 = vmax.f32 %v6099, 0.0
        %v6256 = vmax.f32 %v6102, 0.0
        %v6257 = vmax.f32 %v6104, 0.0
        %v6258 = vmax.f32 %v6107, 0.0
        %v6259 = vmax.f32 %v6109, 0.0
        %v6260 = vmax.f32 %v6112, 0.0
        %v6261 = vmax.f32 %v6114, 0.0
        %v6262 = vmax.f32 %v6117, 0.0
        %v6263 = vmax.f32 %v6119, 0.0
        %v6264 = vmax.f32 %v6122, 0.0
        %v6265 = vmax.f32 %v6124, 0.0
        %v6266 = vmax.f32 %v6127, 0.0
        %v6267 = vmax.f32 %v6129, 0.0
        %v6268 = vmax.f32 %v6132, 0.0
        %v6269 = vmax.f32 %v6134, 0.0
        %v6270 = vmax.f32 %v6137, 0.0
        %v6271 = vmax.f32 %v6139, 0.0
        %v6272 = vmax.f32 %v6142, 0.0
        %v6273 = vmax.f32 %v6144, 0.0
        %v6274 = vadd.f32 %v6146, %v6147
        %v6275 = vadd.f32 %v6274, %v6148
        %v6276 = vadd.f32 %v6275, %v6149
        %v6277 = vadd.f32 %v6276, %v6150
        %v6278 = vadd.f32 %v6277, %v6151
        %v6279 = vadd.f32 %v6278, %v6152
        %v6280 = vadd.f32 %v6279, %v6153
        %v6281 = vadd.f32 %v6280, %v6154
        %v6282 = vadd.f32 %v6281, %v6155
        %v6283 = vadd.f32 %v6282, %v6156
        %v6284 = vadd.f32 %v6283, %v6157
        %v6285 = vadd.f32 %v6284, %v6158
        %v6286 = vadd.f32 %v6285, %v6159
        %v6287 = vadd.f32 %v6286, %v6160
        %v6288 = vadd.f32 %v6287, %v6161
        %v6289 = vadd.f32 %v6288, %v6162
        %v6290 = vadd.f32 %v6289, %v6163
        %v6291 = vadd.f32 %v6290, %v6164
        %v6292 = vadd.f32 %v6291, %v6165
        %v6293 = vadd.f32 %v6292, %v6166
        %v6294 = vadd.f32 %v6293, %v6167
        %v6295 = vadd.f32 %v6294, %v6168
        %v6296 = vadd.f32 %v6295, %v6169
        %v6297 = vadd.f32 %v6296, %v6170
        %v6298 = vadd.f32 %v6297, %v6171
        %v6299 = vadd.f32 %v6298, %v6172
        %v6300 = vadd.f32 %v6299, %v6173
        %v6301 = vadd.f32 %v6300, %v6174
        %v6302 = vadd.f32 %v6301, %v6175
        %v6303 = vadd.f32 %v6302, %v6176
        %v6304 = vadd.f32 %v6303, %v6177
        %v6305 = vrot.slane %v6304, 4
        %v6306 = vadd.f32 %v6304, %v6305
        %v6307 = vrot.slane %v6306, 2
        %v6308 = vadd.f32 %v6306, %v6307
        %v6309 = vrot.slane %v6308, 1
        %v6310 = vadd.f32 %v6308, %v6309
        %v6311 = vadd.f32 %v6178, %v6179
        %v6312 = vadd.f32 %v6311, %v6180
        %v6313 = vadd.f32 %v6312, %v6181
        %v6314 = vadd.f32 %v6313, %v6182
        %v6315 = vadd.f32 %v6314, %v6183
        %v6316 = vadd.f32 %v6315, %v6184
        %v6317 = vadd.f32 %v6316, %v6185
        %v6318 = vadd.f32 %v6317, %v6186
        %v6319 = vadd.f32 %v6318, %v6187
        %v6320 = vadd.f32 %v6319, %v6188
        %v6321 = vadd.f32 %v6320, %v6189
        %v6322 = vadd.f32 %v6321, %v6190
        %v6323 = vadd.f32 %v6322, %v6191
        %v6324 = vadd.f32 %v6323, %v6192
        %v6325 = vadd.f32 %v6324, %v6193
        %v6326 = vadd.f32 %v6325, %v6194
        %v6327 = vadd.f32 %v6326, %v6195
        %v6328 = vadd.f32 %v6327, %v6196
        %v6329 = vadd.f32 %v6328, %v6197
        %v6330 = vadd.f32 %v6329, %v6198
        %v6331 = vadd.f32 %v6330, %v6199
        %v6332 = vadd.f32 %v6331, %v6200
        %v6333 = vadd.f32 %v6332, %v6201
        %v6334 = vadd.f32 %v6333, %v6202
        %v6335 = vadd.f32 %v6334, %v6203
        %v6336 = vadd.f32 %v6335, %v6204
        %v6337 = vadd.f32 %v6336, %v6205
        %v6338 = vadd.f32 %v6337, %v6206
        %v6339 = vadd.f32 %v6338, %v6207
        %v6340 = vadd.f32 %v6339, %v6208
        %v6341 = vadd.f32 %v6340, %v6209
        %v6342 = vrot.slane %v6341, 4
        %v6343 = vadd.f32 %v6341, %v6342
        %v6344 = vrot.slane %v6343, 2
        %v6345 = vadd.f32 %v6343, %v6344
        %v6346 = vrot.slane %v6345, 1
        %v6347 = vadd.f32 %v6345, %v6346
        %v6348 = vadd.f32 %v6210, %v6211
        %v6349 = vadd.f32 %v6348, %v6212
        %v6350 = vadd.f32 %v6349, %v6213
        %v6351 = vadd.f32 %v6350, %v6214
        %v6352 = vadd.f32 %v6351, %v6215
        %v6353 = vadd.f32 %v6352, %v6216
        %v6354 = vadd.f32 %v6353, %v6217
        %v6355 = vadd.f32 %v6354, %v6218
        %v6356 = vadd.f32 %v6355, %v6219
        %v6357 = vadd.f32 %v6356, %v6220
        %v6358 = vadd.f32 %v6357, %v6221
        %v6359 = vadd.f32 %v6358, %v6222
        %v6360 = vadd.f32 %v6359, %v6223
        %v6361 = vadd.f32 %v6360, %v6224
        %v6362 = vadd.f32 %v6361, %v6225
        %v6363 = vadd.f32 %v6362, %v6226
        %v6364 = vadd.f32 %v6363, %v6227
        %v6365 = vadd.f32 %v6364, %v6228
        %v6366 = vadd.f32 %v6365, %v6229
        %v6367 = vadd.f32 %v6366, %v6230
        %v6368 = vadd.f32 %v6367, %v6231
        %v6369 = vadd.f32 %v6368, %v6232
        %v6370 = vadd.f32 %v6369, %v6233
        %v6371 = vadd.f32 %v6370, %v6234
        %v6372 = vadd.f32 %v6371, %v6235
        %v6373 = vadd.f32 %v6372, %v6236
        %v6374 = vadd.f32 %v6373, %v6237
        %v6375 = vadd.f32 %v6374, %v6238
        %v6376 = vadd.f32 %v6375, %v6239
        %v6377 = vadd.f32 %v6376, %v6240
        %v6378 = vadd.f32 %v6377, %v6241
        %v6379 = vrot.slane %v6378, 4
        %v6380 = vadd.f32 %v6378, %v6379
        %v6381 = vrot.slane %v6380, 2
        %v6382 = vadd.f32 %v6380, %v6381
        %v6383 = vrot.slane %v6382, 1
        %v6384 = vadd.f32 %v6382, %v6383
        %v6385 = vadd.f32 %v6242, %v6243
        %v6386 = vadd.f32 %v6385, %v6244
        %v6387 = vadd.f32 %v6386, %v6245
        %v6388 = vadd.f32 %v6387, %v6246
        %v6389 = vadd.f32 %v6388, %v6247
        %v6390 = vadd.f32 %v6389, %v6248
        %v6391 = vadd.f32 %v6390, %v6249
        %v6392 = vadd.f32 %v6391, %v6250
        %v6393 = vadd.f32 %v6392, %v6251
        %v6394 = vadd.f32 %v6393, %v6252
        %v6395 = vadd.f32 %v6394, %v6253
        %v6396 = vadd.f32 %v6395, %v6254
        %v6397 = vadd.f32 %v6396, %v6255
        %v6398 = vadd.f32 %v6397, %v6256
        %v6399 = vadd.f32 %v6398, %v6257
        %v6400 = vadd.f32 %v6399, %v6258
        %v6401 = vadd.f32 %v6400, %v6259
        %v6402 = vadd.f32 %v6401, %v6260
        %v6403 = vadd.f32 %v6402, %v6261
        %v6404 = vadd.f32 %v6403, %v6262
        %v6405 = vadd.f32 %v6404, %v6263
        %v6406 = vadd.f32 %v6405, %v6264
        %v6407 = vadd.f32 %v6406, %v6265
        %v6408 = vadd.f32 %v6407, %v6266
        %v6409 = vadd.f32 %v6408, %v6267
        %v6410 = vadd.f32 %v6409, %v6268
        %v6411 = vadd.f32 %v6410, %v6269
        %v6412 = vadd.f32 %v6411, %v6270
        %v6413 = vadd.f32 %v6412, %v6271
        %v6414 = vadd.f32 %v6413, %v6272
        %v6415 = vadd.f32 %v6414, %v6273
        %v6416 = vrot.slane %v6415, 4
        %v6417 = vadd.f32 %v6415, %v6416
        %v6418 = vrot.slane %v6417, 2
        %v6419 = vadd.f32 %v6417, %v6418
        %v6420 = vrot.slane %v6419, 1
        %v6421 = vadd.f32 %v6419, %v6420
        %v6422 = vrcp.pop 256.0
        %v6423 = vmul.f32 256.0, %v6422
        %v6424 = vsub.f32 1.0, %v6423
        %v6425 = vmul.f32 %v6422, %v6424
        %v6426 = vadd.f32 %v6422, %v6425
        %vm6427 = vweird.f32 %v6422
        %v6428 = vsel %vm6427, %v6422, %v6426
        %v6429 = vmul.f32 %v6310, %v6428
        %v6430 = vmul.f32 %v6347, %v6428
        %v6431 = vmul.f32 %v6384, %v6428
        %v6432 = vmul.f32 %v6421, %v6428
        %v6433 = vld [vmem:[%s3] sm:$0xff]
        %v6434 = vld [vmem:[%s3 + $0x8] sm:$0xff]
        %v6435 = vld [vmem:[%s3 + $0x10] sm:$0xff]
        %v6436 = vld [vmem:[%s3 + $0x18] sm:$0xff]
        %v6437 = vld [vmem:[%s3 + $0x20] sm:$0xff]
        %v6438 = vld [vmem:[%s3 + $0x28] sm:$0xff]
        %v6439 = vld [vmem:[%s3 + $0x30] sm:$0xff]
        %v6440 = vld [vmem:[%s3 + $0x38] sm:$0xff]
        %v6441 = vld [vmem:[%s3 + $0x40] sm:$0xff]
        %v6442 = vld [vmem:[%s3 + $0x48] sm:$0xff]
        %v6443 = vld [vmem:[%s3 + $0x50] sm:$0xff]
        %v6444 = vld [vmem:[%s3 + $0x58] sm:$0xff]
        %v6445 = vld [vmem:[%s3 + $0x60] sm:$0xff]
        %v6446 = vld [vmem:[%s3 + $0x68] sm:$0xff]
        %v6447 = vld [vmem:[%s3 + $0x70] sm:$0xff]
        %v6448 = vld [vmem:[%s3 + $0x78] sm:$0xff]
        %v6449 = vld [vmem:[%s4] sm:$0x1]
        %v6451 = vperm.slane %v6449, 0
        %vm6457 = vcmask 1041409
        %v6458 = vsel %vm6457, %v6430, %v6429
        %vm6459 = vcmask 1042434
        %v6460 = vsel %vm6459, %v6431, %v6458
        %vm6461 = vcmask 1043459
        %v6462 = vsel %vm6461, %v6432, %v6460
        %6464 = vmatpush.msra.mxu0 %v6448
        %6465 = vmatpush.msra.mxu0 %v6447
        %6466 = vmatpush.msra.mxu0 %v6446
        %6467 = vmatpush.msra.mxu0 %v6445
        %6468 = vmatpush.msra.mxu0 %v6444
        %6469 = vmatpush.msra.mxu0 %v6443
        %6470 = vmatpush.msra.mxu0 %v6442
        %6471 = vmatpush.msra.mxu0 %v6441
        %6472 = vmatpush.msra.mxu0 %v6440
        %6473 = vmatpush.msra.mxu0 %v6439
        %6474 = vmatpush.msra.mxu0 %v6438
        %6475 = vmatpush.msra.mxu0 %v6437
        %6476 = vmatpush.msra.mxu0 %v6436
        %6477 = vmatpush.msra.mxu0 %v6435
        %6478 = vmatpush.msra.mxu0 %v6434
        %6479 = vmatpush.msra.mxu0 %v6433
        %6480 = vmatmul.f32.gmra.mxu0 %v6462
        %v6481 = vpop.f32.mrf.mxu0
        %v6482 = vadd.f32 %v6451, %v6481
        %6483 = vdwg.mxu0
        %v6484 = vmax.f32 %v6482, 0.0
        %vm6485 = vcmask 1043456
        %v6486 = vsel %vm6485, %v6484, 0.0
        %v6487 = vrot.slane %v6486, 4
        %v6488 = vadd.f32 %v6486, %v6487
        %v6489 = vrot.slane %v6488, 2
        %v6490 = vadd.f32 %v6488, %v6489
        %v6491 = vrot.slane %v6490, 1
        %v6492 = vadd.f32 %v6490, %v6491
        %v6493 = vrcp.pop 4.0
        %v6494 = vmul.f32 4.0, %v6493
        %v6495 = vsub.f32 1.0, %v6494
        %v6496 = vmul.f32 %v6493, %v6495
        %v6497 = vadd.f32 %v6493, %v6496
        %vm6498 = vweird.f32 %v6493
        %v6499 = vsel %vm6498, %v6493, %v6497
        %v6500 = vmul.f32 %v6492, %v6499
        %v6501 = vld [vmem:[%s5] sm:$0xff]
        %v6502 = vld [vmem:[%s5 + $0x8] sm:$0xff]
        %v6503 = vld [vmem:[%s5 + $0x10] sm:$0xff]
        %v6504 = vld [vmem:[%s5 + $0x18] sm:$0xff]
        %v6505 = vld [vmem:[%s5 + $0x20] sm:$0xff]
        %v6506 = vld [vmem:[%s5 + $0x28] sm:$0xff]
        %v6507 = vld [vmem:[%s5 + $0x30] sm:$0xff]
        %v6508 = vld [vmem:[%s5 + $0x38] sm:$0xff]
        %v6509 = vld [vmem:[%s5 + $0x40] sm:$0xff]
        %v6510 = vld [vmem:[%s5 + $0x48] sm:$0xff]
        %v6511 = vld [vmem:[%s5 + $0x50] sm:$0xff]
        %v6512 = vld [vmem:[%s5 + $0x58] sm:$0xff]
        %v6513 = vld [vmem:[%s5 + $0x60] sm:$0xff]
        %v6514 = vld [vmem:[%s5 + $0x68] sm:$0xff]
        %v6515 = vld [vmem:[%s5 + $0x70] sm:$0xff]
        %v6516 = vld [vmem:[%s5 + $0x78] sm:$0xff]
        %v6517 = vld [vmem:[%s6] sm:$0x1]
        %6518 = vmatpush.msra.mxu0 %v6516
        %6519 = vmatpush.msra.mxu0 %v6515
        %6520 = vmatpush.msra.mxu0 %v6514
        %6521 = vmatpush.msra.mxu0 %v6513
        %6522 = vmatpush.msra.mxu0 %v6512
        %6523 = vmatpush.msra.mxu0 %v6511
        %6524 = vmatpush.msra.mxu0 %v6510
        %6525 = vmatpush.msra.mxu0 %v6509
        %6526 = vmatpush.msra.mxu0 %v6508
        %6527 = vmatpush.msra.mxu0 %v6507
        %6528 = vmatpush.msra.mxu0 %v6506
        %6529 = vmatpush.msra.mxu0 %v6505
        %6530 = vmatpush.msra.mxu0 %v6504
        %6531 = vmatpush.msra.mxu0 %v6503
        %6532 = vmatpush.msra.mxu0 %v6502
        %6533 = vmatpush.msra.mxu0 %v6501
        %6534 = vmatmul.f32.gmra.mxu0 %v6500
        %v6535 = vpop.f32.mrf.mxu0
        %v6536 = vadd.f32 %v6517, %v6535
        %6537 = vdwg.mxu0
        %6538 = vst [vmem:[%s270] sm:$0x1] %v6536
        %s6539 = sand.u32 %s181, 1
        %s6540 = scalar_lea.sflag [#allocation3], %s6539
        %s6541 = sand.u32 %s181, 1
        %s6542 = scalar_lea.vmem [#allocation2], %s6541
        // Predicated region
        $region49: #{tpu_custom_call.1} parent=47 // pred_check
          %p6543 = pneg %p191
        $region50: #{tpu_custom_call.1} parent=47 // pred_check_branch
          %6545 = sbr.rel (%p6543) target = $region52
        $region51: #{tpu_custom_call.1} parent=47 // pred_region
          %6547 = vsyncadd %s6540, 0
          %s6548 = scalar_lea.hbm %s7, %s21
          %s6550 = sshll.u32 %s6542, 4
          %s6551 = int_to_ptr.vmem [resolvable:$true] %s6550
          %s6552 = sshll.u32 %s6548, 4
          %s6553 = int_to_ptr.hbm [resolvable:$true] %s6552
          %6555 = dma.vmem_to_hbm [thread:$0]  %s6551, 16, %s6553, %s6540
        $region52: #{tpu_custom_call.1} parent=47 // pred_fallthru
          _
      $region48: #{tpu_custom_call.1} parent=5 // pred_fallthru
        _
      %p6556 = scmp.le.s32.totalorder 2, %s16
      // Predicated region
      $region53: #{tpu_custom_call.1} parent=5 // pred_check
        %p6557 = pneg %p6556
      $region54: #{tpu_custom_call.1} parent=5 // pred_check_branch
        %6559 = sbr.rel (%p6557) target = $region56
      $region55: #{tpu_custom_call.1} parent=5 // pred_region
        %s6560 = ssub.s32 %s16, 2
        // Predicated region
        $region57: #{tpu_custom_call.1} parent=55 // pred_check
          %p6561 = pneg %p197
        $region58: #{tpu_custom_call.1} parent=55 // pred_check_branch
          %6563 = sbr.rel (%p6561) target = $region60
        $region59: #{tpu_custom_call.1} parent=55 // pred_region
          %s6564 = sand.u32 %s182, 1
          %s6565 = scalar_lea.sflag [#allocation3], %s6564
          %s6566 = sand.u32 %s182, 1
          %s6567 = scalar_lea.vmem [#allocation2], %s6566
          %6569 = dma.done %s6565, 16
        $region60: #{tpu_custom_call.1} parent=55 // pred_fallthru
          _
      $region56: #{tpu_custom_call.1} parent=5 // pred_fallthru
        _
    $region6: #{tpu_custom_call.1} parent=1 // loop_footer
      %s20 = sadd.s32 1, %s16
    $region7: #{tpu_custom_call.1} parent=1 // loop_footer_branch
      %15 = sbr.rel target = $region3
    $region8: #{tpu_custom_call.1} parent=1 // loop_exit
      _
    %6570 = vsyncpa [#allocation3], 1
    %s6571 = scalar_lea.sflag [#allocation3], 1
    %6572 = vsyncpa %s6571, 1

</llo_original>
